<compile_context>
chip_gen: v7x
topology: tpu7x:2x2x1
jax: 0.10.0
libtpu: 0.0.40
codegen_flags: <defaults>
</compile_context>

<pallas_src>
import math

import jax
import jax.numpy as jnp
from jax import lax
from jax.experimental import pallas as pl
from jax.experimental.pallas import tpu as pltpu

_EPS = 1e-5
_CIN = 128                                   # mel input channels

# (kernel, conv pad, maxpool, avgpool) per layer, straight from the module.
_LAYER_CFG = [
    dict(K=4, pad=2, P=4, tpk=33),           # layer1 / pool1 / bn1 / timepool1
    dict(K=4, pad=2, P=4, tpk=8),            # layer2 / pool2 / bn2 / timepool2
    dict(K=4, pad=2, P=4, tpk=2),            # layer3 / pool3 / bn3 / timepool3
    dict(K=2, pad=1, P=2, tpk=1),            # layer4 / pool4 / bn4 / timepool4
]


def _rup(x, m):
    return ((x + m - 1) // m) * m


def _make_fused_kernel(N, T, H):
    K1, pad1 = _LAYER_CFG[0]["K"], _LAYER_CFG[0]["pad"]
    Tpad = _rup(T, 128)                      # lane-align the time axis pre-transpose
    Lconv1 = T + 2 * pad1 - K1 + 1           # true layer-1 conv length
    Lc1 = _rup(Lconv1, 16)                   # 16-aligned compute length (bf16 packing)
    assert Lc1 + K1 - 1 <= pad1 + Tpad       # per-tap slices stay inside the padded slab

    def kernel(x_ref, w_ref, v_ref, out_ref):
        # ---- fold NCW->NTC transpose + layer-1 zero padding on-chip ----
        x = x_ref[...]                                                  # (N,128,T) f32
        if Tpad > T:
            x = jnp.concatenate(
                [x, jnp.zeros((N, _CIN, Tpad - T), jnp.float32)], axis=-1)
        xt = jnp.transpose(x, (0, 2, 1))                                # (N,Tpad,128); rows>=T are 0
        xp = jnp.concatenate(
            [jnp.zeros((N, pad1, _CIN), jnp.float32), xt], axis=1)      # left conv pad
        xp = xp.astype(jnp.bfloat16)                                    # (N,pad1+Tpad,128)

        # ---- layer 1 conv: K accumulated per-tap matmuls (128-deep contraction) ----
        conv = jnp.zeros((N * Lc1, H), jnp.float32)
        for k in range(K1):
            xk = xp[:, k:k + Lc1, :].reshape(N * Lc1, _CIN)             # aligned -> free reshape
            conv = conv + jnp.dot(xk, w_ref[k * _CIN:(k + 1) * _CIN, :],
                                  preferred_element_type=jnp.float32)

        tps = []
        woff = K1 * _CIN
        rows, Lconv = Lc1, Lconv1
        x_cur = None
        for li, cfg in enumerate(_LAYER_CFG):
            K, P, tpk = cfg["K"], cfg["P"], cfg["tpk"]
            if li > 0:
                # ---- layers 2-4: im2col, K*H = 128-deep contraction ----
                pad = cfg["pad"]
                z = jnp.zeros((N, pad, H), jnp.float32)
                xin = jnp.concatenate([z, x_cur, z], axis=1)            # (N,Lp,H)
                Lconv = xin.shape[1] - K + 1
                rows = Lconv
                cols = jnp.concatenate(
                    [xin[:, k:k + Lconv, :] for k in range(K)], axis=-1)
                conv = jnp.dot(
                    cols.astype(jnp.bfloat16).reshape(N * Lconv, K * H),
                    w_ref[woff:woff + K * H, :],
                    preferred_element_type=jnp.float32)                 # (N*Lconv,H)
                woff += K * H

            # ---- MaxPool1d(P); conv bias folded past the max (max(x+b)=max(x)+b) ----
            Lpool = Lconv // P
            y = conv.reshape(N, rows, H)[:, :Lpool * P, :]              # drop tail/garbage rows
            y = jnp.max(y.reshape(N * Lpool, P, H), axis=1)             # (N*Lpool,H)

            b = v_ref[3 * li + 0:3 * li + 1, :]
            g = v_ref[3 * li + 1:3 * li + 2, :]
            be = v_ref[3 * li + 2:3 * li + 3, :]

            # ---- bias + ReLU, then BatchNorm1d (training-mode stats, biased var) ----
            y = jnp.maximum(y + b, 0.0)
            inv_cnt = 1.0 / float(N * Lpool)
            mean = jnp.sum(y, axis=0, keepdims=True) * inv_cnt
            var = jnp.sum(y * y, axis=0, keepdims=True) * inv_cnt - mean * mean
            scale = g * lax.rsqrt(var + _EPS)
            y = y * scale + (be - mean * scale)
            y3 = y.reshape(N, Lpool, H)

            # ---- AvgPool1d(tpk) over time: one (N,H) frame per layer (T=131 => Lpool==tpk) ----
            tps.append(jnp.sum(y3[:, :tpk, :], axis=1) * (1.0 / tpk))
            x_cur = y3

        # one lane-dense (N, 4*H) store (4*H = 128 lanes for H=32)
        out_ref[...] = jnp.concatenate(tps, axis=-1)

    return kernel


def pack_params(params):
    """Pack the 16 tiny parameter tensors into two slabs (fewer DMAs)."""
    H = params["w1"].shape[-1]
    w_rows = [params[f"w{i}"].reshape(-1, H) for i in (1, 2, 3, 4)]     # im2col layout
    wslab = jnp.concatenate(w_rows, axis=0).astype(jnp.bfloat16)        # (512+4H+4H+2H, H)
    v_rows = []
    for i in (1, 2, 3, 4):
        v_rows += [params[f"b{i}"], params[f"gamma{i}"], params[f"beta{i}"]]
    vecs = jnp.concatenate(v_rows, axis=0).astype(jnp.float32)          # (12, H)
    return wslab, vecs


@jax.jit
def forward(x_ncw, wslab, vecs):
    """x_ncw: (N, 128, T) float32 in PyTorch NCW layout. Returns (N, H, 4)."""
    N, Cin, T = x_ncw.shape
    H = wslab.shape[-1]

    # advisory cost estimate (kernel is latency/overhead bound, not MXU bound)
    L = T + 2 * _LAYER_CFG[0]["pad"] - _LAYER_CFG[0]["K"] + 1
    flops = 2 * N * _rup(L, 16) * _LAYER_CFG[0]["K"] * Cin * H
    L = L // _LAYER_CFG[0]["P"]
    for cfg in _LAYER_CFG[1:]:
        Lc = L + 2 * cfg["pad"] - cfg["K"] + 1
        flops += 2 * N * Lc * cfg["K"] * H * H
        L = Lc // cfg["P"]
    bytes_accessed = x_ncw.size * 4 + wslab.size * 2 + vecs.size * 4 + N * 4 * H * 4

    out = pl.pallas_call(
        _make_fused_kernel(N, T, H),
        out_shape=jax.ShapeDtypeStruct((N, 4 * H), jnp.float32),
        grid=(1,),
        in_specs=[
            pl.BlockSpec(x_ncw.shape, lambda g: (0, 0, 0)),   # raw NCW input, whole array
            pl.BlockSpec(wslab.shape, lambda g: (0, 0)),      # packed bf16 weight slab
            pl.BlockSpec(vecs.shape, lambda g: (0, 0)),       # packed bias/gamma/beta slab
        ],
        out_specs=pl.BlockSpec((N, 4 * H), lambda g: (0, 0)),
        compiler_params=pltpu.CompilerParams(
            dimension_semantics=("arbitrary",)),
        cost_estimate=pl.CostEstimate(
            flops=flops, transcendentals=8 * H, bytes_accessed=bytes_accessed),
    )(x_ncw, wslab, vecs)
    # (N, 4*H) -> (N, 4, H) -> (N, H, 4)  == torch.cat([tp1..tp4], dim=2)
    return out.reshape(N, 4, H).transpose(0, 2, 1)


@jax.jit
def ref_forward(x_ncw, params):
    """Pure-JAX reference (per-tap conv, bias in the module's position)."""
    N = x_ncw.shape[0]
    H = params["w1"].shape[-1]
    x = jnp.transpose(x_ncw, (0, 2, 1)).astype(jnp.float32)
    x = jnp.pad(x, ((0, 0), (_LAYER_CFG[0]["pad"],) * 2, (0, 0)))
    tps = []
    for i, cfg in enumerate(_LAYER_CFG, start=1):
        K, P, tpk = cfg["K"], cfg["P"], cfg["tpk"]
        w = params[f"w{i}"].astype(jnp.bfloat16)
        xb = x.astype(jnp.bfloat16)
        Lconv = x.shape[1] - K + 1
        Lpool = Lconv // P
        y = params[f"b{i}"] + sum(
            jnp.einsum("nlc,cd->nld", xb[:, k:k + Lconv, :], w[k],
                       preferred_element_type=jnp.float32)
            for k in range(K))
        y = y[:, :Lpool * P, :].reshape(N, Lpool, P, H).max(axis=2)
        y = jnp.maximum(y, 0.0)
        mean = y.mean(axis=(0, 1))
        var = (y * y).mean(axis=(0, 1)) - mean * mean
        scale = params[f"gamma{i}"][0] * lax.rsqrt(var + _EPS)
        shift = params[f"beta{i}"][0] - mean * scale
        y = y * scale + shift
        tps.append(y[:, :tpk, :].mean(axis=1))
        if i < len(_LAYER_CFG):
            npad = _LAYER_CFG[i]["pad"]
            x = jnp.pad(y, ((0, 0), (npad, npad), (0, 0)))
    out = jnp.concatenate(tps, axis=-1)
    return out.reshape(N, 4, H).transpose(0, 2, 1)


def init_params(key, hidden_size):
    """Deterministic synthetic parameters (shapes match the PyTorch module)."""
    H = hidden_size
    # Conv weights stored as (K, Cin, Cout) (transposed from torch (Cout, Cin, K)).
    shapes = [(4, _CIN, H), (4, H, H), (4, H, H), (2, H, H)]
    params = {}
    for i, shp in enumerate(shapes, start=1):
        key, kw, kb = jax.random.split(key, 3)
        K, Cin, Cout = shp
        fan_in = Cin * K
        bound_w = math.sqrt(6.0 / fan_in)            # kaiming_uniform, relu gain
        bound_b = 1.0 / math.sqrt(fan_in)            # torch Conv1d default bias init
        params[f"w{i}"] = jax.random.uniform(kw, shp, jnp.float32, -bound_w, bound_w)
        params[f"b{i}"] = jax.random.uniform(kb, (1, Cout), jnp.float32, -bound_b, bound_b)
        params[f"gamma{i}"] = jnp.ones((1, Cout), jnp.float32)   # BatchNorm1d defaults
        params[f"beta{i}"] = jnp.zeros((1, Cout), jnp.float32)
    return params


if __name__ == "__main__":
    H = 32     # hidden_size
    N = 2      # batch
    T = 131    # truncated-mel length implied by the AvgPool kernel sizes (33/8/2/1)

    key = jax.random.PRNGKey(0)
    kx, kp = jax.random.split(key)
    x = jax.random.normal(kx, (N, _CIN, T), jnp.float32)   # PyTorch NCW input
    params = init_params(kp, H)
    wslab, vecs = pack_params(params)

    out = jax.block_until_ready(forward(x, wslab, vecs))
    ref = jax.block_until_ready(ref_forward(x, params))

    assert out.shape == (N, H, 4), out.shape
    err = float(jnp.max(jnp.abs(out - ref)))
    if not (err < 1e-2):
        raise AssertionError(f"mismatch vs pure-JAX reference: max abs err {err}")
    print("KERNEL_OK")
</pallas_src>

<mosaic_0001>
module attributes {stable_mosaic.version = 11 : i64} {
  func.func @kernel(%arg0: i32, %arg1: memref<2x128x131xf32, #tpu.memory_space<vmem>>, %arg2: memref<832x32xbf16, #tpu.memory_space<vmem>>, %arg3: memref<12x32xf32, #tpu.memory_space<vmem>>, %arg4: memref<2x128xf32, #tpu.memory_space<vmem>>) attributes {dimension_semantics = [#tpu.dimension_semantics<arbitrary>], iteration_bounds = array<i64: 1>, scalar_prefetch = 0 : i64, scratch_operands = 0 : i64, tpu.core_type = #tpu.core_type<tc>, window_params = [{pipeline_mode = #tpu.pipeline_mode<synchronous>, transform_indices = @transform_0, window_bounds = array<i64: 2, 128, 131>}, {pipeline_mode = #tpu.pipeline_mode<synchronous>, transform_indices = @transform_1, window_bounds = array<i64: 832, 32>}, {pipeline_mode = #tpu.pipeline_mode<synchronous>, transform_indices = @transform_2, window_bounds = array<i64: 12, 32>}, {pipeline_mode = #tpu.pipeline_mode<synchronous>, transform_indices = @transform_3, window_bounds = array<i64: 2, 128>}]} {
    %c0 = arith.constant 0 : index
    %c0_0 = arith.constant 0 : index
    %c0_1 = arith.constant 0 : index
    %0 = vector.load %arg1[%c0, %c0_0, %c0_1] : memref<2x128x131xf32, #tpu.memory_space<vmem>>, vector<2x128x131xf32>
    %cst = arith.constant 0.000000e+00 : f32
    %1 = vector.broadcast %cst : f32 to vector<2x128x125xf32>
    %2 = tpu.concatenate %0, %1 in 2 : vector<2x128x131xf32>, vector<2x128x125xf32> -> vector<2x128x256xf32>
    %3 = tpu.transpose %2, [0, 2, 1] : vector<2x128x256xf32> -> vector<2x256x128xf32>
    %cst_2 = arith.constant 0.000000e+00 : f32
    %4 = vector.broadcast %cst_2 : f32 to vector<2x2x128xf32>
    %5 = tpu.concatenate %4, %3 in 1 : vector<2x2x128xf32>, vector<2x256x128xf32> -> vector<2x258x128xf32>
    %6 = arith.truncf %5 : vector<2x258x128xf32> to vector<2x258x128xbf16>
    %cst_3 = arith.constant 0.000000e+00 : f32
    %7 = vector.broadcast %cst_3 : f32 to vector<288x32xf32>
    %8 = vector.extract_strided_slice %6 {offsets = [0, 0, 0], sizes = [2, 144, 128], strides = [1, 1, 1]} : vector<2x258x128xbf16> to vector<2x144x128xbf16>
    %9 = vector.shape_cast %8 : vector<2x144x128xbf16> to vector<288x128xbf16>
    %c0_4 = arith.constant 0 : index
    %c0_5 = arith.constant 0 : index
    %10 = vector.load %arg2[%c0_4, %c0_5] : memref<832x32xbf16, #tpu.memory_space<vmem>>, vector<128x32xbf16>
    %cst_6 = arith.constant dense<0.000000e+00> : vector<288x32xf32>
    %11 = tpu.matmul %9, %10, %cst_6 {dimension_numbers = #tpu.dot_dimension_numbers<[1], [0], [0], [1], [0, 0, 1, 1], [], []>} : vector<288x128xbf16>, vector<128x32xbf16>, vector<288x32xf32> -> vector<288x32xf32>
    %12 = arith.addf %7, %11 : vector<288x32xf32>
    %13 = vector.extract_strided_slice %6 {offsets = [0, 1, 0], sizes = [2, 144, 128], strides = [1, 1, 1]} : vector<2x258x128xbf16> to vector<2x144x128xbf16>
    %14 = vector.shape_cast %13 : vector<2x144x128xbf16> to vector<288x128xbf16>
    %c128 = arith.constant 128 : index
    %c0_7 = arith.constant 0 : index
    %15 = vector.load %arg2[%c128, %c0_7] : memref<832x32xbf16, #tpu.memory_space<vmem>>, vector<128x32xbf16>
    %cst_8 = arith.constant dense<0.000000e+00> : vector<288x32xf32>
    %16 = tpu.matmul %14, %15, %cst_8 {dimension_numbers = #tpu.dot_dimension_numbers<[1], [0], [0], [1], [0, 0, 1, 1], [], []>} : vector<288x128xbf16>, vector<128x32xbf16>, vector<288x32xf32> -> vector<288x32xf32>
    %17 = arith.addf %12, %16 : vector<288x32xf32>
    %18 = vector.extract_strided_slice %6 {offsets = [0, 2, 0], sizes = [2, 144, 128], strides = [1, 1, 1]} : vector<2x258x128xbf16> to vector<2x144x128xbf16>
    %19 = vector.shape_cast %18 : vector<2x144x128xbf16> to vector<288x128xbf16>
    %c256 = arith.constant 256 : index
    %c0_9 = arith.constant 0 : index
    %20 = vector.load %arg2[%c256, %c0_9] : memref<832x32xbf16, #tpu.memory_space<vmem>>, vector<128x32xbf16>
    %cst_10 = arith.constant dense<0.000000e+00> : vector<288x32xf32>
    %21 = tpu.matmul %19, %20, %cst_10 {dimension_numbers = #tpu.dot_dimension_numbers<[1], [0], [0], [1], [0, 0, 1, 1], [], []>} : vector<288x128xbf16>, vector<128x32xbf16>, vector<288x32xf32> -> vector<288x32xf32>
    %22 = arith.addf %17, %21 : vector<288x32xf32>
    %23 = vector.extract_strided_slice %6 {offsets = [0, 3, 0], sizes = [2, 144, 128], strides = [1, 1, 1]} : vector<2x258x128xbf16> to vector<2x144x128xbf16>
    %24 = vector.shape_cast %23 : vector<2x144x128xbf16> to vector<288x128xbf16>
    %c384 = arith.constant 384 : index
    %c0_11 = arith.constant 0 : index
    %25 = vector.load %arg2[%c384, %c0_11] : memref<832x32xbf16, #tpu.memory_space<vmem>>, vector<128x32xbf16>
    %cst_12 = arith.constant dense<0.000000e+00> : vector<288x32xf32>
    %26 = tpu.matmul %24, %25, %cst_12 {dimension_numbers = #tpu.dot_dimension_numbers<[1], [0], [0], [1], [0, 0, 1, 1], [], []>} : vector<288x128xbf16>, vector<128x32xbf16>, vector<288x32xf32> -> vector<288x32xf32>
    %27 = arith.addf %22, %26 : vector<288x32xf32>
    %28 = vector.shape_cast %27 : vector<288x32xf32> to vector<2x144x32xf32>
    %29 = vector.extract_strided_slice %28 {offsets = [0, 0, 0], sizes = [2, 132, 32], strides = [1, 1, 1]} : vector<2x144x32xf32> to vector<2x132x32xf32>
    %30 = vector.shape_cast %29 : vector<2x132x32xf32> to vector<66x4x32xf32>
    %cst_13 = arith.constant dense<0xFF800000> : vector<66x32xf32>
    %31 = vector.multi_reduction <maximumf>, %30, %cst_13 [1] : vector<66x4x32xf32> to vector<66x32xf32>
    %c0_14 = arith.constant 0 : index
    %c0_15 = arith.constant 0 : index
    %32 = vector.load %arg3[%c0_14, %c0_15] : memref<12x32xf32, #tpu.memory_space<vmem>>, vector<1x32xf32>
    %c1 = arith.constant 1 : index
    %c0_16 = arith.constant 0 : index
    %33 = vector.load %arg3[%c1, %c0_16] : memref<12x32xf32, #tpu.memory_space<vmem>>, vector<1x32xf32>
    %c2 = arith.constant 2 : index
    %c0_17 = arith.constant 0 : index
    %34 = vector.load %arg3[%c2, %c0_17] : memref<12x32xf32, #tpu.memory_space<vmem>>, vector<1x32xf32>
    %35 = vector.broadcast %32 : vector<1x32xf32> to vector<66x32xf32>
    %36 = arith.addf %31, %35 : vector<66x32xf32>
    %cst_18 = arith.constant 0.000000e+00 : f32
    %37 = vector.broadcast %cst_18 : f32 to vector<66x32xf32>
    %38 = arith.maximumf %36, %37 : vector<66x32xf32>
    %cst_19 = arith.constant dense<0.000000e+00> : vector<32xf32>
    %39 = vector.multi_reduction <add>, %38, %cst_19 [0] : vector<66x32xf32> to vector<32xf32>
    %40 = vector.shape_cast %39 : vector<32xf32> to vector<1x32xf32>
    %cst_20 = arith.constant 0.0151515156 : f32
    %41 = vector.broadcast %cst_20 : f32 to vector<1x32xf32>
    %42 = arith.mulf %40, %41 : vector<1x32xf32>
    %43 = arith.mulf %38, %38 : vector<66x32xf32>
    %cst_21 = arith.constant dense<0.000000e+00> : vector<32xf32>
    %44 = vector.multi_reduction <add>, %43, %cst_21 [0] : vector<66x32xf32> to vector<32xf32>
    %45 = vector.shape_cast %44 : vector<32xf32> to vector<1x32xf32>
    %cst_22 = arith.constant 0.0151515156 : f32
    %46 = vector.broadcast %cst_22 : f32 to vector<1x32xf32>
    %47 = arith.mulf %45, %46 : vector<1x32xf32>
    %48 = arith.mulf %42, %42 : vector<1x32xf32>
    %49 = arith.subf %47, %48 : vector<1x32xf32>
    %cst_23 = arith.constant 9.99999974E-6 : f32
    %50 = vector.broadcast %cst_23 : f32 to vector<1x32xf32>
    %51 = arith.addf %49, %50 : vector<1x32xf32>
    %52 = math.rsqrt %51 : vector<1x32xf32>
    %53 = arith.mulf %33, %52 : vector<1x32xf32>
    %54 = vector.broadcast %53 : vector<1x32xf32> to vector<66x32xf32>
    %55 = arith.mulf %38, %54 : vector<66x32xf32>
    %56 = arith.mulf %42, %53 : vector<1x32xf32>
    %57 = arith.subf %34, %56 : vector<1x32xf32>
    %58 = vector.broadcast %57 : vector<1x32xf32> to vector<66x32xf32>
    %59 = arith.addf %55, %58 : vector<66x32xf32>
    %60 = vector.shape_cast %59 : vector<66x32xf32> to vector<2x33x32xf32>
    %cst_24 = arith.constant dense<0.000000e+00> : vector<2x32xf32>
    %61 = vector.multi_reduction <add>, %60, %cst_24 [1] : vector<2x33x32xf32> to vector<2x32xf32>
    %cst_25 = arith.constant 0.0303030312 : f32
    %62 = vector.broadcast %cst_25 : f32 to vector<2x32xf32>
    %63 = arith.mulf %61, %62 : vector<2x32xf32>
    %cst_26 = arith.constant 0.000000e+00 : f32
    %64 = vector.broadcast %cst_26 : f32 to vector<2x2x32xf32>
    %65 = tpu.concatenate %64, %60, %64 in 1 : vector<2x2x32xf32>, vector<2x33x32xf32>, vector<2x2x32xf32> -> vector<2x37x32xf32>
    %66 = vector.extract_strided_slice %65 {offsets = [0, 0, 0], sizes = [2, 34, 32], strides = [1, 1, 1]} : vector<2x37x32xf32> to vector<2x34x32xf32>
    %67 = vector.extract_strided_slice %65 {offsets = [0, 1, 0], sizes = [2, 34, 32], strides = [1, 1, 1]} : vector<2x37x32xf32> to vector<2x34x32xf32>
    %68 = vector.extract_strided_slice %65 {offsets = [0, 2, 0], sizes = [2, 34, 32], strides = [1, 1, 1]} : vector<2x37x32xf32> to vector<2x34x32xf32>
    %69 = vector.extract_strided_slice %65 {offsets = [0, 3, 0], sizes = [2, 34, 32], strides = [1, 1, 1]} : vector<2x37x32xf32> to vector<2x34x32xf32>
    %70 = tpu.concatenate %66, %67, %68, %69 in 2 : vector<2x34x32xf32>, vector<2x34x32xf32>, vector<2x34x32xf32>, vector<2x34x32xf32> -> vector<2x34x128xf32>
    %71 = arith.truncf %70 : vector<2x34x128xf32> to vector<2x34x128xbf16>
    %72 = vector.shape_cast %71 : vector<2x34x128xbf16> to vector<68x128xbf16>
    %c512 = arith.constant 512 : index
    %c0_27 = arith.constant 0 : index
    %73 = vector.load %arg2[%c512, %c0_27] : memref<832x32xbf16, #tpu.memory_space<vmem>>, vector<128x32xbf16>
    %cst_28 = arith.constant dense<0.000000e+00> : vector<68x32xf32>
    %74 = tpu.matmul %72, %73, %cst_28 {dimension_numbers = #tpu.dot_dimension_numbers<[1], [0], [0], [1], [0, 0, 1, 1], [], []>} : vector<68x128xbf16>, vector<128x32xbf16>, vector<68x32xf32> -> vector<68x32xf32>
    %75 = vector.shape_cast %74 : vector<68x32xf32> to vector<2x34x32xf32>
    %76 = vector.extract_strided_slice %75 {offsets = [0, 0, 0], sizes = [2, 32, 32], strides = [1, 1, 1]} : vector<2x34x32xf32> to vector<2x32x32xf32>
    %77 = vector.shape_cast %76 : vector<2x32x32xf32> to vector<16x4x32xf32>
    %cst_29 = arith.constant dense<0xFF800000> : vector<16x32xf32>
    %78 = vector.multi_reduction <maximumf>, %77, %cst_29 [1] : vector<16x4x32xf32> to vector<16x32xf32>
    %c3 = arith.constant 3 : index
    %c0_30 = arith.constant 0 : index
    %79 = vector.load %arg3[%c3, %c0_30] : memref<12x32xf32, #tpu.memory_space<vmem>>, vector<1x32xf32>
    %c4 = arith.constant 4 : index
    %c0_31 = arith.constant 0 : index
    %80 = vector.load %arg3[%c4, %c0_31] : memref<12x32xf32, #tpu.memory_space<vmem>>, vector<1x32xf32>
    %c5 = arith.constant 5 : index
    %c0_32 = arith.constant 0 : index
    %81 = vector.load %arg3[%c5, %c0_32] : memref<12x32xf32, #tpu.memory_space<vmem>>, vector<1x32xf32>
    %82 = vector.broadcast %79 : vector<1x32xf32> to vector<16x32xf32>
    %83 = arith.addf %78, %82 : vector<16x32xf32>
    %cst_33 = arith.constant 0.000000e+00 : f32
    %84 = vector.broadcast %cst_33 : f32 to vector<16x32xf32>
    %85 = arith.maximumf %83, %84 : vector<16x32xf32>
    %cst_34 = arith.constant dense<0.000000e+00> : vector<32xf32>
    %86 = vector.multi_reduction <add>, %85, %cst_34 [0] : vector<16x32xf32> to vector<32xf32>
    %87 = vector.shape_cast %86 : vector<32xf32> to vector<1x32xf32>
    %cst_35 = arith.constant 6.250000e-02 : f32
    %88 = vector.broadcast %cst_35 : f32 to vector<1x32xf32>
    %89 = arith.mulf %87, %88 : vector<1x32xf32>
    %90 = arith.mulf %85, %85 : vector<16x32xf32>
    %cst_36 = arith.constant dense<0.000000e+00> : vector<32xf32>
    %91 = vector.multi_reduction <add>, %90, %cst_36 [0] : vector<16x32xf32> to vector<32xf32>
    %92 = vector.shape_cast %91 : vector<32xf32> to vector<1x32xf32>
    %cst_37 = arith.constant 6.250000e-02 : f32
    %93 = vector.broadcast %cst_37 : f32 to vector<1x32xf32>
    %94 = arith.mulf %92, %93 : vector<1x32xf32>
    %95 = arith.mulf %89, %89 : vector<1x32xf32>
    %96 = arith.subf %94, %95 : vector<1x32xf32>
    %cst_38 = arith.constant 9.99999974E-6 : f32
    %97 = vector.broadcast %cst_38 : f32 to vector<1x32xf32>
    %98 = arith.addf %96, %97 : vector<1x32xf32>
    %99 = math.rsqrt %98 : vector<1x32xf32>
    %100 = arith.mulf %80, %99 : vector<1x32xf32>
    %101 = vector.broadcast %100 : vector<1x32xf32> to vector<16x32xf32>
    %102 = arith.mulf %85, %101 : vector<16x32xf32>
    %103 = arith.mulf %89, %100 : vector<1x32xf32>
    %104 = arith.subf %81, %103 : vector<1x32xf32>
    %105 = vector.broadcast %104 : vector<1x32xf32> to vector<16x32xf32>
    %106 = arith.addf %102, %105 : vector<16x32xf32>
    %107 = vector.shape_cast %106 : vector<16x32xf32> to vector<2x8x32xf32>
    %cst_39 = arith.constant dense<0.000000e+00> : vector<2x32xf32>
    %108 = vector.multi_reduction <add>, %107, %cst_39 [1] : vector<2x8x32xf32> to vector<2x32xf32>
    %cst_40 = arith.constant 1.250000e-01 : f32
    %109 = vector.broadcast %cst_40 : f32 to vector<2x32xf32>
    %110 = arith.mulf %108, %109 : vector<2x32xf32>
    %cst_41 = arith.constant 0.000000e+00 : f32
    %111 = vector.broadcast %cst_41 : f32 to vector<2x2x32xf32>
    %112 = tpu.concatenate %111, %107, %111 in 1 : vector<2x2x32xf32>, vector<2x8x32xf32>, vector<2x2x32xf32> -> vector<2x12x32xf32>
    %113 = vector.extract_strided_slice %112 {offsets = [0, 0, 0], sizes = [2, 9, 32], strides = [1, 1, 1]} : vector<2x12x32xf32> to vector<2x9x32xf32>
    %114 = vector.extract_strided_slice %112 {offsets = [0, 1, 0], sizes = [2, 9, 32], strides = [1, 1, 1]} : vector<2x12x32xf32> to vector<2x9x32xf32>
    %115 = vector.extract_strided_slice %112 {offsets = [0, 2, 0], sizes = [2, 9, 32], strides = [1, 1, 1]} : vector<2x12x32xf32> to vector<2x9x32xf32>
    %116 = vector.extract_strided_slice %112 {offsets = [0, 3, 0], sizes = [2, 9, 32], strides = [1, 1, 1]} : vector<2x12x32xf32> to vector<2x9x32xf32>
    %117 = tpu.concatenate %113, %114, %115, %116 in 2 : vector<2x9x32xf32>, vector<2x9x32xf32>, vector<2x9x32xf32>, vector<2x9x32xf32> -> vector<2x9x128xf32>
    %118 = arith.truncf %117 : vector<2x9x128xf32> to vector<2x9x128xbf16>
    %119 = vector.shape_cast %118 : vector<2x9x128xbf16> to vector<18x128xbf16>
    %c640 = arith.constant 640 : index
    %c0_42 = arith.constant 0 : index
    %120 = vector.load %arg2[%c640, %c0_42] : memref<832x32xbf16, #tpu.memory_space<vmem>>, vector<128x32xbf16>
    %cst_43 = arith.constant dense<0.000000e+00> : vector<18x32xf32>
    %121 = tpu.matmul %119, %120, %cst_43 {dimension_numbers = #tpu.dot_dimension_numbers<[1], [0], [0], [1], [0, 0, 1, 1], [], []>} : vector<18x128xbf16>, vector<128x32xbf16>, vector<18x32xf32> -> vector<18x32xf32>
    %122 = vector.shape_cast %121 : vector<18x32xf32> to vector<2x9x32xf32>
    %123 = vector.extract_strided_slice %122 {offsets = [0, 0, 0], sizes = [2, 8, 32], strides = [1, 1, 1]} : vector<2x9x32xf32> to vector<2x8x32xf32>
    %124 = vector.shape_cast %123 : vector<2x8x32xf32> to vector<4x4x32xf32>
    %cst_44 = arith.constant dense<0xFF800000> : vector<4x32xf32>
    %125 = vector.multi_reduction <maximumf>, %124, %cst_44 [1] : vector<4x4x32xf32> to vector<4x32xf32>
    %c6 = arith.constant 6 : index
    %c0_45 = arith.constant 0 : index
    %126 = vector.load %arg3[%c6, %c0_45] : memref<12x32xf32, #tpu.memory_space<vmem>>, vector<1x32xf32>
    %c7 = arith.constant 7 : index
    %c0_46 = arith.constant 0 : index
    %127 = vector.load %arg3[%c7, %c0_46] : memref<12x32xf32, #tpu.memory_space<vmem>>, vector<1x32xf32>
    %c8 = arith.constant 8 : index
    %c0_47 = arith.constant 0 : index
    %128 = vector.load %arg3[%c8, %c0_47] : memref<12x32xf32, #tpu.memory_space<vmem>>, vector<1x32xf32>
    %129 = vector.broadcast %126 : vector<1x32xf32> to vector<4x32xf32>
    %130 = arith.addf %125, %129 : vector<4x32xf32>
    %cst_48 = arith.constant 0.000000e+00 : f32
    %131 = vector.broadcast %cst_48 : f32 to vector<4x32xf32>
    %132 = arith.maximumf %130, %131 : vector<4x32xf32>
    %cst_49 = arith.constant dense<0.000000e+00> : vector<32xf32>
    %133 = vector.multi_reduction <add>, %132, %cst_49 [0] : vector<4x32xf32> to vector<32xf32>
    %134 = vector.shape_cast %133 : vector<32xf32> to vector<1x32xf32>
    %cst_50 = arith.constant 2.500000e-01 : f32
    %135 = vector.broadcast %cst_50 : f32 to vector<1x32xf32>
    %136 = arith.mulf %134, %135 : vector<1x32xf32>
    %137 = arith.mulf %132, %132 : vector<4x32xf32>
    %cst_51 = arith.constant dense<0.000000e+00> : vector<32xf32>
    %138 = vector.multi_reduction <add>, %137, %cst_51 [0] : vector<4x32xf32> to vector<32xf32>
    %139 = vector.shape_cast %138 : vector<32xf32> to vector<1x32xf32>
    %cst_52 = arith.constant 2.500000e-01 : f32
    %140 = vector.broadcast %cst_52 : f32 to vector<1x32xf32>
    %141 = arith.mulf %139, %140 : vector<1x32xf32>
    %142 = arith.mulf %136, %136 : vector<1x32xf32>
    %143 = arith.subf %141, %142 : vector<1x32xf32>
    %cst_53 = arith.constant 9.99999974E-6 : f32
    %144 = vector.broadcast %cst_53 : f32 to vector<1x32xf32>
    %145 = arith.addf %143, %144 : vector<1x32xf32>
    %146 = math.rsqrt %145 : vector<1x32xf32>
    %147 = arith.mulf %127, %146 : vector<1x32xf32>
    %148 = vector.broadcast %147 : vector<1x32xf32> to vector<4x32xf32>
    %149 = arith.mulf %132, %148 : vector<4x32xf32>
    %150 = arith.mulf %136, %147 : vector<1x32xf32>
    %151 = arith.subf %128, %150 : vector<1x32xf32>
    %152 = vector.broadcast %151 : vector<1x32xf32> to vector<4x32xf32>
    %153 = arith.addf %149, %152 : vector<4x32xf32>
    %154 = vector.shape_cast %153 : vector<4x32xf32> to vector<2x2x32xf32>
    %cst_54 = arith.constant dense<0.000000e+00> : vector<2x32xf32>
    %155 = vector.multi_reduction <add>, %154, %cst_54 [1] : vector<2x2x32xf32> to vector<2x32xf32>
    %cst_55 = arith.constant 5.000000e-01 : f32
    %156 = vector.broadcast %cst_55 : f32 to vector<2x32xf32>
    %157 = arith.mulf %155, %156 : vector<2x32xf32>
    %cst_56 = arith.constant 0.000000e+00 : f32
    %158 = vector.broadcast %cst_56 : f32 to vector<2x1x32xf32>
    %159 = tpu.concatenate %158, %154, %158 in 1 : vector<2x1x32xf32>, vector<2x2x32xf32>, vector<2x1x32xf32> -> vector<2x4x32xf32>
    %160 = vector.extract_strided_slice %159 {offsets = [0, 0, 0], sizes = [2, 3, 32], strides = [1, 1, 1]} : vector<2x4x32xf32> to vector<2x3x32xf32>
    %161 = vector.extract_strided_slice %159 {offsets = [0, 1, 0], sizes = [2, 3, 32], strides = [1, 1, 1]} : vector<2x4x32xf32> to vector<2x3x32xf32>
    %162 = tpu.concatenate %160, %161 in 2 : vector<2x3x32xf32>, vector<2x3x32xf32> -> vector<2x3x64xf32>
    %163 = arith.truncf %162 : vector<2x3x64xf32> to vector<2x3x64xbf16>
    %164 = vector.shape_cast %163 : vector<2x3x64xbf16> to vector<6x64xbf16>
    %c768 = arith.constant 768 : index
    %c0_57 = arith.constant 0 : index
    %165 = vector.load %arg2[%c768, %c0_57] : memref<832x32xbf16, #tpu.memory_space<vmem>>, vector<64x32xbf16>
    %cst_58 = arith.constant dense<0.000000e+00> : vector<6x32xf32>
    %166 = tpu.matmul %164, %165, %cst_58 {dimension_numbers = #tpu.dot_dimension_numbers<[1], [0], [0], [1], [0, 0, 1, 1], [], []>} : vector<6x64xbf16>, vector<64x32xbf16>, vector<6x32xf32> -> vector<6x32xf32>
    %167 = vector.shape_cast %166 : vector<6x32xf32> to vector<2x3x32xf32>
    %168 = vector.extract_strided_slice %167 {offsets = [0, 0, 0], sizes = [2, 2, 32], strides = [1, 1, 1]} : vector<2x3x32xf32> to vector<2x2x32xf32>
    %cst_59 = arith.constant dense<0xFF800000> : vector<2x32xf32>
    %169 = vector.multi_reduction <maximumf>, %168, %cst_59 [1] : vector<2x2x32xf32> to vector<2x32xf32>
    %c9 = arith.constant 9 : index
    %c0_60 = arith.constant 0 : index
    %170 = vector.load %arg3[%c9, %c0_60] : memref<12x32xf32, #tpu.memory_space<vmem>>, vector<1x32xf32>
    %c10 = arith.constant 10 : index
    %c0_61 = arith.constant 0 : index
    %171 = vector.load %arg3[%c10, %c0_61] : memref<12x32xf32, #tpu.memory_space<vmem>>, vector<1x32xf32>
    %c11 = arith.constant 11 : index
    %c0_62 = arith.constant 0 : index
    %172 = vector.load %arg3[%c11, %c0_62] : memref<12x32xf32, #tpu.memory_space<vmem>>, vector<1x32xf32>
    %173 = vector.broadcast %170 : vector<1x32xf32> to vector<2x32xf32>
    %174 = arith.addf %169, %173 : vector<2x32xf32>
    %cst_63 = arith.constant 0.000000e+00 : f32
    %175 = vector.broadcast %cst_63 : f32 to vector<2x32xf32>
    %176 = arith.maximumf %174, %175 : vector<2x32xf32>
    %cst_64 = arith.constant dense<0.000000e+00> : vector<32xf32>
    %177 = vector.multi_reduction <add>, %176, %cst_64 [0] : vector<2x32xf32> to vector<32xf32>
    %178 = vector.shape_cast %177 : vector<32xf32> to vector<1x32xf32>
    %cst_65 = arith.constant 5.000000e-01 : f32
    %179 = vector.broadcast %cst_65 : f32 to vector<1x32xf32>
    %180 = arith.mulf %178, %179 : vector<1x32xf32>
    %181 = arith.mulf %176, %176 : vector<2x32xf32>
    %cst_66 = arith.constant dense<0.000000e+00> : vector<32xf32>
    %182 = vector.multi_reduction <add>, %181, %cst_66 [0] : vector<2x32xf32> to vector<32xf32>
    %183 = vector.shape_cast %182 : vector<32xf32> to vector<1x32xf32>
    %cst_67 = arith.constant 5.000000e-01 : f32
    %184 = vector.broadcast %cst_67 : f32 to vector<1x32xf32>
    %185 = arith.mulf %183, %184 : vector<1x32xf32>
    %186 = arith.mulf %180, %180 : vector<1x32xf32>
    %187 = arith.subf %185, %186 : vector<1x32xf32>
    %cst_68 = arith.constant 9.99999974E-6 : f32
    %188 = vector.broadcast %cst_68 : f32 to vector<1x32xf32>
    %189 = arith.addf %187, %188 : vector<1x32xf32>
    %190 = math.rsqrt %189 : vector<1x32xf32>
    %191 = arith.mulf %171, %190 : vector<1x32xf32>
    %192 = vector.broadcast %191 : vector<1x32xf32> to vector<2x32xf32>
    %193 = arith.mulf %176, %192 : vector<2x32xf32>
    %194 = arith.mulf %180, %191 : vector<1x32xf32>
    %195 = arith.subf %172, %194 : vector<1x32xf32>
    %196 = vector.broadcast %195 : vector<1x32xf32> to vector<2x32xf32>
    %197 = arith.addf %193, %196 : vector<2x32xf32>
    %198 = vector.shape_cast %197 : vector<2x32xf32> to vector<2x1x32xf32>
    %cst_69 = arith.constant dense<0.000000e+00> : vector<2x32xf32>
    %199 = vector.multi_reduction <add>, %198, %cst_69 [1] : vector<2x1x32xf32> to vector<2x32xf32>
    %cst_70 = arith.constant 1.000000e+00 : f32
    %200 = vector.broadcast %cst_70 : f32 to vector<2x32xf32>
    %201 = arith.mulf %199, %200 : vector<2x32xf32>
    %202 = tpu.concatenate %63, %110, %157, %201 in 1 : vector<2x32xf32>, vector<2x32xf32>, vector<2x32xf32>, vector<2x32xf32> -> vector<2x128xf32>
    %c0_71 = arith.constant 0 : index
    %c0_72 = arith.constant 0 : index
    %203 = vector.load %arg4[%c0_71, %c0_72] : memref<2x128xf32, #tpu.memory_space<vmem>>, vector<2x128xf32>
    tpu.vector_store %arg4[%c0_71, %c0_72], %202 {strides = array<i32>} : memref<2x128xf32, #tpu.memory_space<vmem>>, vector<2x128xf32>,
    return
  }
  func.func @transform_0(%arg0: i32) -> (i32, i32, i32) {
    %c0_i32 = arith.constant 0 : i32
    %c0_i32_0 = arith.constant 0 : i32
    %c0_i32_1 = arith.constant 0 : i32
    %c0_i32_2 = arith.constant 0 : i32
    return %c0_i32, %c0_i32_0, %c0_i32_1 : i32, i32, i32
  }
  func.func @transform_1(%arg0: i32) -> (i32, i32) {
    %c0_i32 = arith.constant 0 : i32
    %c0_i32_0 = arith.constant 0 : i32
    %c0_i32_1 = arith.constant 0 : i32
    return %c0_i32, %c0_i32_0 : i32, i32
  }
  func.func @transform_2(%arg0: i32) -> (i32, i32) {
    %c0_i32 = arith.constant 0 : i32
    %c0_i32_0 = arith.constant 0 : i32
    %c0_i32_1 = arith.constant 0 : i32
    return %c0_i32, %c0_i32_0 : i32, i32
  }
  func.func @transform_3(%arg0: i32) -> (i32, i32) {
    %c0_i32 = arith.constant 0 : i32
    %c0_i32_0 = arith.constant 0 : i32
    %c0_i32_1 = arith.constant 0 : i32
    return %c0_i32, %c0_i32_0 : i32, i32
  }
}

</mosaic_0001>

<llo_original>
// kernel: forward.1
$region0: #{forward.1}
  #allocation0 [shape = 'u32[]', space=smem, size = 0x4, offset = 0x4, fixed_abs, tag = 'smem constant byte address 0x4 - core index']
  #allocation1 [shape = 'u32[144,128]{1,0:T(1,128)}', space=vmem, size = 0x12000, scoped, tag = 'internal scratch']
  %s0 = inlined_call_operand.vmem [shape: f32[2,128,131], index: 0, kind: input, shape index: {}]
  %s1 = inlined_call_operand.vmem [shape: bf16[832,32], index: 1, kind: input, shape index: {}]
  %s2 = inlined_call_operand.vmem [shape: f32[12,32], index: 2, kind: input, shape index: {}]
  %s3 = inlined_call_operand.vmem [shape: f32[2,128], index: 3, kind: output, shape index: {}]
  %s4 = sld [smem:[#allocation0]]
  $region22: #{forward.1} parent=0
    _
  %s6 = ssub.s32 1, %s4
  %s7 = scalar_select 0, %s6, %s4
  // Predicated region
  $region2: #{forward.1} parent=0 // pred_check
    _
  $region3: #{forward.1} parent=0 // pred_check_branch
    %9 = sbr.rel (0) target = $region5
  $region4: #{forward.1} parent=0 // pred_region
    _
  $region5: #{forward.1} parent=0 // pred_fallthru
    _
  // Predicated region
  $region6: #{forward.1} parent=0 // pred_check
    _
  $region7: #{forward.1} parent=0 // pred_check_branch
    %11 = sbr.rel (0) target = $region9
  $region8: #{forward.1} parent=0 // pred_region
    _
  $region9: #{forward.1} parent=0 // pred_fallthru
    _
  // Predicated region
  $region10: #{forward.1} parent=0 // pred_check
    _
  $region11: #{forward.1} parent=0 // pred_check_branch
    %13 = sbr.rel (0) target = $region13
  $region12: #{forward.1} parent=0 // pred_region
    _
  $region13: #{forward.1} parent=0 // pred_fallthru
    _
  %v15 = vld [vmem:[%s0] sm:$0xff]
  %v16 = vld [vmem:[%s0 + $0x8] sm:$0xff]
  %v17 = vld [vmem:[%s0 + $0x10] sm:$0xff]
  %v18 = vld [vmem:[%s0 + $0x18] sm:$0xff]
  %v19 = vld [vmem:[%s0 + $0x20] sm:$0xff]
  %v20 = vld [vmem:[%s0 + $0x28] sm:$0xff]
  %v21 = vld [vmem:[%s0 + $0x30] sm:$0xff]
  %v22 = vld [vmem:[%s0 + $0x38] sm:$0xff]
  %v23 = vld [vmem:[%s0 + $0x40] sm:$0xff]
  %v24 = vld [vmem:[%s0 + $0x48] sm:$0xff]
  %v25 = vld [vmem:[%s0 + $0x50] sm:$0xff]
  %v26 = vld [vmem:[%s0 + $0x58] sm:$0xff]
  %v27 = vld [vmem:[%s0 + $0x60] sm:$0xff]
  %v28 = vld [vmem:[%s0 + $0x68] sm:$0xff]
  %v29 = vld [vmem:[%s0 + $0x70] sm:$0xff]
  %v30 = vld [vmem:[%s0 + $0x78] sm:$0xff]
  %v31 = vld [vmem:[%s0 + $0x80] sm:$0xff]
  %v32 = vld [vmem:[%s0 + $0x88] sm:$0xff]
  %v33 = vld [vmem:[%s0 + $0x90] sm:$0xff]
  %v34 = vld [vmem:[%s0 + $0x98] sm:$0xff]
  %v35 = vld [vmem:[%s0 + $0xa0] sm:$0xff]
  %v36 = vld [vmem:[%s0 + $0xa8] sm:$0xff]
  %v37 = vld [vmem:[%s0 + $0xb0] sm:$0xff]
  %v38 = vld [vmem:[%s0 + $0xb8] sm:$0xff]
  %v39 = vld [vmem:[%s0 + $0xc0] sm:$0xff]
  %v40 = vld [vmem:[%s0 + $0xc8] sm:$0xff]
  %v41 = vld [vmem:[%s0 + $0xd0] sm:$0xff]
  %v42 = vld [vmem:[%s0 + $0xd8] sm:$0xff]
  %v43 = vld [vmem:[%s0 + $0xe0] sm:$0xff]
  %v44 = vld [vmem:[%s0 + $0xe8] sm:$0xff]
  %v45 = vld [vmem:[%s0 + $0xf0] sm:$0xff]
  %v46 = vld [vmem:[%s0 + $0xf8] sm:$0xff]
  %v47 = vld [vmem:[%s0 + $0x100] sm:$0xff]
  %v48 = vld [vmem:[%s0 + $0x108] sm:$0xff]
  %v49 = vld [vmem:[%s0 + $0x110] sm:$0xff]
  %v50 = vld [vmem:[%s0 + $0x118] sm:$0xff]
  %v51 = vld [vmem:[%s0 + $0x120] sm:$0xff]
  %v52 = vld [vmem:[%s0 + $0x128] sm:$0xff]
  %v53 = vld [vmem:[%s0 + $0x130] sm:$0xff]
  %v54 = vld [vmem:[%s0 + $0x138] sm:$0xff]
  %v55 = vld [vmem:[%s0 + $0x140] sm:$0xff]
  %v56 = vld [vmem:[%s0 + $0x148] sm:$0xff]
  %v57 = vld [vmem:[%s0 + $0x150] sm:$0xff]
  %v58 = vld [vmem:[%s0 + $0x158] sm:$0xff]
  %v59 = vld [vmem:[%s0 + $0x160] sm:$0xff]
  %v60 = vld [vmem:[%s0 + $0x168] sm:$0xff]
  %v61 = vld [vmem:[%s0 + $0x170] sm:$0xff]
  %v62 = vld [vmem:[%s0 + $0x178] sm:$0xff]
  %v63 = vld [vmem:[%s0 + $0x180] sm:$0xff]
  %v64 = vld [vmem:[%s0 + $0x188] sm:$0xff]
  %v65 = vld [vmem:[%s0 + $0x190] sm:$0xff]
  %v66 = vld [vmem:[%s0 + $0x198] sm:$0xff]
  %v67 = vld [vmem:[%s0 + $0x1a0] sm:$0xff]
  %v68 = vld [vmem:[%s0 + $0x1a8] sm:$0xff]
  %v69 = vld [vmem:[%s0 + $0x1b0] sm:$0xff]
  %v70 = vld [vmem:[%s0 + $0x1b8] sm:$0xff]
  %v71 = vld [vmem:[%s0 + $0x1c0] sm:$0xff]
  %v72 = vld [vmem:[%s0 + $0x1c8] sm:$0xff]
  %v73 = vld [vmem:[%s0 + $0x1d0] sm:$0xff]
  %v74 = vld [vmem:[%s0 + $0x1d8] sm:$0xff]
  %v75 = vld [vmem:[%s0 + $0x1e0] sm:$0xff]
  %v76 = vld [vmem:[%s0 + $0x1e8] sm:$0xff]
  %v77 = vld [vmem:[%s0 + $0x1f0] sm:$0xff]
  %v78 = vld [vmem:[%s0 + $0x1f8] sm:$0xff]
  %vm79 = vcmask 23552
  %v80 = vsel %vm79, %v16, 0.0
  %v81 = vsel %vm79, %v18, 0.0
  %v82 = vsel %vm79, %v20, 0.0
  %v83 = vsel %vm79, %v22, 0.0
  %v84 = vsel %vm79, %v24, 0.0
  %v85 = vsel %vm79, %v26, 0.0
  %v86 = vsel %vm79, %v28, 0.0
  %v87 = vsel %vm79, %v30, 0.0
  %v88 = vsel %vm79, %v32, 0.0
  %v89 = vsel %vm79, %v34, 0.0
  %v90 = vsel %vm79, %v36, 0.0
  %v91 = vsel %vm79, %v38, 0.0
  %v92 = vsel %vm79, %v40, 0.0
  %v93 = vsel %vm79, %v42, 0.0
  %v94 = vsel %vm79, %v44, 0.0
  %v95 = vsel %vm79, %v46, 0.0
  %v96 = vsel %vm79, %v48, 0.0
  %v97 = vsel %vm79, %v50, 0.0
  %v98 = vsel %vm79, %v52, 0.0
  %v99 = vsel %vm79, %v54, 0.0
  %v100 = vsel %vm79, %v56, 0.0
  %v101 = vsel %vm79, %v58, 0.0
  %v102 = vsel %vm79, %v60, 0.0
  %v103 = vsel %vm79, %v62, 0.0
  %v104 = vsel %vm79, %v64, 0.0
  %v105 = vsel %vm79, %v66, 0.0
  %v106 = vsel %vm79, %v68, 0.0
  %v107 = vsel %vm79, %v70, 0.0
  %v108 = vsel %vm79, %v72, 0.0
  %v109 = vsel %vm79, %v74, 0.0
  %v110 = vsel %vm79, %v76, 0.0
  %v111 = vsel %vm79, %v78, 0.0
  %112 = vxpose.xlu0.b32.start [1/16] %v15, 128
  %113 = vxpose.xlu0.b32.cont [2/16] %v17, 128
  %114 = vxpose.xlu0.b32.cont [3/16] %v19, 128
  %115 = vxpose.xlu0.b32.cont [4/16] %v21, 128
  %116 = vxpose.xlu0.b32.cont [5/16] %v23, 128
  %117 = vxpose.xlu0.b32.cont [6/16] %v25, 128
  %118 = vxpose.xlu0.b32.cont [7/16] %v27, 128
  %119 = vxpose.xlu0.b32.cont [8/16] %v29, 128
  %120 = vxpose.xlu0.b32.cont [9/16] %v31, 128
  %121 = vxpose.xlu0.b32.cont [10/16] %v33, 128
  %122 = vxpose.xlu0.b32.cont [11/16] %v35, 128
  %123 = vxpose.xlu0.b32.cont [12/16] %v37, 128
  %124 = vxpose.xlu0.b32.cont [13/16] %v39, 128
  %125 = vxpose.xlu0.b32.cont [14/16] %v41, 128
  %126 = vxpose.xlu0.b32.cont [15/16] %v43, 128
  %127 = vxpose.xlu0.b32.end [16/16] %v45, 128
  %v128 = vpop.trf.xlu0
  %v129 = vpop.trf.xlu0
  %v130 = vpop.trf.xlu0
  %v131 = vpop.trf.xlu0
  %v132 = vpop.trf.xlu0
  %v133 = vpop.trf.xlu0
  %v134 = vpop.trf.xlu0
  %v135 = vpop.trf.xlu0
  %v136 = vpop.trf.xlu0
  %v137 = vpop.trf.xlu0
  %v138 = vpop.trf.xlu0
  %v139 = vpop.trf.xlu0
  %v140 = vpop.trf.xlu0
  %v141 = vpop.trf.xlu0
  %v142 = vpop.trf.xlu0
  %v143 = vpop.trf.xlu0
  %144 = vxpose.xlu0.b32.start [1/16] %v80, 128
  %145 = vxpose.xlu0.b32.cont [2/16] %v81, 128
  %146 = vxpose.xlu0.b32.cont [3/16] %v82, 128
  %147 = vxpose.xlu0.b32.cont [4/16] %v83, 128
  %148 = vxpose.xlu0.b32.cont [5/16] %v84, 128
  %149 = vxpose.xlu0.b32.cont [6/16] %v85, 128
  %150 = vxpose.xlu0.b32.cont [7/16] %v86, 128
  %151 = vxpose.xlu0.b32.cont [8/16] %v87, 128
  %152 = vxpose.xlu0.b32.cont [9/16] %v88, 128
  %153 = vxpose.xlu0.b32.cont [10/16] %v89, 128
  %154 = vxpose.xlu0.b32.cont [11/16] %v90, 128
  %155 = vxpose.xlu0.b32.cont [12/16] %v91, 128
  %156 = vxpose.xlu0.b32.cont [13/16] %v92, 128
  %157 = vxpose.xlu0.b32.cont [14/16] %v93, 128
  %158 = vxpose.xlu0.b32.cont [15/16] %v94, 128
  %159 = vxpose.xlu0.b32.end [16/16] %v95, 128
  %v160 = vpop.trf.xlu0
  %v161 = vpop.trf.xlu0
  %v162 = vpop.trf.xlu0
  %v163 = vpop.trf.xlu0
  %v164 = vpop.trf.xlu0
  %v165 = vpop.trf.xlu0
  %v166 = vpop.trf.xlu0
  %v167 = vpop.trf.xlu0
  %v168 = vpop.trf.xlu0
  %v169 = vpop.trf.xlu0
  %v170 = vpop.trf.xlu0
  %v171 = vpop.trf.xlu0
  %v172 = vpop.trf.xlu0
  %v173 = vpop.trf.xlu0
  %v174 = vpop.trf.xlu0
  %v175 = vpop.trf.xlu0
  %176 = vxpose.xlu0.b32.start [1/16] %v47, 128
  %177 = vxpose.xlu0.b32.cont [2/16] %v49, 128
  %178 = vxpose.xlu0.b32.cont [3/16] %v51, 128
  %179 = vxpose.xlu0.b32.cont [4/16] %v53, 128
  %180 = vxpose.xlu0.b32.cont [5/16] %v55, 128
  %181 = vxpose.xlu0.b32.cont [6/16] %v57, 128
  %182 = vxpose.xlu0.b32.cont [7/16] %v59, 128
  %183 = vxpose.xlu0.b32.cont [8/16] %v61, 128
  %184 = vxpose.xlu0.b32.cont [9/16] %v63, 128
  %185 = vxpose.xlu0.b32.cont [10/16] %v65, 128
  %186 = vxpose.xlu0.b32.cont [11/16] %v67, 128
  %187 = vxpose.xlu0.b32.cont [12/16] %v69, 128
  %188 = vxpose.xlu0.b32.cont [13/16] %v71, 128
  %189 = vxpose.xlu0.b32.cont [14/16] %v73, 128
  %190 = vxpose.xlu0.b32.cont [15/16] %v75, 128
  %191 = vxpose.xlu0.b32.end [16/16] %v77, 128
  %v192 = vpop.trf.xlu0
  %v193 = vpop.trf.xlu0
  %v194 = vpop.trf.xlu0
  %v195 = vpop.trf.xlu0
  %v196 = vpop.trf.xlu0
  %v197 = vpop.trf.xlu0
  %v198 = vpop.trf.xlu0
  %v199 = vpop.trf.xlu0
  %v200 = vpop.trf.xlu0
  %v201 = vpop.trf.xlu0
  %v202 = vpop.trf.xlu0
  %v203 = vpop.trf.xlu0
  %v204 = vpop.trf.xlu0
  %v205 = vpop.trf.xlu0
  %v206 = vpop.trf.xlu0
  %v207 = vpop.trf.xlu0
  %208 = vxpose.xlu0.b32.start [1/16] %v96, 128
  %209 = vxpose.xlu0.b32.cont [2/16] %v97, 128
  %210 = vxpose.xlu0.b32.cont [3/16] %v98, 128
  %211 = vxpose.xlu0.b32.cont [4/16] %v99, 128
  %212 = vxpose.xlu0.b32.cont [5/16] %v100, 128
  %213 = vxpose.xlu0.b32.cont [6/16] %v101, 128
  %214 = vxpose.xlu0.b32.cont [7/16] %v102, 128
  %215 = vxpose.xlu0.b32.cont [8/16] %v103, 128
  %216 = vxpose.xlu0.b32.cont [9/16] %v104, 128
  %217 = vxpose.xlu0.b32.cont [10/16] %v105, 128
  %218 = vxpose.xlu0.b32.cont [11/16] %v106, 128
  %219 = vxpose.xlu0.b32.cont [12/16] %v107, 128
  %220 = vxpose.xlu0.b32.cont [13/16] %v108, 128
  %221 = vxpose.xlu0.b32.cont [14/16] %v109, 128
  %222 = vxpose.xlu0.b32.cont [15/16] %v110, 128
  %223 = vxpose.xlu0.b32.end [16/16] %v111, 128
  %v224 = vpop.trf.xlu0
  %v225 = vpop.trf.xlu0
  %v226 = vpop.trf.xlu0
  %v227 = vpop.trf.xlu0
  %v228 = vpop.trf.xlu0
  %v229 = vpop.trf.xlu0
  %v230 = vpop.trf.xlu0
  %v231 = vpop.trf.xlu0
  %v232 = vpop.trf.xlu0
  %v233 = vpop.trf.xlu0
  %v234 = vpop.trf.xlu0
  %v235 = vpop.trf.xlu0
  %v236 = vpop.trf.xlu0
  %v237 = vpop.trf.xlu0
  %v238 = vpop.trf.xlu0
  %v239 = vpop.trf.xlu0
  %vm280 = vcmask 1041408
  %v281 = vrot.slane %v128, 6
  %v282 = vrot.slane %v129, 6
  %v283 = vsel %vm280, %v281, %v282
  %v284 = vrot.slane %v130, 6
  %v285 = vsel %vm280, %v282, %v284
  %v286 = vrot.slane %v131, 6
  %v287 = vsel %vm280, %v284, %v286
  %v288 = vrot.slane %v132, 6
  %v289 = vsel %vm280, %v286, %v288
  %v290 = vrot.slane %v133, 6
  %v291 = vsel %vm280, %v288, %v290
  %v292 = vrot.slane %v134, 6
  %v293 = vsel %vm280, %v290, %v292
  %v294 = vrot.slane %v135, 6
  %v295 = vsel %vm280, %v292, %v294
  %v296 = vrot.slane %v136, 6
  %v297 = vsel %vm280, %v294, %v296
  %v298 = vrot.slane %v137, 6
  %v299 = vsel %vm280, %v296, %v298
  %v300 = vrot.slane %v138, 6
  %v301 = vsel %vm280, %v298, %v300
  %v302 = vrot.slane %v139, 6
  %v303 = vsel %vm280, %v300, %v302
  %v304 = vrot.slane %v140, 6
  %v305 = vsel %vm280, %v302, %v304
  %v306 = vrot.slane %v141, 6
  %v307 = vsel %vm280, %v304, %v306
  %v308 = vrot.slane %v142, 6
  %v309 = vsel %vm280, %v306, %v308
  %v310 = vrot.slane %v143, 6
  %v311 = vsel %vm280, %v308, %v310
  %v312 = vrot.slane %v160, 6
  %v313 = vsel %vm280, %v310, %v312
  %v314 = vrot.slane %v161, 6
  %v315 = vsel %vm280, %v312, %v314
  %v316 = vrot.slane %v162, 6
  %v317 = vsel %vm280, %v314, %v316
  %v318 = vrot.slane %v163, 6
  %v319 = vsel %vm280, %v316, %v318
  %v320 = vrot.slane %v192, 6
  %v321 = vrot.slane %v193, 6
  %v322 = vsel %vm280, %v320, %v321
  %v323 = vrot.slane %v194, 6
  %v324 = vsel %vm280, %v321, %v323
  %v325 = vrot.slane %v195, 6
  %v326 = vsel %vm280, %v323, %v325
  %v327 = vrot.slane %v196, 6
  %v328 = vsel %vm280, %v325, %v327
  %v329 = vrot.slane %v197, 6
  %v330 = vsel %vm280, %v327, %v329
  %v331 = vrot.slane %v198, 6
  %v332 = vsel %vm280, %v329, %v331
  %v333 = vrot.slane %v199, 6
  %v334 = vsel %vm280, %v331, %v333
  %v335 = vrot.slane %v200, 6
  %v336 = vsel %vm280, %v333, %v335
  %v337 = vrot.slane %v201, 6
  %v338 = vsel %vm280, %v335, %v337
  %v339 = vrot.slane %v202, 6
  %v340 = vsel %vm280, %v337, %v339
  %v341 = vrot.slane %v203, 6
  %v342 = vsel %vm280, %v339, %v341
  %v343 = vrot.slane %v204, 6
  %v344 = vsel %vm280, %v341, %v343
  %v345 = vrot.slane %v205, 6
  %v346 = vsel %vm280, %v343, %v345
  %v347 = vrot.slane %v206, 6
  %v348 = vsel %vm280, %v345, %v347
  %v349 = vrot.slane %v207, 6
  %v350 = vsel %vm280, %v347, %v349
  %v351 = vrot.slane %v224, 6
  %v352 = vsel %vm280, %v349, %v351
  %v353 = vrot.slane %v225, 6
  %v354 = vsel %vm280, %v351, %v353
  %v355 = vrot.slane %v226, 6
  %v356 = vsel %vm280, %v353, %v355
  %v357 = vrot.slane %v227, 6
  %v358 = vsel %vm280, %v355, %v357
  %v399 = vsel %vm280, 0.0, %v281
  %v400 = vsel %vm280, 0.0, %v320
  %v401 = vpack.c.bf16 %v283, %v399
  %v402 = vpack.c.bf16 %v287, %v285
  %v403 = vpack.c.bf16 %v291, %v289
  %v404 = vpack.c.bf16 %v295, %v293
  %v405 = vpack.c.bf16 %v299, %v297
  %v406 = vpack.c.bf16 %v303, %v301
  %v407 = vpack.c.bf16 %v307, %v305
  %v408 = vpack.c.bf16 %v311, %v309
  %v409 = vpack.c.bf16 %v315, %v313
  %v410 = vpack.c.bf16 %v319, %v317
  %v411 = vpack.c.bf16 %v322, %v400
  %v412 = vpack.c.bf16 %v326, %v324
  %v413 = vpack.c.bf16 %v330, %v328
  %v414 = vpack.c.bf16 %v334, %v332
  %v415 = vpack.c.bf16 %v338, %v336
  %v416 = vpack.c.bf16 %v342, %v340
  %v417 = vpack.c.bf16 %v346, %v344
  %v418 = vpack.c.bf16 %v350, %v348
  %v419 = vpack.c.bf16 %v354, %v352
  %v420 = vpack.c.bf16 %v358, %v356
  %v421 = vld [vmem:[%s1] sm:$0xf]
  %v422 = vld [vmem:[%s1 + $0x4] sm:$0xf]
  %v423 = vld [vmem:[%s1 + $0x8] sm:$0xf]
  %v424 = vld [vmem:[%s1 + $0xc] sm:$0xf]
  %v425 = vld [vmem:[%s1 + $0x10] sm:$0xf]
  %v426 = vld [vmem:[%s1 + $0x14] sm:$0xf]
  %v427 = vld [vmem:[%s1 + $0x18] sm:$0xf]
  %v428 = vld [vmem:[%s1 + $0x1c] sm:$0xf]
  %v429 = vld [vmem:[%s1 + $0x20] sm:$0xf]
  %v430 = vld [vmem:[%s1 + $0x24] sm:$0xf]
  %v431 = vld [vmem:[%s1 + $0x28] sm:$0xf]
  %v432 = vld [vmem:[%s1 + $0x2c] sm:$0xf]
  %v433 = vld [vmem:[%s1 + $0x30] sm:$0xf]
  %v434 = vld [vmem:[%s1 + $0x34] sm:$0xf]
  %v435 = vld [vmem:[%s1 + $0x38] sm:$0xf]
  %v436 = vld [vmem:[%s1 + $0x3c] sm:$0xf]
  %vm437 = vsmask.f32 7424
  %v439 = vshrl.u32 %v401, 16
  %v441 = vshll.u32 %v401, 16
  %v443 = vrot.slane %v441, 1
  %v444 = vor.u32 %v439, %v443
  %v446 = vshll.u32 %v402, 16
  %v448 = vrot.slane %v446, 1
  %v449 = vsel %vm437, %v444, %v448
  %v450 = vshrl.u32 %v402, 16
  %v452 = vor.u32 %v450, %v448
  %v454 = vshll.u32 %v403, 16
  %v456 = vrot.slane %v454, 1
  %v457 = vsel %vm437, %v452, %v456
  %v458 = vshrl.u32 %v403, 16
  %v460 = vor.u32 %v458, %v456
  %v462 = vshll.u32 %v404, 16
  %v464 = vrot.slane %v462, 1
  %v465 = vsel %vm437, %v460, %v464
  %v466 = vshrl.u32 %v404, 16
  %v468 = vor.u32 %v466, %v464
  %v470 = vshll.u32 %v405, 16
  %v472 = vrot.slane %v470, 1
  %v473 = vsel %vm437, %v468, %v472
  %v474 = vshrl.u32 %v405, 16
  %v476 = vor.u32 %v474, %v472
  %v478 = vshll.u32 %v406, 16
  %v480 = vrot.slane %v478, 1
  %v481 = vsel %vm437, %v476, %v480
  %v482 = vshrl.u32 %v406, 16
  %v484 = vor.u32 %v482, %v480
  %v486 = vshll.u32 %v407, 16
  %v488 = vrot.slane %v486, 1
  %v489 = vsel %vm437, %v484, %v488
  %v490 = vshrl.u32 %v407, 16
  %v492 = vor.u32 %v490, %v488
  %v494 = vshll.u32 %v408, 16
  %v496 = vrot.slane %v494, 1
  %v497 = vsel %vm437, %v492, %v496
  %v498 = vshrl.u32 %v408, 16
  %v500 = vor.u32 %v498, %v496
  %v502 = vshll.u32 %v409, 16
  %v504 = vrot.slane %v502, 1
  %v505 = vsel %vm437, %v500, %v504
  %v506 = vshrl.u32 %v409, 16
  %v508 = vor.u32 %v506, %v504
  %v510 = vshll.u32 %v410, 16
  %v512 = vrot.slane %v510, 1
  %v513 = vsel %vm437, %v508, %v512
  %v515 = vshrl.u32 %v411, 16
  %v517 = vshll.u32 %v411, 16
  %v519 = vrot.slane %v517, 1
  %v520 = vor.u32 %v515, %v519
  %v522 = vshll.u32 %v412, 16
  %v524 = vrot.slane %v522, 1
  %v525 = vsel %vm437, %v520, %v524
  %v526 = vshrl.u32 %v412, 16
  %v528 = vor.u32 %v526, %v524
  %v530 = vshll.u32 %v413, 16
  %v532 = vrot.slane %v530, 1
  %v533 = vsel %vm437, %v528, %v532
  %v534 = vshrl.u32 %v413, 16
  %v536 = vor.u32 %v534, %v532
  %v538 = vshll.u32 %v414, 16
  %v540 = vrot.slane %v538, 1
  %v541 = vsel %vm437, %v536, %v540
  %v542 = vshrl.u32 %v414, 16
  %v544 = vor.u32 %v542, %v540
  %v546 = vshll.u32 %v415, 16
  %v548 = vrot.slane %v546, 1
  %v549 = vsel %vm437, %v544, %v548
  %v550 = vshrl.u32 %v415, 16
  %v552 = vor.u32 %v550, %v548
  %v554 = vshll.u32 %v416, 16
  %v556 = vrot.slane %v554, 1
  %v557 = vsel %vm437, %v552, %v556
  %v558 = vshrl.u32 %v416, 16
  %v560 = vor.u32 %v558, %v556
  %v562 = vshll.u32 %v417, 16
  %v564 = vrot.slane %v562, 1
  %v565 = vsel %vm437, %v560, %v564
  %v566 = vshrl.u32 %v417, 16
  %v568 = vor.u32 %v566, %v564
  %v570 = vshll.u32 %v418, 16
  %v572 = vrot.slane %v570, 1
  %v573 = vsel %vm437, %v568, %v572
  %v574 = vshrl.u32 %v418, 16
  %v576 = vor.u32 %v574, %v572
  %v578 = vshll.u32 %v419, 16
  %v580 = vrot.slane %v578, 1
  %v581 = vsel %vm437, %v576, %v580
  %v582 = vshrl.u32 %v419, 16
  %v584 = vor.u32 %v582, %v580
  %v586 = vshll.u32 %v420, 16
  %v588 = vrot.slane %v586, 1
  %v589 = vsel %vm437, %v584, %v588
  %v608 = vld [vmem:[%s1 + $0x40] sm:$0xf]
  %v609 = vld [vmem:[%s1 + $0x44] sm:$0xf]
  %v610 = vld [vmem:[%s1 + $0x48] sm:$0xf]
  %v611 = vld [vmem:[%s1 + $0x4c] sm:$0xf]
  %v612 = vld [vmem:[%s1 + $0x50] sm:$0xf]
  %v613 = vld [vmem:[%s1 + $0x54] sm:$0xf]
  %v614 = vld [vmem:[%s1 + $0x58] sm:$0xf]
  %v615 = vld [vmem:[%s1 + $0x5c] sm:$0xf]
  %v616 = vld [vmem:[%s1 + $0x60] sm:$0xf]
  %v617 = vld [vmem:[%s1 + $0x64] sm:$0xf]
  %v618 = vld [vmem:[%s1 + $0x68] sm:$0xf]
  %v619 = vld [vmem:[%s1 + $0x6c] sm:$0xf]
  %v620 = vld [vmem:[%s1 + $0x70] sm:$0xf]
  %v621 = vld [vmem:[%s1 + $0x74] sm:$0xf]
  %v622 = vld [vmem:[%s1 + $0x78] sm:$0xf]
  %v623 = vld [vmem:[%s1 + $0x7c] sm:$0xf]
  %v640 = vunpack.c.l.b16 %v608
  %v641 = vunpack.c.l.b16 %v609
  %v642 = vunpack.c.l.b16 %v610
  %v643 = vunpack.c.l.b16 %v611
  %v644 = vunpack.c.l.b16 %v612
  %v645 = vunpack.c.l.b16 %v613
  %v646 = vunpack.c.l.b16 %v614
  %v647 = vunpack.c.l.b16 %v615
  %v648 = vunpack.c.l.b16 %v616
  %v649 = vunpack.c.l.b16 %v617
  %v650 = vunpack.c.l.b16 %v618
  %v651 = vunpack.c.l.b16 %v619
  %v652 = vunpack.c.l.b16 %v620
  %v653 = vunpack.c.l.b16 %v621
  %v654 = vunpack.c.l.b16 %v622
  %v655 = vunpack.c.l.b16 %v623
  %v656 = vpack.c.b16 %v641, %v640
  %v657 = vpack.c.b16 %v643, %v642
  %v658 = vpack.c.b16 %v645, %v644
  %v659 = vpack.c.b16 %v647, %v646
  %v660 = vpack.c.b16 %v649, %v648
  %v661 = vpack.c.b16 %v651, %v650
  %v662 = vpack.c.b16 %v653, %v652
  %v663 = vpack.c.b16 %v655, %v654
  %672 = vmatprep.subr.bf16.mxu0 0
  %673 = vmatpush1.bf16.msra.mxu0 %v656
  %674 = vmatprep.subr.bf16.mxu0 0
  %675 = vmatpush1.bf16.msra.mxu0 %v657
  %676 = vmatprep.subr.bf16.mxu0 0
  %677 = vmatpush1.bf16.msra.mxu0 %v658
  %678 = vmatprep.subr.bf16.mxu0 0
  %679 = vmatpush1.bf16.msra.mxu0 %v659
  %680 = vmatprep.subr.bf16.mxu0 0
  %681 = vmatpush1.bf16.msra.mxu0 %v660
  %682 = vmatprep.subr.bf16.mxu0 0
  %683 = vmatpush1.bf16.msra.mxu0 %v661
  %684 = vmatprep.subr.bf16.mxu0 0
  %685 = vmatpush1.bf16.msra.mxu0 %v662
  %686 = vmatprep.subr.bf16.mxu0 0
  %687 = vmatpush1.bf16.msra.mxu0 %v663
  %688 = vmatprep.subr.bf16.mxu0 0
  %689 = vmatpush1.bf16.msra.mxu0 0
  %690 = vmatprep.subr.bf16.mxu0 0
  %691 = vmatpush1.bf16.msra.mxu0 0
  %692 = vmatprep.subr.bf16.mxu0 0
  %693 = vmatpush1.bf16.msra.mxu0 0
  %694 = vmatprep.subr.bf16.mxu0 0
  %695 = vmatpush1.bf16.msra.mxu0 0
  %696 = vmatprep.subr.bf16.mxu0 0
  %697 = vmatpush1.bf16.msra.mxu0 0
  %698 = vmatprep.subr.bf16.mxu0 0
  %699 = vmatpush1.bf16.msra.mxu0 0
  %700 = vmatprep.subr.bf16.mxu0 0
  %701 = vmatpush1.bf16.msra.mxu0 0
  %702 = vmatprep.subr.bf16.mxu0 0
  %703 = vmatpush1.bf16.msra.mxu0 0
  %704 = vmatprep.mubr.bf16.mxu0 0
  %705 = vmatmul.mubr.bf16.gmra.mrb[0].mxu0 %v449
  %v706 = vpop.f32.mrb[0].mxu0
  %v707 = vadd.f32 0.0, %v706
  %v708 = vpop.f32.mrb[0].mxu0
  %v709 = vpop.f32.mrb[0].mxu0
  %v710 = vadd.f32 0.0, %v709
  %v711 = vpop.f32.mrb[0].mxu0
  %712 = vmatprep.mubr.bf16.mxu0 0
  %713 = vmatmul.mubr.bf16.gmra.mrb[0].mxu0 %v457
  %v714 = vpop.f32.mrb[0].mxu0
  %v715 = vadd.f32 0.0, %v714
  %v716 = vpop.f32.mrb[0].mxu0
  %v717 = vpop.f32.mrb[0].mxu0
  %v718 = vadd.f32 0.0, %v717
  %v719 = vpop.f32.mrb[0].mxu0
  %720 = vmatprep.mubr.bf16.mxu0 0
  %721 = vmatmul.mubr.bf16.gmra.mrb[0].mxu0 %v465
  %v722 = vpop.f32.mrb[0].mxu0
  %v723 = vadd.f32 0.0, %v722
  %v724 = vpop.f32.mrb[0].mxu0
  %v725 = vpop.f32.mrb[0].mxu0
  %v726 = vadd.f32 0.0, %v725
  %v727 = vpop.f32.mrb[0].mxu0
  %728 = vmatprep.mubr.bf16.mxu0 0
  %729 = vmatmul.mubr.bf16.gmra.mrb[0].mxu0 %v473
  %v730 = vpop.f32.mrb[0].mxu0
  %v731 = vadd.f32 0.0, %v730
  %v732 = vpop.f32.mrb[0].mxu0
  %v733 = vpop.f32.mrb[0].mxu0
  %v734 = vadd.f32 0.0, %v733
  %v735 = vpop.f32.mrb[0].mxu0
  %736 = vmatprep.mubr.bf16.mxu0 0
  %737 = vmatmul.mubr.bf16.gmra.mrb[0].mxu0 %v481
  %v738 = vpop.f32.mrb[0].mxu0
  %v739 = vadd.f32 0.0, %v738
  %v740 = vpop.f32.mrb[0].mxu0
  %v741 = vpop.f32.mrb[0].mxu0
  %v742 = vadd.f32 0.0, %v741
  %v743 = vpop.f32.mrb[0].mxu0
  %744 = vmatprep.mubr.bf16.mxu0 0
  %745 = vmatmul.mubr.bf16.gmra.mrb[0].mxu0 %v489
  %v746 = vpop.f32.mrb[0].mxu0
  %v747 = vadd.f32 0.0, %v746
  %v748 = vpop.f32.mrb[0].mxu0
  %v749 = vpop.f32.mrb[0].mxu0
  %v750 = vadd.f32 0.0, %v749
  %v751 = vpop.f32.mrb[0].mxu0
  %752 = vmatprep.mubr.bf16.mxu0 0
  %753 = vmatmul.mubr.bf16.gmra.mrb[0].mxu0 %v497
  %v754 = vpop.f32.mrb[0].mxu0
  %v755 = vadd.f32 0.0, %v754
  %v756 = vpop.f32.mrb[0].mxu0
  %v757 = vpop.f32.mrb[0].mxu0
  %v758 = vadd.f32 0.0, %v757
  %v759 = vpop.f32.mrb[0].mxu0
  %760 = vmatprep.mubr.bf16.mxu0 0
  %761 = vmatmul.mubr.bf16.gmra.mrb[0].mxu0 %v505
  %v762 = vpop.f32.mrb[0].mxu0
  %v763 = vadd.f32 0.0, %v762
  %v764 = vpop.f32.mrb[0].mxu0
  %v765 = vpop.f32.mrb[0].mxu0
  %v766 = vadd.f32 0.0, %v765
  %v767 = vpop.f32.mrb[0].mxu0
  %768 = vmatprep.mubr.bf16.mxu0 0
  %769 = vmatmul.mubr.bf16.gmra.mrb[0].mxu0 %v513
  %v770 = vpop.f32.mrb[0].mxu0
  %v771 = vadd.f32 0.0, %v770
  %v772 = vpop.f32.mrb[0].mxu0
  %v773 = vpop.f32.mrb[0].mxu0
  %v774 = vpop.f32.mrb[0].mxu0
  %775 = vmatprep.mubr.bf16.mxu0 0
  %776 = vmatmul.mubr.bf16.gmra.mrb[0].mxu0 %v525
  %v777 = vpop.f32.mrb[0].mxu0
  %v778 = vadd.f32 0.0, %v777
  %v779 = vpop.f32.mrb[0].mxu0
  %v780 = vpop.f32.mrb[0].mxu0
  %v781 = vadd.f32 0.0, %v780
  %v782 = vpop.f32.mrb[0].mxu0
  %783 = vmatprep.mubr.bf16.mxu0 0
  %784 = vmatmul.mubr.bf16.gmra.mrb[0].mxu0 %v533
  %v785 = vpop.f32.mrb[0].mxu0
  %v786 = vadd.f32 0.0, %v785
  %v787 = vpop.f32.mrb[0].mxu0
  %v788 = vpop.f32.mrb[0].mxu0
  %v789 = vadd.f32 0.0, %v788
  %v790 = vpop.f32.mrb[0].mxu0
  %791 = vmatprep.mubr.bf16.mxu0 0
  %792 = vmatmul.mubr.bf16.gmra.mrb[0].mxu0 %v541
  %v793 = vpop.f32.mrb[0].mxu0
  %v794 = vadd.f32 0.0, %v793
  %v795 = vpop.f32.mrb[0].mxu0
  %v796 = vpop.f32.mrb[0].mxu0
  %v797 = vadd.f32 0.0, %v796
  %v798 = vpop.f32.mrb[0].mxu0
  %799 = vmatprep.mubr.bf16.mxu0 0
  %800 = vmatmul.mubr.bf16.gmra.mrb[0].mxu0 %v549
  %v801 = vpop.f32.mrb[0].mxu0
  %v802 = vadd.f32 0.0, %v801
  %v803 = vpop.f32.mrb[0].mxu0
  %v804 = vpop.f32.mrb[0].mxu0
  %v805 = vadd.f32 0.0, %v804
  %v806 = vpop.f32.mrb[0].mxu0
  %807 = vmatprep.mubr.bf16.mxu0 0
  %808 = vmatmul.mubr.bf16.gmra.mrb[0].mxu0 %v557
  %v809 = vpop.f32.mrb[0].mxu0
  %v810 = vadd.f32 0.0, %v809
  %v811 = vpop.f32.mrb[0].mxu0
  %v812 = vpop.f32.mrb[0].mxu0
  %v813 = vadd.f32 0.0, %v812
  %v814 = vpop.f32.mrb[0].mxu0
  %815 = vmatprep.mubr.bf16.mxu0 0
  %816 = vmatmul.mubr.bf16.gmra.mrb[0].mxu0 %v565
  %v817 = vpop.f32.mrb[0].mxu0
  %v818 = vadd.f32 0.0, %v817
  %v819 = vpop.f32.mrb[0].mxu0
  %v820 = vpop.f32.mrb[0].mxu0
  %v821 = vadd.f32 0.0, %v820
  %v822 = vpop.f32.mrb[0].mxu0
  %823 = vmatprep.mubr.bf16.mxu0 0
  %824 = vmatmul.mubr.bf16.gmra.mrb[0].mxu0 %v573
  %v825 = vpop.f32.mrb[0].mxu0
  %v826 = vadd.f32 0.0, %v825
  %v827 = vpop.f32.mrb[0].mxu0
  %v828 = vpop.f32.mrb[0].mxu0
  %v829 = vadd.f32 0.0, %v828
  %v830 = vpop.f32.mrb[0].mxu0
  %831 = vmatprep.mubr.bf16.mxu0 0
  %832 = vmatmul.mubr.bf16.gmra.mrb[0].mxu0 %v581
  %v833 = vpop.f32.mrb[0].mxu0
  %v834 = vadd.f32 0.0, %v833
  %v835 = vpop.f32.mrb[0].mxu0
  %v836 = vpop.f32.mrb[0].mxu0
  %v837 = vadd.f32 0.0, %v836
  %v838 = vpop.f32.mrb[0].mxu0
  %839 = vmatprep.mubr.bf16.mxu0 0
  %840 = vmatmul.mubr.bf16.gmra.mrb[0].mxu0 %v589
  %v841 = vpop.f32.mrb[0].mxu0
  %v842 = vadd.f32 0.0, %v841
  %v843 = vpop.f32.mrb[0].mxu0
  %v844 = vpop.f32.mrb[0].mxu0
  %v845 = vpop.f32.mrb[0].mxu0
  %846 = vdwg.mxu0
  %v863 = vunpack.c.l.b16 %v421
  %v864 = vunpack.c.l.b16 %v422
  %v865 = vunpack.c.l.b16 %v423
  %v866 = vunpack.c.l.b16 %v424
  %v867 = vunpack.c.l.b16 %v425
  %v868 = vunpack.c.l.b16 %v426
  %v869 = vunpack.c.l.b16 %v427
  %v870 = vunpack.c.l.b16 %v428
  %v871 = vunpack.c.l.b16 %v429
  %v872 = vunpack.c.l.b16 %v430
  %v873 = vunpack.c.l.b16 %v431
  %v874 = vunpack.c.l.b16 %v432
  %v875 = vunpack.c.l.b16 %v433
  %v876 = vunpack.c.l.b16 %v434
  %v877 = vunpack.c.l.b16 %v435
  %v878 = vunpack.c.l.b16 %v436
  %v879 = vpack.c.b16 %v864, %v863
  %v880 = vpack.c.b16 %v866, %v865
  %v881 = vpack.c.b16 %v868, %v867
  %v882 = vpack.c.b16 %v870, %v869
  %v883 = vpack.c.b16 %v872, %v871
  %v884 = vpack.c.b16 %v874, %v873
  %v885 = vpack.c.b16 %v876, %v875
  %v886 = vpack.c.b16 %v878, %v877
  %895 = vmatprep.subr.bf16.mxu0 0
  %896 = vmatpush1.bf16.msra.mxu0 %v879
  %897 = vmatprep.subr.bf16.mxu0 0
  %898 = vmatpush1.bf16.msra.mxu0 %v880
  %899 = vmatprep.subr.bf16.mxu0 0
  %900 = vmatpush1.bf16.msra.mxu0 %v881
  %901 = vmatprep.subr.bf16.mxu0 0
  %902 = vmatpush1.bf16.msra.mxu0 %v882
  %903 = vmatprep.subr.bf16.mxu0 0
  %904 = vmatpush1.bf16.msra.mxu0 %v883
  %905 = vmatprep.subr.bf16.mxu0 0
  %906 = vmatpush1.bf16.msra.mxu0 %v884
  %907 = vmatprep.subr.bf16.mxu0 0
  %908 = vmatpush1.bf16.msra.mxu0 %v885
  %909 = vmatprep.subr.bf16.mxu0 0
  %910 = vmatpush1.bf16.msra.mxu0 %v886
  %911 = vmatprep.subr.bf16.mxu0 0
  %912 = vmatpush1.bf16.msra.mxu0 0
  %913 = vmatprep.subr.bf16.mxu0 0
  %914 = vmatpush1.bf16.msra.mxu0 0
  %915 = vmatprep.subr.bf16.mxu0 0
  %916 = vmatpush1.bf16.msra.mxu0 0
  %917 = vmatprep.subr.bf16.mxu0 0
  %918 = vmatpush1.bf16.msra.mxu0 0
  %919 = vmatprep.subr.bf16.mxu0 0
  %920 = vmatpush1.bf16.msra.mxu0 0
  %921 = vmatprep.subr.bf16.mxu0 0
  %922 = vmatpush1.bf16.msra.mxu0 0
  %923 = vmatprep.subr.bf16.mxu0 0
  %924 = vmatpush1.bf16.msra.mxu0 0
  %925 = vmatprep.subr.bf16.mxu0 0
  %926 = vmatpush1.bf16.msra.mxu0 0
  %927 = vmatprep.mubr.bf16.mxu0 0
  %928 = vmatmul.mubr.bf16.gmra.mrb[0].mxu0 %v401
  %v929 = vpop.f32.mrb[0].mxu0
  %v930 = vadd.f32 %v707, %v929
  %v931 = vpop.f32.mrb[0].mxu0
  %v932 = vpop.f32.mrb[0].mxu0
  %v933 = vadd.f32 %v710, %v932
  %v934 = vpop.f32.mrb[0].mxu0
  %935 = vmatprep.mubr.bf16.mxu0 0
  %936 = vmatmul.mubr.bf16.gmra.mrb[0].mxu0 %v402
  %v937 = vpop.f32.mrb[0].mxu0
  %v938 = vadd.f32 %v715, %v937
  %v939 = vpop.f32.mrb[0].mxu0
  %v940 = vpop.f32.mrb[0].mxu0
  %v941 = vadd.f32 %v718, %v940
  %v942 = vpop.f32.mrb[0].mxu0
  %943 = vmatprep.mubr.bf16.mxu0 0
  %944 = vmatmul.mubr.bf16.gmra.mrb[0].mxu0 %v403
  %v945 = vpop.f32.mrb[0].mxu0
  %v946 = vadd.f32 %v723, %v945
  %v947 = vpop.f32.mrb[0].mxu0
  %v948 = vpop.f32.mrb[0].mxu0
  %v949 = vadd.f32 %v726, %v948
  %v950 = vpop.f32.mrb[0].mxu0
  %951 = vmatprep.mubr.bf16.mxu0 0
  %952 = vmatmul.mubr.bf16.gmra.mrb[0].mxu0 %v404
  %v953 = vpop.f32.mrb[0].mxu0
  %v954 = vadd.f32 %v731, %v953
  %v955 = vpop.f32.mrb[0].mxu0
  %v956 = vpop.f32.mrb[0].mxu0
  %v957 = vadd.f32 %v734, %v956
  %v958 = vpop.f32.mrb[0].mxu0
  %959 = vmatprep.mubr.bf16.mxu0 0
  %960 = vmatmul.mubr.bf16.gmra.mrb[0].mxu0 %v405
  %v961 = vpop.f32.mrb[0].mxu0
  %v962 = vadd.f32 %v739, %v961
  %v963 = vpop.f32.mrb[0].mxu0
  %v964 = vpop.f32.mrb[0].mxu0
  %v965 = vadd.f32 %v742, %v964
  %v966 = vpop.f32.mrb[0].mxu0
  %967 = vmatprep.mubr.bf16.mxu0 0
  %968 = vmatmul.mubr.bf16.gmra.mrb[0].mxu0 %v406
  %v969 = vpop.f32.mrb[0].mxu0
  %v970 = vadd.f32 %v747, %v969
  %v971 = vpop.f32.mrb[0].mxu0
  %v972 = vpop.f32.mrb[0].mxu0
  %v973 = vadd.f32 %v750, %v972
  %v974 = vpop.f32.mrb[0].mxu0
  %975 = vmatprep.mubr.bf16.mxu0 0
  %976 = vmatmul.mubr.bf16.gmra.mrb[0].mxu0 %v407
  %v977 = vpop.f32.mrb[0].mxu0
  %v978 = vadd.f32 %v755, %v977
  %v979 = vpop.f32.mrb[0].mxu0
  %v980 = vpop.f32.mrb[0].mxu0
  %v981 = vadd.f32 %v758, %v980
  %v982 = vpop.f32.mrb[0].mxu0
  %983 = vmatprep.mubr.bf16.mxu0 0
  %984 = vmatmul.mubr.bf16.gmra.mrb[0].mxu0 %v408
  %v985 = vpop.f32.mrb[0].mxu0
  %v986 = vadd.f32 %v763, %v985
  %v987 = vpop.f32.mrb[0].mxu0
  %v988 = vpop.f32.mrb[0].mxu0
  %v989 = vadd.f32 %v766, %v988
  %v990 = vpop.f32.mrb[0].mxu0
  %991 = vmatprep.mubr.bf16.mxu0 0
  %992 = vmatmul.mubr.bf16.gmra.mrb[0].mxu0 %v409
  %v993 = vpop.f32.mrb[0].mxu0
  %v994 = vadd.f32 %v771, %v993
  %v995 = vpop.f32.mrb[0].mxu0
  %v996 = vpop.f32.mrb[0].mxu0
  %v997 = vpop.f32.mrb[0].mxu0
  %998 = vmatprep.mubr.bf16.mxu0 0
  %999 = vmatmul.mubr.bf16.gmra.mrb[0].mxu0 %v411
  %v1000 = vpop.f32.mrb[0].mxu0
  %v1001 = vadd.f32 %v778, %v1000
  %v1002 = vpop.f32.mrb[0].mxu0
  %v1003 = vpop.f32.mrb[0].mxu0
  %v1004 = vadd.f32 %v781, %v1003
  %v1005 = vpop.f32.mrb[0].mxu0
  %1006 = vmatprep.mubr.bf16.mxu0 0
  %1007 = vmatmul.mubr.bf16.gmra.mrb[0].mxu0 %v412
  %v1008 = vpop.f32.mrb[0].mxu0
  %v1009 = vadd.f32 %v786, %v1008
  %v1010 = vpop.f32.mrb[0].mxu0
  %v1011 = vpop.f32.mrb[0].mxu0
  %v1012 = vadd.f32 %v789, %v1011
  %v1013 = vpop.f32.mrb[0].mxu0
  %1014 = vmatprep.mubr.bf16.mxu0 0
  %1015 = vmatmul.mubr.bf16.gmra.mrb[0].mxu0 %v413
  %v1016 = vpop.f32.mrb[0].mxu0
  %v1017 = vadd.f32 %v794, %v1016
  %v1018 = vpop.f32.mrb[0].mxu0
  %v1019 = vpop.f32.mrb[0].mxu0
  %v1020 = vadd.f32 %v797, %v1019
  %v1021 = vpop.f32.mrb[0].mxu0
  %1022 = vmatprep.mubr.bf16.mxu0 0
  %1023 = vmatmul.mubr.bf16.gmra.mrb[0].mxu0 %v414
  %v1024 = vpop.f32.mrb[0].mxu0
  %v1025 = vadd.f32 %v802, %v1024
  %v1026 = vpop.f32.mrb[0].mxu0
  %v1027 = vpop.f32.mrb[0].mxu0
  %v1028 = vadd.f32 %v805, %v1027
  %v1029 = vpop.f32.mrb[0].mxu0
  %1030 = vmatprep.mubr.bf16.mxu0 0
  %1031 = vmatmul.mubr.bf16.gmra.mrb[0].mxu0 %v415
  %v1032 = vpop.f32.mrb[0].mxu0
  %v1033 = vadd.f32 %v810, %v1032
  %v1034 = vpop.f32.mrb[0].mxu0
  %v1035 = vpop.f32.mrb[0].mxu0
  %v1036 = vadd.f32 %v813, %v1035
  %v1037 = vpop.f32.mrb[0].mxu0
  %1038 = vmatprep.mubr.bf16.mxu0 0
  %1039 = vmatmul.mubr.bf16.gmra.mrb[0].mxu0 %v416
  %v1040 = vpop.f32.mrb[0].mxu0
  %v1041 = vadd.f32 %v818, %v1040
  %v1042 = vpop.f32.mrb[0].mxu0
  %v1043 = vpop.f32.mrb[0].mxu0
  %v1044 = vadd.f32 %v821, %v1043
  %v1045 = vpop.f32.mrb[0].mxu0
  %1046 = vmatprep.mubr.bf16.mxu0 0
  %1047 = vmatmul.mubr.bf16.gmra.mrb[0].mxu0 %v417
  %v1048 = vpop.f32.mrb[0].mxu0
  %v1049 = vadd.f32 %v826, %v1048
  %v1050 = vpop.f32.mrb[0].mxu0
  %v1051 = vpop.f32.mrb[0].mxu0
  %v1052 = vadd.f32 %v829, %v1051
  %v1053 = vpop.f32.mrb[0].mxu0
  %1054 = vmatprep.mubr.bf16.mxu0 0
  %1055 = vmatmul.mubr.bf16.gmra.mrb[0].mxu0 %v418
  %v1056 = vpop.f32.mrb[0].mxu0
  %v1057 = vadd.f32 %v834, %v1056
  %v1058 = vpop.f32.mrb[0].mxu0
  %v1059 = vpop.f32.mrb[0].mxu0
  %v1060 = vadd.f32 %v837, %v1059
  %v1061 = vpop.f32.mrb[0].mxu0
  %1062 = vmatprep.mubr.bf16.mxu0 0
  %1063 = vmatmul.mubr.bf16.gmra.mrb[0].mxu0 %v419
  %v1064 = vpop.f32.mrb[0].mxu0
  %v1065 = vadd.f32 %v842, %v1064
  %v1066 = vpop.f32.mrb[0].mxu0
  %v1067 = vpop.f32.mrb[0].mxu0
  %v1068 = vpop.f32.mrb[0].mxu0
  %1069 = vdwg.mxu0
  %vm1090 = vcmask 1046528
  %v1091 = vrot.slane %v401, 1
  %v1092 = vrot.slane %v402, 1
  %v1093 = vsel %vm1090, %v1091, %v1092
  %v1094 = vrot.slane %v403, 1
  %v1095 = vsel %vm1090, %v1092, %v1094
  %v1096 = vrot.slane %v404, 1
  %v1097 = vsel %vm1090, %v1094, %v1096
  %v1098 = vrot.slane %v405, 1
  %v1099 = vsel %vm1090, %v1096, %v1098
  %v1100 = vrot.slane %v406, 1
  %v1101 = vsel %vm1090, %v1098, %v1100
  %v1102 = vrot.slane %v407, 1
  %v1103 = vsel %vm1090, %v1100, %v1102
  %v1104 = vrot.slane %v408, 1
  %v1105 = vsel %vm1090, %v1102, %v1104
  %v1106 = vrot.slane %v409, 1
  %v1107 = vsel %vm1090, %v1104, %v1106
  %v1108 = vrot.slane %v410, 1
  %v1109 = vsel %vm1090, %v1106, %v1108
  %v1110 = vrot.slane %v411, 1
  %v1111 = vrot.slane %v412, 1
  %v1112 = vsel %vm1090, %v1110, %v1111
  %v1113 = vrot.slane %v413, 1
  %v1114 = vsel %vm1090, %v1111, %v1113
  %v1115 = vrot.slane %v414, 1
  %v1116 = vsel %vm1090, %v1113, %v1115
  %v1117 = vrot.slane %v415, 1
  %v1118 = vsel %vm1090, %v1115, %v1117
  %v1119 = vrot.slane %v416, 1
  %v1120 = vsel %vm1090, %v1117, %v1119
  %v1121 = vrot.slane %v417, 1
  %v1122 = vsel %vm1090, %v1119, %v1121
  %v1123 = vrot.slane %v418, 1
  %v1124 = vsel %vm1090, %v1121, %v1123
  %v1125 = vrot.slane %v419, 1
  %v1126 = vsel %vm1090, %v1123, %v1125
  %v1127 = vrot.slane %v420, 1
  %v1128 = vsel %vm1090, %v1125, %v1127
  %v1147 = vld [vmem:[%s1 + $0x80] sm:$0xf]
  %v1148 = vld [vmem:[%s1 + $0x84] sm:$0xf]
  %v1149 = vld [vmem:[%s1 + $0x88] sm:$0xf]
  %v1150 = vld [vmem:[%s1 + $0x8c] sm:$0xf]
  %v1151 = vld [vmem:[%s1 + $0x90] sm:$0xf]
  %v1152 = vld [vmem:[%s1 + $0x94] sm:$0xf]
  %v1153 = vld [vmem:[%s1 + $0x98] sm:$0xf]
  %v1154 = vld [vmem:[%s1 + $0x9c] sm:$0xf]
  %v1155 = vld [vmem:[%s1 + $0xa0] sm:$0xf]
  %v1156 = vld [vmem:[%s1 + $0xa4] sm:$0xf]
  %v1157 = vld [vmem:[%s1 + $0xa8] sm:$0xf]
  %v1158 = vld [vmem:[%s1 + $0xac] sm:$0xf]
  %v1159 = vld [vmem:[%s1 + $0xb0] sm:$0xf]
  %v1160 = vld [vmem:[%s1 + $0xb4] sm:$0xf]
  %v1161 = vld [vmem:[%s1 + $0xb8] sm:$0xf]
  %v1162 = vld [vmem:[%s1 + $0xbc] sm:$0xf]
  %v1179 = vunpack.c.l.b16 %v1147
  %v1180 = vunpack.c.l.b16 %v1148
  %v1181 = vunpack.c.l.b16 %v1149
  %v1182 = vunpack.c.l.b16 %v1150
  %v1183 = vunpack.c.l.b16 %v1151
  %v1184 = vunpack.c.l.b16 %v1152
  %v1185 = vunpack.c.l.b16 %v1153
  %v1186 = vunpack.c.l.b16 %v1154
  %v1187 = vunpack.c.l.b16 %v1155
  %v1188 = vunpack.c.l.b16 %v1156
  %v1189 = vunpack.c.l.b16 %v1157
  %v1190 = vunpack.c.l.b16 %v1158
  %v1191 = vunpack.c.l.b16 %v1159
  %v1192 = vunpack.c.l.b16 %v1160
  %v1193 = vunpack.c.l.b16 %v1161
  %v1194 = vunpack.c.l.b16 %v1162
  %v1195 = vpack.c.b16 %v1180, %v1179
  %v1196 = vpack.c.b16 %v1182, %v1181
  %v1197 = vpack.c.b16 %v1184, %v1183
  %v1198 = vpack.c.b16 %v1186, %v1185
  %v1199 = vpack.c.b16 %v1188, %v1187
  %v1200 = vpack.c.b16 %v1190, %v1189
  %v1201 = vpack.c.b16 %v1192, %v1191
  %v1202 = vpack.c.b16 %v1194, %v1193
  %1211 = vmatprep.subr.bf16.mxu0 0
  %1212 = vmatpush1.bf16.msra.mxu0 %v1195
  %1213 = vmatprep.subr.bf16.mxu0 0
  %1214 = vmatpush1.bf16.msra.mxu0 %v1196
  %1215 = vmatprep.subr.bf16.mxu0 0
  %1216 = vmatpush1.bf16.msra.mxu0 %v1197
  %1217 = vmatprep.subr.bf16.mxu0 0
  %1218 = vmatpush1.bf16.msra.mxu0 %v1198
  %1219 = vmatprep.subr.bf16.mxu0 0
  %1220 = vmatpush1.bf16.msra.mxu0 %v1199
  %1221 = vmatprep.subr.bf16.mxu0 0
  %1222 = vmatpush1.bf16.msra.mxu0 %v1200
  %1223 = vmatprep.subr.bf16.mxu0 0
  %1224 = vmatpush1.bf16.msra.mxu0 %v1201
  %1225 = vmatprep.subr.bf16.mxu0 0
  %1226 = vmatpush1.bf16.msra.mxu0 %v1202
  %1227 = vmatprep.subr.bf16.mxu0 0
  %1228 = vmatpush1.bf16.msra.mxu0 0
  %1229 = vmatprep.subr.bf16.mxu0 0
  %1230 = vmatpush1.bf16.msra.mxu0 0
  %1231 = vmatprep.subr.bf16.mxu0 0
  %1232 = vmatpush1.bf16.msra.mxu0 0
  %1233 = vmatprep.subr.bf16.mxu0 0
  %1234 = vmatpush1.bf16.msra.mxu0 0
  %1235 = vmatprep.subr.bf16.mxu0 0
  %1236 = vmatpush1.bf16.msra.mxu0 0
  %1237 = vmatprep.subr.bf16.mxu0 0
  %1238 = vmatpush1.bf16.msra.mxu0 0
  %1239 = vmatprep.subr.bf16.mxu0 0
  %1240 = vmatpush1.bf16.msra.mxu0 0
  %1241 = vmatprep.subr.bf16.mxu0 0
  %1242 = vmatpush1.bf16.msra.mxu0 0
  %1243 = vmatprep.mubr.bf16.mxu0 0
  %1244 = vmatmul.mubr.bf16.gmra.mrb[0].mxu0 %v1093
  %v1245 = vpop.f32.mrb[0].mxu0
  %v1246 = vadd.f32 0.0, %v1245
  %v1247 = vpop.f32.mrb[0].mxu0
  %v1248 = vpop.f32.mrb[0].mxu0
  %v1249 = vadd.f32 0.0, %v1248
  %v1250 = vpop.f32.mrb[0].mxu0
  %1251 = vmatprep.mubr.bf16.mxu0 0
  %1252 = vmatmul.mubr.bf16.gmra.mrb[0].mxu0 %v1095
  %v1253 = vpop.f32.mrb[0].mxu0
  %v1254 = vadd.f32 0.0, %v1253
  %v1255 = vpop.f32.mrb[0].mxu0
  %v1256 = vpop.f32.mrb[0].mxu0
  %v1257 = vadd.f32 0.0, %v1256
  %v1258 = vpop.f32.mrb[0].mxu0
  %1259 = vmatprep.mubr.bf16.mxu0 0
  %1260 = vmatmul.mubr.bf16.gmra.mrb[0].mxu0 %v1097
  %v1261 = vpop.f32.mrb[0].mxu0
  %v1262 = vadd.f32 0.0, %v1261
  %v1263 = vpop.f32.mrb[0].mxu0
  %v1264 = vpop.f32.mrb[0].mxu0
  %v1265 = vadd.f32 0.0, %v1264
  %v1266 = vpop.f32.mrb[0].mxu0
  %1267 = vmatprep.mubr.bf16.mxu0 0
  %1268 = vmatmul.mubr.bf16.gmra.mrb[0].mxu0 %v1099
  %v1269 = vpop.f32.mrb[0].mxu0
  %v1270 = vadd.f32 0.0, %v1269
  %v1271 = vpop.f32.mrb[0].mxu0
  %v1272 = vpop.f32.mrb[0].mxu0
  %v1273 = vadd.f32 0.0, %v1272
  %v1274 = vpop.f32.mrb[0].mxu0
  %1275 = vmatprep.mubr.bf16.mxu0 0
  %1276 = vmatmul.mubr.bf16.gmra.mrb[0].mxu0 %v1101
  %v1277 = vpop.f32.mrb[0].mxu0
  %v1278 = vadd.f32 0.0, %v1277
  %v1279 = vpop.f32.mrb[0].mxu0
  %v1280 = vpop.f32.mrb[0].mxu0
  %v1281 = vadd.f32 0.0, %v1280
  %v1282 = vpop.f32.mrb[0].mxu0
  %1283 = vmatprep.mubr.bf16.mxu0 0
  %1284 = vmatmul.mubr.bf16.gmra.mrb[0].mxu0 %v1103
  %v1285 = vpop.f32.mrb[0].mxu0
  %v1286 = vadd.f32 0.0, %v1285
  %v1287 = vpop.f32.mrb[0].mxu0
  %v1288 = vpop.f32.mrb[0].mxu0
  %v1289 = vadd.f32 0.0, %v1288
  %v1290 = vpop.f32.mrb[0].mxu0
  %1291 = vmatprep.mubr.bf16.mxu0 0
  %1292 = vmatmul.mubr.bf16.gmra.mrb[0].mxu0 %v1105
  %v1293 = vpop.f32.mrb[0].mxu0
  %v1294 = vadd.f32 0.0, %v1293
  %v1295 = vpop.f32.mrb[0].mxu0
  %v1296 = vpop.f32.mrb[0].mxu0
  %v1297 = vadd.f32 0.0, %v1296
  %v1298 = vpop.f32.mrb[0].mxu0
  %1299 = vmatprep.mubr.bf16.mxu0 0
  %1300 = vmatmul.mubr.bf16.gmra.mrb[0].mxu0 %v1107
  %v1301 = vpop.f32.mrb[0].mxu0
  %v1302 = vadd.f32 0.0, %v1301
  %v1303 = vpop.f32.mrb[0].mxu0
  %v1304 = vpop.f32.mrb[0].mxu0
  %v1305 = vadd.f32 0.0, %v1304
  %v1306 = vpop.f32.mrb[0].mxu0
  %1307 = vmatprep.mubr.bf16.mxu0 0
  %1308 = vmatmul.mubr.bf16.gmra.mrb[0].mxu0 %v1109
  %v1309 = vpop.f32.mrb[0].mxu0
  %v1310 = vadd.f32 0.0, %v1309
  %v1311 = vpop.f32.mrb[0].mxu0
  %v1312 = vpop.f32.mrb[0].mxu0
  %v1313 = vpop.f32.mrb[0].mxu0
  %1314 = vmatprep.mubr.bf16.mxu0 0
  %1315 = vmatmul.mubr.bf16.gmra.mrb[0].mxu0 %v1112
  %v1316 = vpop.f32.mrb[0].mxu0
  %v1317 = vadd.f32 0.0, %v1316
  %v1318 = vpop.f32.mrb[0].mxu0
  %v1319 = vpop.f32.mrb[0].mxu0
  %v1320 = vadd.f32 0.0, %v1319
  %v1321 = vpop.f32.mrb[0].mxu0
  %1322 = vmatprep.mubr.bf16.mxu0 0
  %1323 = vmatmul.mubr.bf16.gmra.mrb[0].mxu0 %v1114
  %v1324 = vpop.f32.mrb[0].mxu0
  %v1325 = vadd.f32 0.0, %v1324
  %v1326 = vpop.f32.mrb[0].mxu0
  %v1327 = vpop.f32.mrb[0].mxu0
  %v1328 = vadd.f32 0.0, %v1327
  %v1329 = vpop.f32.mrb[0].mxu0
  %1330 = vmatprep.mubr.bf16.mxu0 0
  %1331 = vmatmul.mubr.bf16.gmra.mrb[0].mxu0 %v1116
  %v1332 = vpop.f32.mrb[0].mxu0
  %v1333 = vadd.f32 0.0, %v1332
  %v1334 = vpop.f32.mrb[0].mxu0
  %v1335 = vpop.f32.mrb[0].mxu0
  %v1336 = vadd.f32 0.0, %v1335
  %v1337 = vpop.f32.mrb[0].mxu0
  %1338 = vmatprep.mubr.bf16.mxu0 0
  %1339 = vmatmul.mubr.bf16.gmra.mrb[0].mxu0 %v1118
  %v1340 = vpop.f32.mrb[0].mxu0
  %v1341 = vadd.f32 0.0, %v1340
  %v1342 = vpop.f32.mrb[0].mxu0
  %v1343 = vpop.f32.mrb[0].mxu0
  %v1344 = vadd.f32 0.0, %v1343
  %v1345 = vpop.f32.mrb[0].mxu0
  %1346 = vmatprep.mubr.bf16.mxu0 0
  %1347 = vmatmul.mubr.bf16.gmra.mrb[0].mxu0 %v1120
  %v1348 = vpop.f32.mrb[0].mxu0
  %v1349 = vadd.f32 0.0, %v1348
  %v1350 = vpop.f32.mrb[0].mxu0
  %v1351 = vpop.f32.mrb[0].mxu0
  %v1352 = vadd.f32 0.0, %v1351
  %v1353 = vpop.f32.mrb[0].mxu0
  %1354 = vmatprep.mubr.bf16.mxu0 0
  %1355 = vmatmul.mubr.bf16.gmra.mrb[0].mxu0 %v1122
  %v1356 = vpop.f32.mrb[0].mxu0
  %v1357 = vadd.f32 0.0, %v1356
  %v1358 = vpop.f32.mrb[0].mxu0
  %v1359 = vpop.f32.mrb[0].mxu0
  %v1360 = vadd.f32 0.0, %v1359
  %v1361 = vpop.f32.mrb[0].mxu0
  %1362 = vmatprep.mubr.bf16.mxu0 0
  %1363 = vmatmul.mubr.bf16.gmra.mrb[0].mxu0 %v1124
  %v1364 = vpop.f32.mrb[0].mxu0
  %v1365 = vadd.f32 0.0, %v1364
  %v1366 = vpop.f32.mrb[0].mxu0
  %v1367 = vpop.f32.mrb[0].mxu0
  %v1368 = vadd.f32 0.0, %v1367
  %v1369 = vpop.f32.mrb[0].mxu0
  %1370 = vmatprep.mubr.bf16.mxu0 0
  %1371 = vmatmul.mubr.bf16.gmra.mrb[0].mxu0 %v1126
  %v1372 = vpop.f32.mrb[0].mxu0
  %v1373 = vadd.f32 0.0, %v1372
  %v1374 = vpop.f32.mrb[0].mxu0
  %v1375 = vpop.f32.mrb[0].mxu0
  %v1376 = vadd.f32 0.0, %v1375
  %v1377 = vpop.f32.mrb[0].mxu0
  %1378 = vmatprep.mubr.bf16.mxu0 0
  %1379 = vmatmul.mubr.bf16.gmra.mrb[0].mxu0 %v1128
  %v1380 = vpop.f32.mrb[0].mxu0
  %v1381 = vadd.f32 0.0, %v1380
  %v1382 = vpop.f32.mrb[0].mxu0
  %v1383 = vpop.f32.mrb[0].mxu0
  %v1384 = vpop.f32.mrb[0].mxu0
  %1385 = vdwg.mxu0
  %v1386 = vadd.f32 %v930, %v1246
  %v1387 = vadd.f32 %v933, %v1249
  %v1388 = vadd.f32 %v938, %v1254
  %v1389 = vadd.f32 %v941, %v1257
  %v1390 = vadd.f32 %v946, %v1262
  %v1391 = vadd.f32 %v949, %v1265
  %v1392 = vadd.f32 %v954, %v1270
  %v1393 = vadd.f32 %v957, %v1273
  %v1394 = vadd.f32 %v962, %v1278
  %v1395 = vadd.f32 %v965, %v1281
  %v1396 = vadd.f32 %v970, %v1286
  %v1397 = vadd.f32 %v973, %v1289
  %v1398 = vadd.f32 %v978, %v1294
  %v1399 = vadd.f32 %v981, %v1297
  %v1400 = vadd.f32 %v986, %v1302
  %v1401 = vadd.f32 %v989, %v1305
  %v1402 = vadd.f32 %v994, %v1310
  %v1403 = vadd.f32 %v1001, %v1317
  %v1404 = vadd.f32 %v1004, %v1320
  %v1405 = vadd.f32 %v1009, %v1325
  %v1406 = vadd.f32 %v1012, %v1328
  %v1407 = vadd.f32 %v1017, %v1333
  %v1408 = vadd.f32 %v1020, %v1336
  %v1409 = vadd.f32 %v1025, %v1341
  %v1410 = vadd.f32 %v1028, %v1344
  %v1411 = vadd.f32 %v1033, %v1349
  %v1412 = vadd.f32 %v1036, %v1352
  %v1413 = vadd.f32 %v1041, %v1357
  %v1414 = vadd.f32 %v1044, %v1360
  %v1415 = vadd.f32 %v1049, %v1365
  %v1416 = vadd.f32 %v1052, %v1368
  %v1417 = vadd.f32 %v1057, %v1373
  %v1418 = vadd.f32 %v1060, %v1376
  %v1419 = vadd.f32 %v1065, %v1381
  %vm1420 = vsmask.f32 6400
  %v1421 = vrot.slane %v439, 1
  %v1422 = vrot.slane %v441, 2
  %v1423 = vor.u32 %v1421, %v1422
  %v1424 = vrot.slane %v450, 1
  %v1425 = vrot.slane %v446, 2
  %v1426 = vor.u32 %v1424, %v1425
  %v1427 = vsel %vm1420, %v1423, %v1426
  %v1428 = vrot.slane %v458, 1
  %v1429 = vrot.slane %v454, 2
  %v1430 = vor.u32 %v1428, %v1429
  %v1431 = vsel %vm1420, %v1426, %v1430
  %v1432 = vrot.slane %v466, 1
  %v1433 = vrot.slane %v462, 2
  %v1434 = vor.u32 %v1432, %v1433
  %v1435 = vsel %vm1420, %v1430, %v1434
  %v1436 = vrot.slane %v474, 1
  %v1437 = vrot.slane %v470, 2
  %v1438 = vor.u32 %v1436, %v1437
  %v1439 = vsel %vm1420, %v1434, %v1438
  %v1440 = vrot.slane %v482, 1
  %v1441 = vrot.slane %v478, 2
  %v1442 = vor.u32 %v1440, %v1441
  %v1443 = vsel %vm1420, %v1438, %v1442
  %v1444 = vrot.slane %v490, 1
  %v1445 = vrot.slane %v486, 2
  %v1446 = vor.u32 %v1444, %v1445
  %v1447 = vsel %vm1420, %v1442, %v1446
  %v1448 = vrot.slane %v498, 1
  %v1449 = vrot.slane %v494, 2
  %v1450 = vor.u32 %v1448, %v1449
  %v1451 = vsel %vm1420, %v1446, %v1450
  %v1452 = vrot.slane %v506, 1
  %v1453 = vrot.slane %v502, 2
  %v1454 = vor.u32 %v1452, %v1453
  %v1455 = vsel %vm1420, %v1450, %v1454
  %v1456 = vshrl.u32 %v410, 16
  %v1458 = vrot.slane %v1456, 1
  %v1459 = vrot.slane %v510, 2
  %v1460 = vor.u32 %v1458, %v1459
  %v1461 = vsel %vm1420, %v1454, %v1460
  %v1462 = vrot.slane %v515, 1
  %v1463 = vrot.slane %v517, 2
  %v1464 = vor.u32 %v1462, %v1463
  %v1465 = vrot.slane %v526, 1
  %v1466 = vrot.slane %v522, 2
  %v1467 = vor.u32 %v1465, %v1466
  %v1468 = vsel %vm1420, %v1464, %v1467
  %v1469 = vrot.slane %v534, 1
  %v1470 = vrot.slane %v530, 2
  %v1471 = vor.u32 %v1469, %v1470
  %v1472 = vsel %vm1420, %v1467, %v1471
  %v1473 = vrot.slane %v542, 1
  %v1474 = vrot.slane %v538, 2
  %v1475 = vor.u32 %v1473, %v1474
  %v1476 = vsel %vm1420, %v1471, %v1475
  %v1477 = vrot.slane %v550, 1
  %v1478 = vrot.slane %v546, 2
  %v1479 = vor.u32 %v1477, %v1478
  %v1480 = vsel %vm1420, %v1475, %v1479
  %v1481 = vrot.slane %v558, 1
  %v1482 = vrot.slane %v554, 2
  %v1483 = vor.u32 %v1481, %v1482
  %v1484 = vsel %vm1420, %v1479, %v1483
  %v1485 = vrot.slane %v566, 1
  %v1486 = vrot.slane %v562, 2
  %v1487 = vor.u32 %v1485, %v1486
  %v1488 = vsel %vm1420, %v1483, %v1487
  %v1489 = vrot.slane %v574, 1
  %v1490 = vrot.slane %v570, 2
  %v1491 = vor.u32 %v1489, %v1490
  %v1492 = vsel %vm1420, %v1487, %v1491
  %v1493 = vrot.slane %v582, 1
  %v1494 = vrot.slane %v578, 2
  %v1495 = vor.u32 %v1493, %v1494
  %v1496 = vsel %vm1420, %v1491, %v1495
  %v1497 = vshrl.u32 %v420, 16
  %v1499 = vrot.slane %v1497, 1
  %v1500 = vrot.slane %v586, 2
  %v1501 = vor.u32 %v1499, %v1500
  %v1502 = vsel %vm1420, %v1495, %v1501
  %v1521 = vld [vmem:[%s1 + $0xc0] sm:$0xf]
  %v1522 = vld [vmem:[%s1 + $0xc4] sm:$0xf]
  %v1523 = vld [vmem:[%s1 + $0xc8] sm:$0xf]
  %v1524 = vld [vmem:[%s1 + $0xcc] sm:$0xf]
  %v1525 = vld [vmem:[%s1 + $0xd0] sm:$0xf]
  %v1526 = vld [vmem:[%s1 + $0xd4] sm:$0xf]
  %v1527 = vld [vmem:[%s1 + $0xd8] sm:$0xf]
  %v1528 = vld [vmem:[%s1 + $0xdc] sm:$0xf]
  %v1529 = vld [vmem:[%s1 + $0xe0] sm:$0xf]
  %v1530 = vld [vmem:[%s1 + $0xe4] sm:$0xf]
  %v1531 = vld [vmem:[%s1 + $0xe8] sm:$0xf]
  %v1532 = vld [vmem:[%s1 + $0xec] sm:$0xf]
  %v1533 = vld [vmem:[%s1 + $0xf0] sm:$0xf]
  %v1534 = vld [vmem:[%s1 + $0xf4] sm:$0xf]
  %v1535 = vld [vmem:[%s1 + $0xf8] sm:$0xf]
  %v1536 = vld [vmem:[%s1 + $0xfc] sm:$0xf]
  %v1553 = vunpack.c.l.b16 %v1521
  %v1554 = vunpack.c.l.b16 %v1522
  %v1555 = vunpack.c.l.b16 %v1523
  %v1556 = vunpack.c.l.b16 %v1524
  %v1557 = vunpack.c.l.b16 %v1525
  %v1558 = vunpack.c.l.b16 %v1526
  %v1559 = vunpack.c.l.b16 %v1527
  %v1560 = vunpack.c.l.b16 %v1528
  %v1561 = vunpack.c.l.b16 %v1529
  %v1562 = vunpack.c.l.b16 %v1530
  %v1563 = vunpack.c.l.b16 %v1531
  %v1564 = vunpack.c.l.b16 %v1532
  %v1565 = vunpack.c.l.b16 %v1533
  %v1566 = vunpack.c.l.b16 %v1534
  %v1567 = vunpack.c.l.b16 %v1535
  %v1568 = vunpack.c.l.b16 %v1536
  %v1569 = vpack.c.b16 %v1554, %v1553
  %v1570 = vpack.c.b16 %v1556, %v1555
  %v1571 = vpack.c.b16 %v1558, %v1557
  %v1572 = vpack.c.b16 %v1560, %v1559
  %v1573 = vpack.c.b16 %v1562, %v1561
  %v1574 = vpack.c.b16 %v1564, %v1563
  %v1575 = vpack.c.b16 %v1566, %v1565
  %v1576 = vpack.c.b16 %v1568, %v1567
  %1585 = vmatprep.subr.bf16.mxu0 0
  %1586 = vmatpush1.bf16.msra.mxu0 %v1569
  %1587 = vmatprep.subr.bf16.mxu0 0
  %1588 = vmatpush1.bf16.msra.mxu0 %v1570
  %1589 = vmatprep.subr.bf16.mxu0 0
  %1590 = vmatpush1.bf16.msra.mxu0 %v1571
  %1591 = vmatprep.subr.bf16.mxu0 0
  %1592 = vmatpush1.bf16.msra.mxu0 %v1572
  %1593 = vmatprep.subr.bf16.mxu0 0
  %1594 = vmatpush1.bf16.msra.mxu0 %v1573
  %1595 = vmatprep.subr.bf16.mxu0 0
  %1596 = vmatpush1.bf16.msra.mxu0 %v1574
  %1597 = vmatprep.subr.bf16.mxu0 0
  %1598 = vmatpush1.bf16.msra.mxu0 %v1575
  %1599 = vmatprep.subr.bf16.mxu0 0
  %1600 = vmatpush1.bf16.msra.mxu0 %v1576
  %1601 = vmatprep.subr.bf16.mxu0 0
  %1602 = vmatpush1.bf16.msra.mxu0 0
  %1603 = vmatprep.subr.bf16.mxu0 0
  %1604 = vmatpush1.bf16.msra.mxu0 0
  %1605 = vmatprep.subr.bf16.mxu0 0
  %1606 = vmatpush1.bf16.msra.mxu0 0
  %1607 = vmatprep.subr.bf16.mxu0 0
  %1608 = vmatpush1.bf16.msra.mxu0 0
  %1609 = vmatprep.subr.bf16.mxu0 0
  %1610 = vmatpush1.bf16.msra.mxu0 0
  %1611 = vmatprep.subr.bf16.mxu0 0
  %1612 = vmatpush1.bf16.msra.mxu0 0
  %1613 = vmatprep.subr.bf16.mxu0 0
  %1614 = vmatpush1.bf16.msra.mxu0 0
  %1615 = vmatprep.subr.bf16.mxu0 0
  %1616 = vmatpush1.bf16.msra.mxu0 0
  %1617 = vmatprep.mubr.bf16.mxu0 0
  %1618 = vmatmul.mubr.bf16.gmra.mrb[0].mxu0 %v1427
  %v1619 = vpop.f32.mrb[0].mxu0
  %v1620 = vadd.f32 0.0, %v1619
  %v1621 = vpop.f32.mrb[0].mxu0
  %v1622 = vpop.f32.mrb[0].mxu0
  %v1623 = vadd.f32 0.0, %v1622
  %v1624 = vpop.f32.mrb[0].mxu0
  %1625 = vmatprep.mubr.bf16.mxu0 0
  %1626 = vmatmul.mubr.bf16.gmra.mrb[0].mxu0 %v1431
  %v1627 = vpop.f32.mrb[0].mxu0
  %v1628 = vadd.f32 0.0, %v1627
  %v1629 = vpop.f32.mrb[0].mxu0
  %v1630 = vpop.f32.mrb[0].mxu0
  %v1631 = vadd.f32 0.0, %v1630
  %v1632 = vpop.f32.mrb[0].mxu0
  %1633 = vmatprep.mubr.bf16.mxu0 0
  %1634 = vmatmul.mubr.bf16.gmra.mrb[0].mxu0 %v1435
  %v1635 = vpop.f32.mrb[0].mxu0
  %v1636 = vadd.f32 0.0, %v1635
  %v1637 = vpop.f32.mrb[0].mxu0
  %v1638 = vpop.f32.mrb[0].mxu0
  %v1639 = vadd.f32 0.0, %v1638
  %v1640 = vpop.f32.mrb[0].mxu0
  %1641 = vmatprep.mubr.bf16.mxu0 0
  %1642 = vmatmul.mubr.bf16.gmra.mrb[0].mxu0 %v1439
  %v1643 = vpop.f32.mrb[0].mxu0
  %v1644 = vadd.f32 0.0, %v1643
  %v1645 = vpop.f32.mrb[0].mxu0
  %v1646 = vpop.f32.mrb[0].mxu0
  %v1647 = vadd.f32 0.0, %v1646
  %v1648 = vpop.f32.mrb[0].mxu0
  %1649 = vmatprep.mubr.bf16.mxu0 0
  %1650 = vmatmul.mubr.bf16.gmra.mrb[0].mxu0 %v1443
  %v1651 = vpop.f32.mrb[0].mxu0
  %v1652 = vadd.f32 0.0, %v1651
  %v1653 = vpop.f32.mrb[0].mxu0
  %v1654 = vpop.f32.mrb[0].mxu0
  %v1655 = vadd.f32 0.0, %v1654
  %v1656 = vpop.f32.mrb[0].mxu0
  %1657 = vmatprep.mubr.bf16.mxu0 0
  %1658 = vmatmul.mubr.bf16.gmra.mrb[0].mxu0 %v1447
  %v1659 = vpop.f32.mrb[0].mxu0
  %v1660 = vadd.f32 0.0, %v1659
  %v1661 = vpop.f32.mrb[0].mxu0
  %v1662 = vpop.f32.mrb[0].mxu0
  %v1663 = vadd.f32 0.0, %v1662
  %v1664 = vpop.f32.mrb[0].mxu0
  %1665 = vmatprep.mubr.bf16.mxu0 0
  %1666 = vmatmul.mubr.bf16.gmra.mrb[0].mxu0 %v1451
  %v1667 = vpop.f32.mrb[0].mxu0
  %v1668 = vadd.f32 0.0, %v1667
  %v1669 = vpop.f32.mrb[0].mxu0
  %v1670 = vpop.f32.mrb[0].mxu0
  %v1671 = vadd.f32 0.0, %v1670
  %v1672 = vpop.f32.mrb[0].mxu0
  %1673 = vmatprep.mubr.bf16.mxu0 0
  %1674 = vmatmul.mubr.bf16.gmra.mrb[0].mxu0 %v1455
  %v1675 = vpop.f32.mrb[0].mxu0
  %v1676 = vadd.f32 0.0, %v1675
  %v1677 = vpop.f32.mrb[0].mxu0
  %v1678 = vpop.f32.mrb[0].mxu0
  %v1679 = vadd.f32 0.0, %v1678
  %v1680 = vpop.f32.mrb[0].mxu0
  %1681 = vmatprep.mubr.bf16.mxu0 0
  %1682 = vmatmul.mubr.bf16.gmra.mrb[0].mxu0 %v1461
  %v1683 = vpop.f32.mrb[0].mxu0
  %v1684 = vadd.f32 0.0, %v1683
  %v1685 = vpop.f32.mrb[0].mxu0
  %v1686 = vpop.f32.mrb[0].mxu0
  %v1687 = vpop.f32.mrb[0].mxu0
  %1688 = vmatprep.mubr.bf16.mxu0 0
  %1689 = vmatmul.mubr.bf16.gmra.mrb[0].mxu0 %v1468
  %v1690 = vpop.f32.mrb[0].mxu0
  %v1691 = vadd.f32 0.0, %v1690
  %v1692 = vpop.f32.mrb[0].mxu0
  %v1693 = vpop.f32.mrb[0].mxu0
  %v1694 = vadd.f32 0.0, %v1693
  %v1695 = vpop.f32.mrb[0].mxu0
  %1696 = vmatprep.mubr.bf16.mxu0 0
  %1697 = vmatmul.mubr.bf16.gmra.mrb[0].mxu0 %v1472
  %v1698 = vpop.f32.mrb[0].mxu0
  %v1699 = vadd.f32 0.0, %v1698
  %v1700 = vpop.f32.mrb[0].mxu0
  %v1701 = vpop.f32.mrb[0].mxu0
  %v1702 = vadd.f32 0.0, %v1701
  %v1703 = vpop.f32.mrb[0].mxu0
  %1704 = vmatprep.mubr.bf16.mxu0 0
  %1705 = vmatmul.mubr.bf16.gmra.mrb[0].mxu0 %v1476
  %v1706 = vpop.f32.mrb[0].mxu0
  %v1707 = vadd.f32 0.0, %v1706
  %v1708 = vpop.f32.mrb[0].mxu0
  %v1709 = vpop.f32.mrb[0].mxu0
  %v1710 = vadd.f32 0.0, %v1709
  %v1711 = vpop.f32.mrb[0].mxu0
  %1712 = vmatprep.mubr.bf16.mxu0 0
  %1713 = vmatmul.mubr.bf16.gmra.mrb[0].mxu0 %v1480
  %v1714 = vpop.f32.mrb[0].mxu0
  %v1715 = vadd.f32 0.0, %v1714
  %v1716 = vpop.f32.mrb[0].mxu0
  %v1717 = vpop.f32.mrb[0].mxu0
  %v1718 = vadd.f32 0.0, %v1717
  %v1719 = vpop.f32.mrb[0].mxu0
  %1720 = vmatprep.mubr.bf16.mxu0 0
  %1721 = vmatmul.mubr.bf16.gmra.mrb[0].mxu0 %v1484
  %v1722 = vpop.f32.mrb[0].mxu0
  %v1723 = vadd.f32 0.0, %v1722
  %v1724 = vpop.f32.mrb[0].mxu0
  %v1725 = vpop.f32.mrb[0].mxu0
  %v1726 = vadd.f32 0.0, %v1725
  %v1727 = vpop.f32.mrb[0].mxu0
  %1728 = vmatprep.mubr.bf16.mxu0 0
  %1729 = vmatmul.mubr.bf16.gmra.mrb[0].mxu0 %v1488
  %v1730 = vpop.f32.mrb[0].mxu0
  %v1731 = vadd.f32 0.0, %v1730
  %v1732 = vpop.f32.mrb[0].mxu0
  %v1733 = vpop.f32.mrb[0].mxu0
  %v1734 = vadd.f32 0.0, %v1733
  %v1735 = vpop.f32.mrb[0].mxu0
  %1736 = vmatprep.mubr.bf16.mxu0 0
  %1737 = vmatmul.mubr.bf16.gmra.mrb[0].mxu0 %v1492
  %v1738 = vpop.f32.mrb[0].mxu0
  %v1739 = vadd.f32 0.0, %v1738
  %v1740 = vpop.f32.mrb[0].mxu0
  %v1741 = vpop.f32.mrb[0].mxu0
  %v1742 = vadd.f32 0.0, %v1741
  %v1743 = vpop.f32.mrb[0].mxu0
  %1744 = vmatprep.mubr.bf16.mxu0 0
  %1745 = vmatmul.mubr.bf16.gmra.mrb[0].mxu0 %v1496
  %v1746 = vpop.f32.mrb[0].mxu0
  %v1747 = vadd.f32 0.0, %v1746
  %v1748 = vpop.f32.mrb[0].mxu0
  %v1749 = vpop.f32.mrb[0].mxu0
  %v1750 = vadd.f32 0.0, %v1749
  %v1751 = vpop.f32.mrb[0].mxu0
  %1752 = vmatprep.mubr.bf16.mxu0 0
  %1753 = vmatmul.mubr.bf16.gmra.mrb[0].mxu0 %v1502
  %v1754 = vpop.f32.mrb[0].mxu0
  %v1755 = vadd.f32 0.0, %v1754
  %v1756 = vpop.f32.mrb[0].mxu0
  %v1757 = vpop.f32.mrb[0].mxu0
  %v1758 = vpop.f32.mrb[0].mxu0
  %1759 = vdwg.mxu0
  %v1760 = vadd.f32 %v1386, %v1620
  %v1761 = vadd.f32 %v1387, %v1623
  %v1762 = vadd.f32 %v1388, %v1628
  %v1763 = vadd.f32 %v1389, %v1631
  %v1764 = vadd.f32 %v1390, %v1636
  %v1765 = vadd.f32 %v1391, %v1639
  %v1766 = vadd.f32 %v1392, %v1644
  %v1767 = vadd.f32 %v1393, %v1647
  %v1768 = vadd.f32 %v1394, %v1652
  %v1769 = vadd.f32 %v1395, %v1655
  %v1770 = vadd.f32 %v1396, %v1660
  %v1771 = vadd.f32 %v1397, %v1663
  %v1772 = vadd.f32 %v1398, %v1668
  %v1773 = vadd.f32 %v1399, %v1671
  %v1774 = vadd.f32 %v1400, %v1676
  %v1775 = vadd.f32 %v1401, %v1679
  %v1776 = vadd.f32 %v1402, %v1684
  %v1777 = vadd.f32 %v1403, %v1691
  %v1778 = vadd.f32 %v1404, %v1694
  %v1779 = vadd.f32 %v1405, %v1699
  %v1780 = vadd.f32 %v1406, %v1702
  %v1781 = vadd.f32 %v1407, %v1707
  %v1782 = vadd.f32 %v1408, %v1710
  %v1783 = vadd.f32 %v1409, %v1715
  %v1784 = vadd.f32 %v1410, %v1718
  %v1785 = vadd.f32 %v1411, %v1723
  %v1786 = vadd.f32 %v1412, %v1726
  %v1787 = vadd.f32 %v1413, %v1731
  %v1788 = vadd.f32 %v1414, %v1734
  %v1789 = vadd.f32 %v1415, %v1739
  %v1790 = vadd.f32 %v1416, %v1742
  %v1791 = vadd.f32 %v1417, %v1747
  %v1792 = vadd.f32 %v1418, %v1750
  %v1793 = vadd.f32 %v1419, %v1755
  %v1826 = vcombine.high %v1760, %v1760
  %v1827 = vcombine.high %v1761, %v1761
  %v1828 = vcombine.high %v1762, %v1762
  %v1829 = vcombine.high %v1763, %v1763
  %v1830 = vcombine.high %v1764, %v1764
  %v1831 = vcombine.high %v1765, %v1765
  %v1832 = vcombine.high %v1766, %v1766
  %v1833 = vcombine.high %v1767, %v1767
  %v1834 = vcombine.high %v1768, %v1768
  %v1835 = vcombine.high %v1769, %v1769
  %v1836 = vcombine.high %v1770, %v1770
  %v1837 = vcombine.high %v1771, %v1771
  %v1838 = vcombine.high %v1772, %v1772
  %v1839 = vcombine.high %v1773, %v1773
  %v1840 = vcombine.high %v1774, %v1774
  %v1841 = vcombine.high %v1775, %v1775
  %v1842 = vcombine.high %v1777, %v1777
  %v1843 = vcombine.high %v1778, %v1778
  %v1844 = vcombine.high %v1779, %v1779
  %v1845 = vcombine.high %v1780, %v1780
  %v1846 = vcombine.high %v1781, %v1781
  %v1847 = vcombine.high %v1782, %v1782
  %v1848 = vcombine.high %v1783, %v1783
  %v1849 = vcombine.high %v1784, %v1784
  %v1850 = vcombine.high %v1785, %v1785
  %v1851 = vcombine.high %v1786, %v1786
  %v1852 = vcombine.high %v1787, %v1787
  %v1853 = vcombine.high %v1788, %v1788
  %v1854 = vcombine.high %v1789, %v1789
  %v1855 = vcombine.high %v1790, %v1790
  %v1856 = vcombine.high %v1791, %v1791
  %v1857 = vcombine.high %v1792, %v1792
  %vm1890 = vcmask 257024
  %v1891 = vsel %vm1890, %v1760, -inf
  %v1892 = vrot.slane %v1891, 4
  %v1893 = vmax.f32 %v1891, %v1892
  %v1894 = vrot.slane %v1893, 2
  %v1895 = vmax.f32 %v1893, %v1894
  %v1896 = vrot.slane %v1895, 1
  %v1897 = vmax.f32 %v1895, %v1896
  %v1898 = vsel %vm1890, %v1826, -inf
  %v1899 = vrot.slane %v1898, 4
  %v1900 = vmax.f32 %v1898, %v1899
  %v1901 = vrot.slane %v1900, 2
  %v1902 = vmax.f32 %v1900, %v1901
  %v1903 = vrot.slane %v1902, 1
  %v1904 = vmax.f32 %v1902, %v1903
  %v1905 = vsel %vm1890, %v1761, -inf
  %v1906 = vrot.slane %v1905, 4
  %v1907 = vmax.f32 %v1905, %v1906
  %v1908 = vrot.slane %v1907, 2
  %v1909 = vmax.f32 %v1907, %v1908
  %v1910 = vrot.slane %v1909, 1
  %v1911 = vmax.f32 %v1909, %v1910
  %v1912 = vsel %vm1890, %v1827, -inf
  %v1913 = vrot.slane %v1912, 4
  %v1914 = vmax.f32 %v1912, %v1913
  %v1915 = vrot.slane %v1914, 2
  %v1916 = vmax.f32 %v1914, %v1915
  %v1917 = vrot.slane %v1916, 1
  %v1918 = vmax.f32 %v1916, %v1917
  %v1919 = vsel %vm1890, %v1762, -inf
  %v1920 = vrot.slane %v1919, 4
  %v1921 = vmax.f32 %v1919, %v1920
  %v1922 = vrot.slane %v1921, 2
  %v1923 = vmax.f32 %v1921, %v1922
  %v1924 = vrot.slane %v1923, 1
  %v1925 = vmax.f32 %v1923, %v1924
  %v1926 = vsel %vm1890, %v1828, -inf
  %v1927 = vrot.slane %v1926, 4
  %v1928 = vmax.f32 %v1926, %v1927
  %v1929 = vrot.slane %v1928, 2
  %v1930 = vmax.f32 %v1928, %v1929
  %v1931 = vrot.slane %v1930, 1
  %v1932 = vmax.f32 %v1930, %v1931
  %v1933 = vsel %vm1890, %v1763, -inf
  %v1934 = vrot.slane %v1933, 4
  %v1935 = vmax.f32 %v1933, %v1934
  %v1936 = vrot.slane %v1935, 2
  %v1937 = vmax.f32 %v1935, %v1936
  %v1938 = vrot.slane %v1937, 1
  %v1939 = vmax.f32 %v1937, %v1938
  %v1940 = vsel %vm1890, %v1829, -inf
  %v1941 = vrot.slane %v1940, 4
  %v1942 = vmax.f32 %v1940, %v1941
  %v1943 = vrot.slane %v1942, 2
  %v1944 = vmax.f32 %v1942, %v1943
  %v1945 = vrot.slane %v1944, 1
  %v1946 = vmax.f32 %v1944, %v1945
  %v1947 = vsel %vm1890, %v1764, -inf
  %v1948 = vrot.slane %v1947, 4
  %v1949 = vmax.f32 %v1947, %v1948
  %v1950 = vrot.slane %v1949, 2
  %v1951 = vmax.f32 %v1949, %v1950
  %v1952 = vrot.slane %v1951, 1
  %v1953 = vmax.f32 %v1951, %v1952
  %v1954 = vsel %vm1890, %v1830, -inf
  %v1955 = vrot.slane %v1954, 4
  %v1956 = vmax.f32 %v1954, %v1955
  %v1957 = vrot.slane %v1956, 2
  %v1958 = vmax.f32 %v1956, %v1957
  %v1959 = vrot.slane %v1958, 1
  %v1960 = vmax.f32 %v1958, %v1959
  %v1961 = vsel %vm1890, %v1765, -inf
  %v1962 = vrot.slane %v1961, 4
  %v1963 = vmax.f32 %v1961, %v1962
  %v1964 = vrot.slane %v1963, 2
  %v1965 = vmax.f32 %v1963, %v1964
  %v1966 = vrot.slane %v1965, 1
  %v1967 = vmax.f32 %v1965, %v1966
  %v1968 = vsel %vm1890, %v1831, -inf
  %v1969 = vrot.slane %v1968, 4
  %v1970 = vmax.f32 %v1968, %v1969
  %v1971 = vrot.slane %v1970, 2
  %v1972 = vmax.f32 %v1970, %v1971
  %v1973 = vrot.slane %v1972, 1
  %v1974 = vmax.f32 %v1972, %v1973
  %v1975 = vsel %vm1890, %v1766, -inf
  %v1976 = vrot.slane %v1975, 4
  %v1977 = vmax.f32 %v1975, %v1976
  %v1978 = vrot.slane %v1977, 2
  %v1979 = vmax.f32 %v1977, %v1978
  %v1980 = vrot.slane %v1979, 1
  %v1981 = vmax.f32 %v1979, %v1980
  %v1982 = vsel %vm1890, %v1832, -inf
  %v1983 = vrot.slane %v1982, 4
  %v1984 = vmax.f32 %v1982, %v1983
  %v1985 = vrot.slane %v1984, 2
  %v1986 = vmax.f32 %v1984, %v1985
  %v1987 = vrot.slane %v1986, 1
  %v1988 = vmax.f32 %v1986, %v1987
  %v1989 = vsel %vm1890, %v1767, -inf
  %v1990 = vrot.slane %v1989, 4
  %v1991 = vmax.f32 %v1989, %v1990
  %v1992 = vrot.slane %v1991, 2
  %v1993 = vmax.f32 %v1991, %v1992
  %v1994 = vrot.slane %v1993, 1
  %v1995 = vmax.f32 %v1993, %v1994
  %v1996 = vsel %vm1890, %v1833, -inf
  %v1997 = vrot.slane %v1996, 4
  %v1998 = vmax.f32 %v1996, %v1997
  %v1999 = vrot.slane %v1998, 2
  %v2000 = vmax.f32 %v1998, %v1999
  %v2001 = vrot.slane %v2000, 1
  %v2002 = vmax.f32 %v2000, %v2001
  %v2003 = vsel %vm1890, %v1768, -inf
  %v2004 = vrot.slane %v2003, 4
  %v2005 = vmax.f32 %v2003, %v2004
  %v2006 = vrot.slane %v2005, 2
  %v2007 = vmax.f32 %v2005, %v2006
  %v2008 = vrot.slane %v2007, 1
  %v2009 = vmax.f32 %v2007, %v2008
  %v2010 = vsel %vm1890, %v1834, -inf
  %v2011 = vrot.slane %v2010, 4
  %v2012 = vmax.f32 %v2010, %v2011
  %v2013 = vrot.slane %v2012, 2
  %v2014 = vmax.f32 %v2012, %v2013
  %v2015 = vrot.slane %v2014, 1
  %v2016 = vmax.f32 %v2014, %v2015
  %v2017 = vsel %vm1890, %v1769, -inf
  %v2018 = vrot.slane %v2017, 4
  %v2019 = vmax.f32 %v2017, %v2018
  %v2020 = vrot.slane %v2019, 2
  %v2021 = vmax.f32 %v2019, %v2020
  %v2022 = vrot.slane %v2021, 1
  %v2023 = vmax.f32 %v2021, %v2022
  %v2024 = vsel %vm1890, %v1835, -inf
  %v2025 = vrot.slane %v2024, 4
  %v2026 = vmax.f32 %v2024, %v2025
  %v2027 = vrot.slane %v2026, 2
  %v2028 = vmax.f32 %v2026, %v2027
  %v2029 = vrot.slane %v2028, 1
  %v2030 = vmax.f32 %v2028, %v2029
  %v2031 = vsel %vm1890, %v1770, -inf
  %v2032 = vrot.slane %v2031, 4
  %v2033 = vmax.f32 %v2031, %v2032
  %v2034 = vrot.slane %v2033, 2
  %v2035 = vmax.f32 %v2033, %v2034
  %v2036 = vrot.slane %v2035, 1
  %v2037 = vmax.f32 %v2035, %v2036
  %v2038 = vsel %vm1890, %v1836, -inf
  %v2039 = vrot.slane %v2038, 4
  %v2040 = vmax.f32 %v2038, %v2039
  %v2041 = vrot.slane %v2040, 2
  %v2042 = vmax.f32 %v2040, %v2041
  %v2043 = vrot.slane %v2042, 1
  %v2044 = vmax.f32 %v2042, %v2043
  %v2045 = vsel %vm1890, %v1771, -inf
  %v2046 = vrot.slane %v2045, 4
  %v2047 = vmax.f32 %v2045, %v2046
  %v2048 = vrot.slane %v2047, 2
  %v2049 = vmax.f32 %v2047, %v2048
  %v2050 = vrot.slane %v2049, 1
  %v2051 = vmax.f32 %v2049, %v2050
  %v2052 = vsel %vm1890, %v1837, -inf
  %v2053 = vrot.slane %v2052, 4
  %v2054 = vmax.f32 %v2052, %v2053
  %v2055 = vrot.slane %v2054, 2
  %v2056 = vmax.f32 %v2054, %v2055
  %v2057 = vrot.slane %v2056, 1
  %v2058 = vmax.f32 %v2056, %v2057
  %v2059 = vsel %vm1890, %v1772, -inf
  %v2060 = vrot.slane %v2059, 4
  %v2061 = vmax.f32 %v2059, %v2060
  %v2062 = vrot.slane %v2061, 2
  %v2063 = vmax.f32 %v2061, %v2062
  %v2064 = vrot.slane %v2063, 1
  %v2065 = vmax.f32 %v2063, %v2064
  %v2066 = vsel %vm1890, %v1838, -inf
  %v2067 = vrot.slane %v2066, 4
  %v2068 = vmax.f32 %v2066, %v2067
  %v2069 = vrot.slane %v2068, 2
  %v2070 = vmax.f32 %v2068, %v2069
  %v2071 = vrot.slane %v2070, 1
  %v2072 = vmax.f32 %v2070, %v2071
  %v2073 = vsel %vm1890, %v1773, -inf
  %v2074 = vrot.slane %v2073, 4
  %v2075 = vmax.f32 %v2073, %v2074
  %v2076 = vrot.slane %v2075, 2
  %v2077 = vmax.f32 %v2075, %v2076
  %v2078 = vrot.slane %v2077, 1
  %v2079 = vmax.f32 %v2077, %v2078
  %v2080 = vsel %vm1890, %v1839, -inf
  %v2081 = vrot.slane %v2080, 4
  %v2082 = vmax.f32 %v2080, %v2081
  %v2083 = vrot.slane %v2082, 2
  %v2084 = vmax.f32 %v2082, %v2083
  %v2085 = vrot.slane %v2084, 1
  %v2086 = vmax.f32 %v2084, %v2085
  %v2087 = vsel %vm1890, %v1774, -inf
  %v2088 = vrot.slane %v2087, 4
  %v2089 = vmax.f32 %v2087, %v2088
  %v2090 = vrot.slane %v2089, 2
  %v2091 = vmax.f32 %v2089, %v2090
  %v2092 = vrot.slane %v2091, 1
  %v2093 = vmax.f32 %v2091, %v2092
  %v2094 = vsel %vm1890, %v1840, -inf
  %v2095 = vrot.slane %v2094, 4
  %v2096 = vmax.f32 %v2094, %v2095
  %v2097 = vrot.slane %v2096, 2
  %v2098 = vmax.f32 %v2096, %v2097
  %v2099 = vrot.slane %v2098, 1
  %v2100 = vmax.f32 %v2098, %v2099
  %v2101 = vsel %vm1890, %v1775, -inf
  %v2102 = vrot.slane %v2101, 4
  %v2103 = vmax.f32 %v2101, %v2102
  %v2104 = vrot.slane %v2103, 2
  %v2105 = vmax.f32 %v2103, %v2104
  %v2106 = vrot.slane %v2105, 1
  %v2107 = vmax.f32 %v2105, %v2106
  %v2108 = vsel %vm1890, %v1841, -inf
  %v2109 = vrot.slane %v2108, 4
  %v2110 = vmax.f32 %v2108, %v2109
  %v2111 = vrot.slane %v2110, 2
  %v2112 = vmax.f32 %v2110, %v2111
  %v2113 = vrot.slane %v2112, 1
  %v2114 = vmax.f32 %v2112, %v2113
  %v2115 = vsel %vm1890, %v1776, -inf
  %v2116 = vrot.slane %v2115, 4
  %v2117 = vmax.f32 %v2115, %v2116
  %v2118 = vrot.slane %v2117, 2
  %v2119 = vmax.f32 %v2117, %v2118
  %v2120 = vrot.slane %v2119, 1
  %v2121 = vmax.f32 %v2119, %v2120
  %v2122 = vsel %vm1890, %v1777, -inf
  %v2123 = vrot.slane %v2122, 4
  %v2124 = vmax.f32 %v2122, %v2123
  %v2125 = vrot.slane %v2124, 2
  %v2126 = vmax.f32 %v2124, %v2125
  %v2127 = vrot.slane %v2126, 1
  %v2128 = vmax.f32 %v2126, %v2127
  %v2129 = vsel %vm1890, %v1842, -inf
  %v2130 = vrot.slane %v2129, 4
  %v2131 = vmax.f32 %v2129, %v2130
  %v2132 = vrot.slane %v2131, 2
  %v2133 = vmax.f32 %v2131, %v2132
  %v2134 = vrot.slane %v2133, 1
  %v2135 = vmax.f32 %v2133, %v2134
  %v2136 = vsel %vm1890, %v1778, -inf
  %v2137 = vrot.slane %v2136, 4
  %v2138 = vmax.f32 %v2136, %v2137
  %v2139 = vrot.slane %v2138, 2
  %v2140 = vmax.f32 %v2138, %v2139
  %v2141 = vrot.slane %v2140, 1
  %v2142 = vmax.f32 %v2140, %v2141
  %v2143 = vsel %vm1890, %v1843, -inf
  %v2144 = vrot.slane %v2143, 4
  %v2145 = vmax.f32 %v2143, %v2144
  %v2146 = vrot.slane %v2145, 2
  %v2147 = vmax.f32 %v2145, %v2146
  %v2148 = vrot.slane %v2147, 1
  %v2149 = vmax.f32 %v2147, %v2148
  %v2150 = vsel %vm1890, %v1779, -inf
  %v2151 = vrot.slane %v2150, 4
  %v2152 = vmax.f32 %v2150, %v2151
  %v2153 = vrot.slane %v2152, 2
  %v2154 = vmax.f32 %v2152, %v2153
  %v2155 = vrot.slane %v2154, 1
  %v2156 = vmax.f32 %v2154, %v2155
  %v2157 = vsel %vm1890, %v1844, -inf
  %v2158 = vrot.slane %v2157, 4
  %v2159 = vmax.f32 %v2157, %v2158
  %v2160 = vrot.slane %v2159, 2
  %v2161 = vmax.f32 %v2159, %v2160
  %v2162 = vrot.slane %v2161, 1
  %v2163 = vmax.f32 %v2161, %v2162
  %v2164 = vsel %vm1890, %v1780, -inf
  %v2165 = vrot.slane %v2164, 4
  %v2166 = vmax.f32 %v2164, %v2165
  %v2167 = vrot.slane %v2166, 2
  %v2168 = vmax.f32 %v2166, %v2167
  %v2169 = vrot.slane %v2168, 1
  %v2170 = vmax.f32 %v2168, %v2169
  %v2171 = vsel %vm1890, %v1845, -inf
  %v2172 = vrot.slane %v2171, 4
  %v2173 = vmax.f32 %v2171, %v2172
  %v2174 = vrot.slane %v2173, 2
  %v2175 = vmax.f32 %v2173, %v2174
  %v2176 = vrot.slane %v2175, 1
  %v2177 = vmax.f32 %v2175, %v2176
  %v2178 = vsel %vm1890, %v1781, -inf
  %v2179 = vrot.slane %v2178, 4
  %v2180 = vmax.f32 %v2178, %v2179
  %v2181 = vrot.slane %v2180, 2
  %v2182 = vmax.f32 %v2180, %v2181
  %v2183 = vrot.slane %v2182, 1
  %v2184 = vmax.f32 %v2182, %v2183
  %v2185 = vsel %vm1890, %v1846, -inf
  %v2186 = vrot.slane %v2185, 4
  %v2187 = vmax.f32 %v2185, %v2186
  %v2188 = vrot.slane %v2187, 2
  %v2189 = vmax.f32 %v2187, %v2188
  %v2190 = vrot.slane %v2189, 1
  %v2191 = vmax.f32 %v2189, %v2190
  %v2192 = vsel %vm1890, %v1782, -inf
  %v2193 = vrot.slane %v2192, 4
  %v2194 = vmax.f32 %v2192, %v2193
  %v2195 = vrot.slane %v2194, 2
  %v2196 = vmax.f32 %v2194, %v2195
  %v2197 = vrot.slane %v2196, 1
  %v2198 = vmax.f32 %v2196, %v2197
  %v2199 = vsel %vm1890, %v1847, -inf
  %v2200 = vrot.slane %v2199, 4
  %v2201 = vmax.f32 %v2199, %v2200
  %v2202 = vrot.slane %v2201, 2
  %v2203 = vmax.f32 %v2201, %v2202
  %v2204 = vrot.slane %v2203, 1
  %v2205 = vmax.f32 %v2203, %v2204
  %v2206 = vsel %vm1890, %v1783, -inf
  %v2207 = vrot.slane %v2206, 4
  %v2208 = vmax.f32 %v2206, %v2207
  %v2209 = vrot.slane %v2208, 2
  %v2210 = vmax.f32 %v2208, %v2209
  %v2211 = vrot.slane %v2210, 1
  %v2212 = vmax.f32 %v2210, %v2211
  %v2213 = vsel %vm1890, %v1848, -inf
  %v2214 = vrot.slane %v2213, 4
  %v2215 = vmax.f32 %v2213, %v2214
  %v2216 = vrot.slane %v2215, 2
  %v2217 = vmax.f32 %v2215, %v2216
  %v2218 = vrot.slane %v2217, 1
  %v2219 = vmax.f32 %v2217, %v2218
  %v2220 = vsel %vm1890, %v1784, -inf
  %v2221 = vrot.slane %v2220, 4
  %v2222 = vmax.f32 %v2220, %v2221
  %v2223 = vrot.slane %v2222, 2
  %v2224 = vmax.f32 %v2222, %v2223
  %v2225 = vrot.slane %v2224, 1
  %v2226 = vmax.f32 %v2224, %v2225
  %v2227 = vsel %vm1890, %v1849, -inf
  %v2228 = vrot.slane %v2227, 4
  %v2229 = vmax.f32 %v2227, %v2228
  %v2230 = vrot.slane %v2229, 2
  %v2231 = vmax.f32 %v2229, %v2230
  %v2232 = vrot.slane %v2231, 1
  %v2233 = vmax.f32 %v2231, %v2232
  %v2234 = vsel %vm1890, %v1785, -inf
  %v2235 = vrot.slane %v2234, 4
  %v2236 = vmax.f32 %v2234, %v2235
  %v2237 = vrot.slane %v2236, 2
  %v2238 = vmax.f32 %v2236, %v2237
  %v2239 = vrot.slane %v2238, 1
  %v2240 = vmax.f32 %v2238, %v2239
  %v2241 = vsel %vm1890, %v1850, -inf
  %v2242 = vrot.slane %v2241, 4
  %v2243 = vmax.f32 %v2241, %v2242
  %v2244 = vrot.slane %v2243, 2
  %v2245 = vmax.f32 %v2243, %v2244
  %v2246 = vrot.slane %v2245, 1
  %v2247 = vmax.f32 %v2245, %v2246
  %v2248 = vsel %vm1890, %v1786, -inf
  %v2249 = vrot.slane %v2248, 4
  %v2250 = vmax.f32 %v2248, %v2249
  %v2251 = vrot.slane %v2250, 2
  %v2252 = vmax.f32 %v2250, %v2251
  %v2253 = vrot.slane %v2252, 1
  %v2254 = vmax.f32 %v2252, %v2253
  %v2255 = vsel %vm1890, %v1851, -inf
  %v2256 = vrot.slane %v2255, 4
  %v2257 = vmax.f32 %v2255, %v2256
  %v2258 = vrot.slane %v2257, 2
  %v2259 = vmax.f32 %v2257, %v2258
  %v2260 = vrot.slane %v2259, 1
  %v2261 = vmax.f32 %v2259, %v2260
  %v2262 = vsel %vm1890, %v1787, -inf
  %v2263 = vrot.slane %v2262, 4
  %v2264 = vmax.f32 %v2262, %v2263
  %v2265 = vrot.slane %v2264, 2
  %v2266 = vmax.f32 %v2264, %v2265
  %v2267 = vrot.slane %v2266, 1
  %v2268 = vmax.f32 %v2266, %v2267
  %v2269 = vsel %vm1890, %v1852, -inf
  %v2270 = vrot.slane %v2269, 4
  %v2271 = vmax.f32 %v2269, %v2270
  %v2272 = vrot.slane %v2271, 2
  %v2273 = vmax.f32 %v2271, %v2272
  %v2274 = vrot.slane %v2273, 1
  %v2275 = vmax.f32 %v2273, %v2274
  %v2276 = vsel %vm1890, %v1788, -inf
  %v2277 = vrot.slane %v2276, 4
  %v2278 = vmax.f32 %v2276, %v2277
  %v2279 = vrot.slane %v2278, 2
  %v2280 = vmax.f32 %v2278, %v2279
  %v2281 = vrot.slane %v2280, 1
  %v2282 = vmax.f32 %v2280, %v2281
  %v2283 = vsel %vm1890, %v1853, -inf
  %v2284 = vrot.slane %v2283, 4
  %v2285 = vmax.f32 %v2283, %v2284
  %v2286 = vrot.slane %v2285, 2
  %v2287 = vmax.f32 %v2285, %v2286
  %v2288 = vrot.slane %v2287, 1
  %v2289 = vmax.f32 %v2287, %v2288
  %v2290 = vsel %vm1890, %v1789, -inf
  %v2291 = vrot.slane %v2290, 4
  %v2292 = vmax.f32 %v2290, %v2291
  %v2293 = vrot.slane %v2292, 2
  %v2294 = vmax.f32 %v2292, %v2293
  %v2295 = vrot.slane %v2294, 1
  %v2296 = vmax.f32 %v2294, %v2295
  %v2297 = vsel %vm1890, %v1854, -inf
  %v2298 = vrot.slane %v2297, 4
  %v2299 = vmax.f32 %v2297, %v2298
  %v2300 = vrot.slane %v2299, 2
  %v2301 = vmax.f32 %v2299, %v2300
  %v2302 = vrot.slane %v2301, 1
  %v2303 = vmax.f32 %v2301, %v2302
  %v2304 = vsel %vm1890, %v1790, -inf
  %v2305 = vrot.slane %v2304, 4
  %v2306 = vmax.f32 %v2304, %v2305
  %v2307 = vrot.slane %v2306, 2
  %v2308 = vmax.f32 %v2306, %v2307
  %v2309 = vrot.slane %v2308, 1
  %v2310 = vmax.f32 %v2308, %v2309
  %v2311 = vsel %vm1890, %v1855, -inf
  %v2312 = vrot.slane %v2311, 4
  %v2313 = vmax.f32 %v2311, %v2312
  %v2314 = vrot.slane %v2313, 2
  %v2315 = vmax.f32 %v2313, %v2314
  %v2316 = vrot.slane %v2315, 1
  %v2317 = vmax.f32 %v2315, %v2316
  %v2318 = vsel %vm1890, %v1791, -inf
  %v2319 = vrot.slane %v2318, 4
  %v2320 = vmax.f32 %v2318, %v2319
  %v2321 = vrot.slane %v2320, 2
  %v2322 = vmax.f32 %v2320, %v2321
  %v2323 = vrot.slane %v2322, 1
  %v2324 = vmax.f32 %v2322, %v2323
  %v2325 = vsel %vm1890, %v1856, -inf
  %v2326 = vrot.slane %v2325, 4
  %v2327 = vmax.f32 %v2325, %v2326
  %v2328 = vrot.slane %v2327, 2
  %v2329 = vmax.f32 %v2327, %v2328
  %v2330 = vrot.slane %v2329, 1
  %v2331 = vmax.f32 %v2329, %v2330
  %v2332 = vsel %vm1890, %v1792, -inf
  %v2333 = vrot.slane %v2332, 4
  %v2334 = vmax.f32 %v2332, %v2333
  %v2335 = vrot.slane %v2334, 2
  %v2336 = vmax.f32 %v2334, %v2335
  %v2337 = vrot.slane %v2336, 1
  %v2338 = vmax.f32 %v2336, %v2337
  %v2339 = vsel %vm1890, %v1857, -inf
  %v2340 = vrot.slane %v2339, 4
  %v2341 = vmax.f32 %v2339, %v2340
  %v2342 = vrot.slane %v2341, 2
  %v2343 = vmax.f32 %v2341, %v2342
  %v2344 = vrot.slane %v2343, 1
  %v2345 = vmax.f32 %v2343, %v2344
  %v2346 = vsel %vm1890, %v1793, -inf
  %v2347 = vrot.slane %v2346, 4
  %v2348 = vmax.f32 %v2346, %v2347
  %v2349 = vrot.slane %v2348, 2
  %v2350 = vmax.f32 %v2348, %v2349
  %v2351 = vrot.slane %v2350, 1
  %v2352 = vmax.f32 %v2350, %v2351
  %v2353 = vld [vmem:[%s2] sm:$0x1]
  %v2354 = vld [vmem:[%s2 + $0x1] sm:$0x1]
  %v2355 = vld [vmem:[%s2 + $0x2] sm:$0x1]
  %v2356 = vlaneseq
  %v2357 = vshrl.u32 %v2356, 7
  %v2358 = vsub.s32 0, %v2357
  %v2359 = vrot.slane %v2353, %v2358
  %v2360 = vadd.f32 %v1897, %v2359
  %v2361 = vadd.f32 %v1904, %v2359
  %v2362 = vadd.f32 %v1911, %v2359
  %v2363 = vadd.f32 %v1918, %v2359
  %v2364 = vadd.f32 %v1925, %v2359
  %v2365 = vadd.f32 %v1932, %v2359
  %v2366 = vadd.f32 %v1939, %v2359
  %v2367 = vadd.f32 %v1946, %v2359
  %v2368 = vadd.f32 %v1953, %v2359
  %v2369 = vadd.f32 %v1960, %v2359
  %v2370 = vadd.f32 %v1967, %v2359
  %v2371 = vadd.f32 %v1974, %v2359
  %v2372 = vadd.f32 %v1981, %v2359
  %v2373 = vadd.f32 %v1988, %v2359
  %v2374 = vadd.f32 %v1995, %v2359
  %v2375 = vadd.f32 %v2002, %v2359
  %v2376 = vadd.f32 %v2009, %v2359
  %v2377 = vadd.f32 %v2016, %v2359
  %v2378 = vadd.f32 %v2023, %v2359
  %v2379 = vadd.f32 %v2030, %v2359
  %v2380 = vadd.f32 %v2037, %v2359
  %v2381 = vadd.f32 %v2044, %v2359
  %v2382 = vadd.f32 %v2051, %v2359
  %v2383 = vadd.f32 %v2058, %v2359
  %v2384 = vadd.f32 %v2065, %v2359
  %v2385 = vadd.f32 %v2072, %v2359
  %v2386 = vadd.f32 %v2079, %v2359
  %v2387 = vadd.f32 %v2086, %v2359
  %v2388 = vadd.f32 %v2093, %v2359
  %v2389 = vadd.f32 %v2100, %v2359
  %v2390 = vadd.f32 %v2107, %v2359
  %v2391 = vadd.f32 %v2114, %v2359
  %v2392 = vadd.f32 %v2121, %v2359
  %v2393 = vadd.f32 %v2128, %v2359
  %v2394 = vadd.f32 %v2135, %v2359
  %v2395 = vadd.f32 %v2142, %v2359
  %v2396 = vadd.f32 %v2149, %v2359
  %v2397 = vadd.f32 %v2156, %v2359
  %v2398 = vadd.f32 %v2163, %v2359
  %v2399 = vadd.f32 %v2170, %v2359
  %v2400 = vadd.f32 %v2177, %v2359
  %v2401 = vadd.f32 %v2184, %v2359
  %v2402 = vadd.f32 %v2191, %v2359
  %v2403 = vadd.f32 %v2198, %v2359
  %v2404 = vadd.f32 %v2205, %v2359
  %v2405 = vadd.f32 %v2212, %v2359
  %v2406 = vadd.f32 %v2219, %v2359
  %v2407 = vadd.f32 %v2226, %v2359
  %v2408 = vadd.f32 %v2233, %v2359
  %v2409 = vadd.f32 %v2240, %v2359
  %v2410 = vadd.f32 %v2247, %v2359
  %v2411 = vadd.f32 %v2254, %v2359
  %v2412 = vadd.f32 %v2261, %v2359
  %v2413 = vadd.f32 %v2268, %v2359
  %v2414 = vadd.f32 %v2275, %v2359
  %v2415 = vadd.f32 %v2282, %v2359
  %v2416 = vadd.f32 %v2289, %v2359
  %v2417 = vadd.f32 %v2296, %v2359
  %v2418 = vadd.f32 %v2303, %v2359
  %v2419 = vadd.f32 %v2310, %v2359
  %v2420 = vadd.f32 %v2317, %v2359
  %v2421 = vadd.f32 %v2324, %v2359
  %v2422 = vadd.f32 %v2331, %v2359
  %v2423 = vadd.f32 %v2338, %v2359
  %v2424 = vadd.f32 %v2345, %v2359
  %v2425 = vadd.f32 %v2352, %v2359
  %v2426 = vmax.f32 %v2360, 0.0
  %v2427 = vmax.f32 %v2361, 0.0
  %v2428 = vmax.f32 %v2362, 0.0
  %v2429 = vmax.f32 %v2363, 0.0
  %v2430 = vmax.f32 %v2364, 0.0
  %v2431 = vmax.f32 %v2365, 0.0
  %v2432 = vmax.f32 %v2366, 0.0
  %v2433 = vmax.f32 %v2367, 0.0
  %v2434 = vmax.f32 %v2368, 0.0
  %v2435 = vmax.f32 %v2369, 0.0
  %v2436 = vmax.f32 %v2370, 0.0
  %v2437 = vmax.f32 %v2371, 0.0
  %v2438 = vmax.f32 %v2372, 0.0
  %v2439 = vmax.f32 %v2373, 0.0
  %v2440 = vmax.f32 %v2374, 0.0
  %v2441 = vmax.f32 %v2375, 0.0
  %v2442 = vmax.f32 %v2376, 0.0
  %v2443 = vmax.f32 %v2377, 0.0
  %v2444 = vmax.f32 %v2378, 0.0
  %v2445 = vmax.f32 %v2379, 0.0
  %v2446 = vmax.f32 %v2380, 0.0
  %v2447 = vmax.f32 %v2381, 0.0
  %v2448 = vmax.f32 %v2382, 0.0
  %v2449 = vmax.f32 %v2383, 0.0
  %v2450 = vmax.f32 %v2384, 0.0
  %v2451 = vmax.f32 %v2385, 0.0
  %v2452 = vmax.f32 %v2386, 0.0
  %v2453 = vmax.f32 %v2387, 0.0
  %v2454 = vmax.f32 %v2388, 0.0
  %v2455 = vmax.f32 %v2389, 0.0
  %v2456 = vmax.f32 %v2390, 0.0
  %v2457 = vmax.f32 %v2391, 0.0
  %v2458 = vmax.f32 %v2392, 0.0
  %v2459 = vmax.f32 %v2393, 0.0
  %v2460 = vmax.f32 %v2394, 0.0
  %v2461 = vmax.f32 %v2395, 0.0
  %v2462 = vmax.f32 %v2396, 0.0
  %v2463 = vmax.f32 %v2397, 0.0
  %v2464 = vmax.f32 %v2398, 0.0
  %v2465 = vmax.f32 %v2399, 0.0
  %v2466 = vmax.f32 %v2400, 0.0
  %v2467 = vmax.f32 %v2401, 0.0
  %v2468 = vmax.f32 %v2402, 0.0
  %v2469 = vmax.f32 %v2403, 0.0
  %v2470 = vmax.f32 %v2404, 0.0
  %v2471 = vmax.f32 %v2405, 0.0
  %v2472 = vmax.f32 %v2406, 0.0
  %v2473 = vmax.f32 %v2407, 0.0
  %v2474 = vmax.f32 %v2408, 0.0
  %v2475 = vmax.f32 %v2409, 0.0
  %v2476 = vmax.f32 %v2410, 0.0
  %v2477 = vmax.f32 %v2411, 0.0
  %v2478 = vmax.f32 %v2412, 0.0
  %v2479 = vmax.f32 %v2413, 0.0
  %v2480 = vmax.f32 %v2414, 0.0
  %v2481 = vmax.f32 %v2415, 0.0
  %v2482 = vmax.f32 %v2416, 0.0
  %v2483 = vmax.f32 %v2417, 0.0
  %v2484 = vmax.f32 %v2418, 0.0
  %v2485 = vmax.f32 %v2419, 0.0
  %v2486 = vmax.f32 %v2420, 0.0
  %v2487 = vmax.f32 %v2421, 0.0
  %v2488 = vmax.f32 %v2422, 0.0
  %v2489 = vmax.f32 %v2423, 0.0
  %v2490 = vmax.f32 %v2424, 0.0
  %v2491 = vmax.f32 %v2425, 0.0
  %v2558 = vrot.slane %v2427, 7
  %vm2559 = vcmask 1041409
  %v2560 = vsel %vm2559, %v2558, %v2426
  %v2561 = vrot.slane %v2428, 6
  %vm2562 = vcmask 1042434
  %v2563 = vsel %vm2562, %v2561, %v2560
  %v2564 = vrot.slane %v2429, 5
  %vm2565 = vcmask 1043459
  %v2566 = vsel %vm2565, %v2564, %v2563
  %v2567 = vrot.slane %v2430, 4
  %vm2568 = vcmask 1044484
  %v2569 = vsel %vm2568, %v2567, %v2566
  %v2570 = vrot.slane %v2431, 3
  %vm2571 = vcmask 1045509
  %v2572 = vsel %vm2571, %v2570, %v2569
  %v2573 = vrot.slane %v2432, 2
  %vm2574 = vcmask 1046534
  %v2575 = vsel %vm2574, %v2573, %v2572
  %v2576 = vrot.slane %v2433, 1
  %vm2577 = vcmask 1047559
  %v2578 = vsel %vm2577, %v2576, %v2575
  %v2579 = vrot.slane %v2435, 7
  %v2580 = vsel %vm2559, %v2579, %v2434
  %v2581 = vrot.slane %v2436, 6
  %v2582 = vsel %vm2562, %v2581, %v2580
  %v2583 = vrot.slane %v2437, 5
  %v2584 = vsel %vm2565, %v2583, %v2582
  %v2585 = vrot.slane %v2438, 4
  %v2586 = vsel %vm2568, %v2585, %v2584
  %v2587 = vrot.slane %v2439, 3
  %v2588 = vsel %vm2571, %v2587, %v2586
  %v2589 = vrot.slane %v2440, 2
  %v2590 = vsel %vm2574, %v2589, %v2588
  %v2591 = vrot.slane %v2441, 1
  %v2592 = vsel %vm2577, %v2591, %v2590
  %v2593 = vrot.slane %v2443, 7
  %v2594 = vsel %vm2559, %v2593, %v2442
  %v2595 = vrot.slane %v2444, 6
  %v2596 = vsel %vm2562, %v2595, %v2594
  %v2597 = vrot.slane %v2445, 5
  %v2598 = vsel %vm2565, %v2597, %v2596
  %v2599 = vrot.slane %v2446, 4
  %v2600 = vsel %vm2568, %v2599, %v2598
  %v2601 = vrot.slane %v2447, 3
  %v2602 = vsel %vm2571, %v2601, %v2600
  %v2603 = vrot.slane %v2448, 2
  %v2604 = vsel %vm2574, %v2603, %v2602
  %v2605 = vrot.slane %v2449, 1
  %v2606 = vsel %vm2577, %v2605, %v2604
  %v2607 = vrot.slane %v2451, 7
  %v2608 = vsel %vm2559, %v2607, %v2450
  %v2609 = vrot.slane %v2452, 6
  %v2610 = vsel %vm2562, %v2609, %v2608
  %v2611 = vrot.slane %v2453, 5
  %v2612 = vsel %vm2565, %v2611, %v2610
  %v2613 = vrot.slane %v2454, 4
  %v2614 = vsel %vm2568, %v2613, %v2612
  %v2615 = vrot.slane %v2455, 3
  %v2616 = vsel %vm2571, %v2615, %v2614
  %v2617 = vrot.slane %v2456, 2
  %v2618 = vsel %vm2574, %v2617, %v2616
  %v2619 = vrot.slane %v2457, 1
  %v2620 = vsel %vm2577, %v2619, %v2618
  %v2621 = vrot.slane %v2459, 7
  %v2622 = vsel %vm2559, %v2621, %v2458
  %v2623 = vrot.slane %v2460, 6
  %v2624 = vsel %vm2562, %v2623, %v2622
  %v2625 = vrot.slane %v2461, 5
  %v2626 = vsel %vm2565, %v2625, %v2624
  %v2627 = vrot.slane %v2462, 4
  %v2628 = vsel %vm2568, %v2627, %v2626
  %v2629 = vrot.slane %v2463, 3
  %v2630 = vsel %vm2571, %v2629, %v2628
  %v2631 = vrot.slane %v2464, 2
  %v2632 = vsel %vm2574, %v2631, %v2630
  %v2633 = vrot.slane %v2465, 1
  %v2634 = vsel %vm2577, %v2633, %v2632
  %v2635 = vrot.slane %v2467, 7
  %v2636 = vsel %vm2559, %v2635, %v2466
  %v2637 = vrot.slane %v2468, 6
  %v2638 = vsel %vm2562, %v2637, %v2636
  %v2639 = vrot.slane %v2469, 5
  %v2640 = vsel %vm2565, %v2639, %v2638
  %v2641 = vrot.slane %v2470, 4
  %v2642 = vsel %vm2568, %v2641, %v2640
  %v2643 = vrot.slane %v2471, 3
  %v2644 = vsel %vm2571, %v2643, %v2642
  %v2645 = vrot.slane %v2472, 2
  %v2646 = vsel %vm2574, %v2645, %v2644
  %v2647 = vrot.slane %v2473, 1
  %v2648 = vsel %vm2577, %v2647, %v2646
  %v2649 = vrot.slane %v2475, 7
  %v2650 = vsel %vm2559, %v2649, %v2474
  %v2651 = vrot.slane %v2476, 6
  %v2652 = vsel %vm2562, %v2651, %v2650
  %v2653 = vrot.slane %v2477, 5
  %v2654 = vsel %vm2565, %v2653, %v2652
  %v2655 = vrot.slane %v2478, 4
  %v2656 = vsel %vm2568, %v2655, %v2654
  %v2657 = vrot.slane %v2479, 3
  %v2658 = vsel %vm2571, %v2657, %v2656
  %v2659 = vrot.slane %v2480, 2
  %v2660 = vsel %vm2574, %v2659, %v2658
  %v2661 = vrot.slane %v2481, 1
  %v2662 = vsel %vm2577, %v2661, %v2660
  %v2663 = vrot.slane %v2483, 7
  %v2664 = vsel %vm2559, %v2663, %v2482
  %v2665 = vrot.slane %v2484, 6
  %v2666 = vsel %vm2562, %v2665, %v2664
  %v2667 = vrot.slane %v2485, 5
  %v2668 = vsel %vm2565, %v2667, %v2666
  %v2669 = vrot.slane %v2486, 4
  %v2670 = vsel %vm2568, %v2669, %v2668
  %v2671 = vrot.slane %v2487, 3
  %v2672 = vsel %vm2571, %v2671, %v2670
  %v2673 = vrot.slane %v2488, 2
  %v2674 = vsel %vm2574, %v2673, %v2672
  %v2675 = vrot.slane %v2489, 1
  %v2676 = vsel %vm2577, %v2675, %v2674
  %v2677 = vrot.slane %v2491, 7
  %v2678 = vsel %vm2559, %v2677, %v2490
  %vm2688 = vcmask 261120
  %v2689 = vsel %vm2688, %v2578, 0.0
  %v2690 = vsel %vm2688, %v2592, 0.0
  %v2691 = vadd.f32 %v2689, %v2690
  %v2692 = vsel %vm2688, %v2606, 0.0
  %v2693 = vadd.f32 %v2691, %v2692
  %v2694 = vsel %vm2688, %v2620, 0.0
  %v2695 = vadd.f32 %v2693, %v2694
  %v2696 = vsel %vm2688, %v2634, 0.0
  %v2697 = vadd.f32 %v2695, %v2696
  %v2698 = vsel %vm2688, %v2648, 0.0
  %v2699 = vadd.f32 %v2697, %v2698
  %v2700 = vsel %vm2688, %v2662, 0.0
  %v2701 = vadd.f32 %v2699, %v2700
  %v2702 = vsel %vm2688, %v2676, 0.0
  %v2703 = vadd.f32 %v2701, %v2702
  %vm2704 = vcmask 254976
  %v2705 = vsel %vm2704, %v2678, 0.0
  %v2706 = vadd.f32 %v2703, %v2705
  %v2707 = vrot.slane %v2706, 4
  %v2708 = vadd.f32 %v2706, %v2707
  %v2709 = vrot.slane %v2708, 2
  %v2710 = vadd.f32 %v2708, %v2709
  %v2711 = vrot.slane %v2710, 1
  %v2712 = vadd.f32 %v2710, %v2711
  %v2713 = vmul.f32 %v2712, 0.015151516
  %v2714 = vmul.f32 %v2426, %v2426
  %v2715 = vmul.f32 %v2427, %v2427
  %v2716 = vmul.f32 %v2428, %v2428
  %v2717 = vmul.f32 %v2429, %v2429
  %v2718 = vmul.f32 %v2430, %v2430
  %v2719 = vmul.f32 %v2431, %v2431
  %v2720 = vmul.f32 %v2432, %v2432
  %v2721 = vmul.f32 %v2433, %v2433
  %v2722 = vmul.f32 %v2434, %v2434
  %v2723 = vmul.f32 %v2435, %v2435
  %v2724 = vmul.f32 %v2436, %v2436
  %v2725 = vmul.f32 %v2437, %v2437
  %v2726 = vmul.f32 %v2438, %v2438
  %v2727 = vmul.f32 %v2439, %v2439
  %v2728 = vmul.f32 %v2440, %v2440
  %v2729 = vmul.f32 %v2441, %v2441
  %v2730 = vmul.f32 %v2442, %v2442
  %v2731 = vmul.f32 %v2443, %v2443
  %v2732 = vmul.f32 %v2444, %v2444
  %v2733 = vmul.f32 %v2445, %v2445
  %v2734 = vmul.f32 %v2446, %v2446
  %v2735 = vmul.f32 %v2447, %v2447
  %v2736 = vmul.f32 %v2448, %v2448
  %v2737 = vmul.f32 %v2449, %v2449
  %v2738 = vmul.f32 %v2450, %v2450
  %v2739 = vmul.f32 %v2451, %v2451
  %v2740 = vmul.f32 %v2452, %v2452
  %v2741 = vmul.f32 %v2453, %v2453
  %v2742 = vmul.f32 %v2454, %v2454
  %v2743 = vmul.f32 %v2455, %v2455
  %v2744 = vmul.f32 %v2456, %v2456
  %v2745 = vmul.f32 %v2457, %v2457
  %v2746 = vmul.f32 %v2458, %v2458
  %v2747 = vmul.f32 %v2459, %v2459
  %v2748 = vmul.f32 %v2460, %v2460
  %v2749 = vmul.f32 %v2461, %v2461
  %v2750 = vmul.f32 %v2462, %v2462
  %v2751 = vmul.f32 %v2463, %v2463
  %v2752 = vmul.f32 %v2464, %v2464
  %v2753 = vmul.f32 %v2465, %v2465
  %v2754 = vmul.f32 %v2466, %v2466
  %v2755 = vmul.f32 %v2467, %v2467
  %v2756 = vmul.f32 %v2468, %v2468
  %v2757 = vmul.f32 %v2469, %v2469
  %v2758 = vmul.f32 %v2470, %v2470
  %v2759 = vmul.f32 %v2471, %v2471
  %v2760 = vmul.f32 %v2472, %v2472
  %v2761 = vmul.f32 %v2473, %v2473
  %v2762 = vmul.f32 %v2474, %v2474
  %v2763 = vmul.f32 %v2475, %v2475
  %v2764 = vmul.f32 %v2476, %v2476
  %v2765 = vmul.f32 %v2477, %v2477
  %v2766 = vmul.f32 %v2478, %v2478
  %v2767 = vmul.f32 %v2479, %v2479
  %v2768 = vmul.f32 %v2480, %v2480
  %v2769 = vmul.f32 %v2481, %v2481
  %v2770 = vmul.f32 %v2482, %v2482
  %v2771 = vmul.f32 %v2483, %v2483
  %v2772 = vmul.f32 %v2484, %v2484
  %v2773 = vmul.f32 %v2485, %v2485
  %v2774 = vmul.f32 %v2486, %v2486
  %v2775 = vmul.f32 %v2487, %v2487
  %v2776 = vmul.f32 %v2488, %v2488
  %v2777 = vmul.f32 %v2489, %v2489
  %v2778 = vmul.f32 %v2490, %v2490
  %v2779 = vmul.f32 %v2491, %v2491
  %v2846 = vrot.slane %v2715, 7
  %v2847 = vsel %vm2559, %v2846, %v2714
  %v2848 = vrot.slane %v2716, 6
  %v2849 = vsel %vm2562, %v2848, %v2847
  %v2850 = vrot.slane %v2717, 5
  %v2851 = vsel %vm2565, %v2850, %v2849
  %v2852 = vrot.slane %v2718, 4
  %v2853 = vsel %vm2568, %v2852, %v2851
  %v2854 = vrot.slane %v2719, 3
  %v2855 = vsel %vm2571, %v2854, %v2853
  %v2856 = vrot.slane %v2720, 2
  %v2857 = vsel %vm2574, %v2856, %v2855
  %v2858 = vrot.slane %v2721, 1
  %v2859 = vsel %vm2577, %v2858, %v2857
  %v2860 = vrot.slane %v2723, 7
  %v2861 = vsel %vm2559, %v2860, %v2722
  %v2862 = vrot.slane %v2724, 6
  %v2863 = vsel %vm2562, %v2862, %v2861
  %v2864 = vrot.slane %v2725, 5
  %v2865 = vsel %vm2565, %v2864, %v2863
  %v2866 = vrot.slane %v2726, 4
  %v2867 = vsel %vm2568, %v2866, %v2865
  %v2868 = vrot.slane %v2727, 3
  %v2869 = vsel %vm2571, %v2868, %v2867
  %v2870 = vrot.slane %v2728, 2
  %v2871 = vsel %vm2574, %v2870, %v2869
  %v2872 = vrot.slane %v2729, 1
  %v2873 = vsel %vm2577, %v2872, %v2871
  %v2874 = vrot.slane %v2731, 7
  %v2875 = vsel %vm2559, %v2874, %v2730
  %v2876 = vrot.slane %v2732, 6
  %v2877 = vsel %vm2562, %v2876, %v2875
  %v2878 = vrot.slane %v2733, 5
  %v2879 = vsel %vm2565, %v2878, %v2877
  %v2880 = vrot.slane %v2734, 4
  %v2881 = vsel %vm2568, %v2880, %v2879
  %v2882 = vrot.slane %v2735, 3
  %v2883 = vsel %vm2571, %v2882, %v2881
  %v2884 = vrot.slane %v2736, 2
  %v2885 = vsel %vm2574, %v2884, %v2883
  %v2886 = vrot.slane %v2737, 1
  %v2887 = vsel %vm2577, %v2886, %v2885
  %v2888 = vrot.slane %v2739, 7
  %v2889 = vsel %vm2559, %v2888, %v2738
  %v2890 = vrot.slane %v2740, 6
  %v2891 = vsel %vm2562, %v2890, %v2889
  %v2892 = vrot.slane %v2741, 5
  %v2893 = vsel %vm2565, %v2892, %v2891
  %v2894 = vrot.slane %v2742, 4
  %v2895 = vsel %vm2568, %v2894, %v2893
  %v2896 = vrot.slane %v2743, 3
  %v2897 = vsel %vm2571, %v2896, %v2895
  %v2898 = vrot.slane %v2744, 2
  %v2899 = vsel %vm2574, %v2898, %v2897
  %v2900 = vrot.slane %v2745, 1
  %v2901 = vsel %vm2577, %v2900, %v2899
  %v2902 = vrot.slane %v2747, 7
  %v2903 = vsel %vm2559, %v2902, %v2746
  %v2904 = vrot.slane %v2748, 6
  %v2905 = vsel %vm2562, %v2904, %v2903
  %v2906 = vrot.slane %v2749, 5
  %v2907 = vsel %vm2565, %v2906, %v2905
  %v2908 = vrot.slane %v2750, 4
  %v2909 = vsel %vm2568, %v2908, %v2907
  %v2910 = vrot.slane %v2751, 3
  %v2911 = vsel %vm2571, %v2910, %v2909
  %v2912 = vrot.slane %v2752, 2
  %v2913 = vsel %vm2574, %v2912, %v2911
  %v2914 = vrot.slane %v2753, 1
  %v2915 = vsel %vm2577, %v2914, %v2913
  %v2916 = vrot.slane %v2755, 7
  %v2917 = vsel %vm2559, %v2916, %v2754
  %v2918 = vrot.slane %v2756, 6
  %v2919 = vsel %vm2562, %v2918, %v2917
  %v2920 = vrot.slane %v2757, 5
  %v2921 = vsel %vm2565, %v2920, %v2919
  %v2922 = vrot.slane %v2758, 4
  %v2923 = vsel %vm2568, %v2922, %v2921
  %v2924 = vrot.slane %v2759, 3
  %v2925 = vsel %vm2571, %v2924, %v2923
  %v2926 = vrot.slane %v2760, 2
  %v2927 = vsel %vm2574, %v2926, %v2925
  %v2928 = vrot.slane %v2761, 1
  %v2929 = vsel %vm2577, %v2928, %v2927
  %v2930 = vrot.slane %v2763, 7
  %v2931 = vsel %vm2559, %v2930, %v2762
  %v2932 = vrot.slane %v2764, 6
  %v2933 = vsel %vm2562, %v2932, %v2931
  %v2934 = vrot.slane %v2765, 5
  %v2935 = vsel %vm2565, %v2934, %v2933
  %v2936 = vrot.slane %v2766, 4
  %v2937 = vsel %vm2568, %v2936, %v2935
  %v2938 = vrot.slane %v2767, 3
  %v2939 = vsel %vm2571, %v2938, %v2937
  %v2940 = vrot.slane %v2768, 2
  %v2941 = vsel %vm2574, %v2940, %v2939
  %v2942 = vrot.slane %v2769, 1
  %v2943 = vsel %vm2577, %v2942, %v2941
  %v2944 = vrot.slane %v2771, 7
  %v2945 = vsel %vm2559, %v2944, %v2770
  %v2946 = vrot.slane %v2772, 6
  %v2947 = vsel %vm2562, %v2946, %v2945
  %v2948 = vrot.slane %v2773, 5
  %v2949 = vsel %vm2565, %v2948, %v2947
  %v2950 = vrot.slane %v2774, 4
  %v2951 = vsel %vm2568, %v2950, %v2949
  %v2952 = vrot.slane %v2775, 3
  %v2953 = vsel %vm2571, %v2952, %v2951
  %v2954 = vrot.slane %v2776, 2
  %v2955 = vsel %vm2574, %v2954, %v2953
  %v2956 = vrot.slane %v2777, 1
  %v2957 = vsel %vm2577, %v2956, %v2955
  %v2958 = vrot.slane %v2779, 7
  %v2959 = vsel %vm2559, %v2958, %v2778
  %v2969 = vsel %vm2688, %v2859, 0.0
  %v2970 = vsel %vm2688, %v2873, 0.0
  %v2971 = vadd.f32 %v2969, %v2970
  %v2972 = vsel %vm2688, %v2887, 0.0
  %v2973 = vadd.f32 %v2971, %v2972
  %v2974 = vsel %vm2688, %v2901, 0.0
  %v2975 = vadd.f32 %v2973, %v2974
  %v2976 = vsel %vm2688, %v2915, 0.0
  %v2977 = vadd.f32 %v2975, %v2976
  %v2978 = vsel %vm2688, %v2929, 0.0
  %v2979 = vadd.f32 %v2977, %v2978
  %v2980 = vsel %vm2688, %v2943, 0.0
  %v2981 = vadd.f32 %v2979, %v2980
  %v2982 = vsel %vm2688, %v2957, 0.0
  %v2983 = vadd.f32 %v2981, %v2982
  %v2984 = vsel %vm2704, %v2959, 0.0
  %v2985 = vadd.f32 %v2983, %v2984
  %v2986 = vrot.slane %v2985, 4
  %v2987 = vadd.f32 %v2985, %v2986
  %v2988 = vrot.slane %v2987, 2
  %v2989 = vadd.f32 %v2987, %v2988
  %v2990 = vrot.slane %v2989, 1
  %v2991 = vadd.f32 %v2989, %v2990
  %v2992 = vmul.f32 %v2991, 0.015151516
  %v2993 = vmul.f32 %v2713, %v2713
  %v2994 = vsub.f32 %v2992, %v2993
  %v2995 = vadd.f32 %v2994, 1e-05
  %v2996 = vrsqrt.pop %v2995
  %v2997 = vmul.f32 %v2354, %v2996
  %v2998 = vlaneseq
  %v2999 = vshrl.u32 %v2998, 7
  %v3000 = vsub.s32 0, %v2999
  %v3001 = vrot.slane %v2997, %v3000
  %v3002 = vmul.f32 %v2426, %v3001
  %v3003 = vmul.f32 %v2427, %v3001
  %v3004 = vmul.f32 %v2428, %v3001
  %v3005 = vmul.f32 %v2429, %v3001
  %v3006 = vmul.f32 %v2430, %v3001
  %v3007 = vmul.f32 %v2431, %v3001
  %v3008 = vmul.f32 %v2432, %v3001
  %v3009 = vmul.f32 %v2433, %v3001
  %v3010 = vmul.f32 %v2434, %v3001
  %v3011 = vmul.f32 %v2435, %v3001
  %v3012 = vmul.f32 %v2436, %v3001
  %v3013 = vmul.f32 %v2437, %v3001
  %v3014 = vmul.f32 %v2438, %v3001
  %v3015 = vmul.f32 %v2439, %v3001
  %v3016 = vmul.f32 %v2440, %v3001
  %v3017 = vmul.f32 %v2441, %v3001
  %v3018 = vmul.f32 %v2442, %v3001
  %v3019 = vmul.f32 %v2443, %v3001
  %v3020 = vmul.f32 %v2444, %v3001
  %v3021 = vmul.f32 %v2445, %v3001
  %v3022 = vmul.f32 %v2446, %v3001
  %v3023 = vmul.f32 %v2447, %v3001
  %v3024 = vmul.f32 %v2448, %v3001
  %v3025 = vmul.f32 %v2449, %v3001
  %v3026 = vmul.f32 %v2450, %v3001
  %v3027 = vmul.f32 %v2451, %v3001
  %v3028 = vmul.f32 %v2452, %v3001
  %v3029 = vmul.f32 %v2453, %v3001
  %v3030 = vmul.f32 %v2454, %v3001
  %v3031 = vmul.f32 %v2455, %v3001
  %v3032 = vmul.f32 %v2456, %v3001
  %v3033 = vmul.f32 %v2457, %v3001
  %v3034 = vmul.f32 %v2458, %v3001
  %v3035 = vmul.f32 %v2459, %v3001
  %v3036 = vmul.f32 %v2460, %v3001
  %v3037 = vmul.f32 %v2461, %v3001
  %v3038 = vmul.f32 %v2462, %v3001
  %v3039 = vmul.f32 %v2463, %v3001
  %v3040 = vmul.f32 %v2464, %v3001
  %v3041 = vmul.f32 %v2465, %v3001
  %v3042 = vmul.f32 %v2466, %v3001
  %v3043 = vmul.f32 %v2467, %v3001
  %v3044 = vmul.f32 %v2468, %v3001
  %v3045 = vmul.f32 %v2469, %v3001
  %v3046 = vmul.f32 %v2470, %v3001
  %v3047 = vmul.f32 %v2471, %v3001
  %v3048 = vmul.f32 %v2472, %v3001
  %v3049 = vmul.f32 %v2473, %v3001
  %v3050 = vmul.f32 %v2474, %v3001
  %v3051 = vmul.f32 %v2475, %v3001
  %v3052 = vmul.f32 %v2476, %v3001
  %v3053 = vmul.f32 %v2477, %v3001
  %v3054 = vmul.f32 %v2478, %v3001
  %v3055 = vmul.f32 %v2479, %v3001
  %v3056 = vmul.f32 %v2480, %v3001
  %v3057 = vmul.f32 %v2481, %v3001
  %v3058 = vmul.f32 %v2482, %v3001
  %v3059 = vmul.f32 %v2483, %v3001
  %v3060 = vmul.f32 %v2484, %v3001
  %v3061 = vmul.f32 %v2485, %v3001
  %v3062 = vmul.f32 %v2486, %v3001
  %v3063 = vmul.f32 %v2487, %v3001
  %v3064 = vmul.f32 %v2488, %v3001
  %v3065 = vmul.f32 %v2489, %v3001
  %v3066 = vmul.f32 %v2490, %v3001
  %v3067 = vmul.f32 %v2491, %v3001
  %v3068 = vmul.f32 %v2713, %v2997
  %v3069 = vsub.f32 %v2355, %v3068
  %v3070 = vlaneseq
  %v3071 = vshrl.u32 %v3070, 7
  %v3072 = vsub.s32 0, %v3071
  %v3073 = vrot.slane %v3069, %v3072
  %v3074 = vadd.f32 %v3002, %v3073
  %v3075 = vadd.f32 %v3003, %v3073
  %v3076 = vadd.f32 %v3004, %v3073
  %v3077 = vadd.f32 %v3005, %v3073
  %v3078 = vadd.f32 %v3006, %v3073
  %v3079 = vadd.f32 %v3007, %v3073
  %v3080 = vadd.f32 %v3008, %v3073
  %v3081 = vadd.f32 %v3009, %v3073
  %v3082 = vadd.f32 %v3010, %v3073
  %v3083 = vadd.f32 %v3011, %v3073
  %v3084 = vadd.f32 %v3012, %v3073
  %v3085 = vadd.f32 %v3013, %v3073
  %v3086 = vadd.f32 %v3014, %v3073
  %v3087 = vadd.f32 %v3015, %v3073
  %v3088 = vadd.f32 %v3016, %v3073
  %v3089 = vadd.f32 %v3017, %v3073
  %v3090 = vadd.f32 %v3018, %v3073
  %v3091 = vadd.f32 %v3019, %v3073
  %v3092 = vadd.f32 %v3020, %v3073
  %v3093 = vadd.f32 %v3021, %v3073
  %v3094 = vadd.f32 %v3022, %v3073
  %v3095 = vadd.f32 %v3023, %v3073
  %v3096 = vadd.f32 %v3024, %v3073
  %v3097 = vadd.f32 %v3025, %v3073
  %v3098 = vadd.f32 %v3026, %v3073
  %v3099 = vadd.f32 %v3027, %v3073
  %v3100 = vadd.f32 %v3028, %v3073
  %v3101 = vadd.f32 %v3029, %v3073
  %v3102 = vadd.f32 %v3030, %v3073
  %v3103 = vadd.f32 %v3031, %v3073
  %v3104 = vadd.f32 %v3032, %v3073
  %v3105 = vadd.f32 %v3033, %v3073
  %v3106 = vadd.f32 %v3034, %v3073
  %v3107 = vadd.f32 %v3035, %v3073
  %v3108 = vadd.f32 %v3036, %v3073
  %v3109 = vadd.f32 %v3037, %v3073
  %v3110 = vadd.f32 %v3038, %v3073
  %v3111 = vadd.f32 %v3039, %v3073
  %v3112 = vadd.f32 %v3040, %v3073
  %v3113 = vadd.f32 %v3041, %v3073
  %v3114 = vadd.f32 %v3042, %v3073
  %v3115 = vadd.f32 %v3043, %v3073
  %v3116 = vadd.f32 %v3044, %v3073
  %v3117 = vadd.f32 %v3045, %v3073
  %v3118 = vadd.f32 %v3046, %v3073
  %v3119 = vadd.f32 %v3047, %v3073
  %v3120 = vadd.f32 %v3048, %v3073
  %v3121 = vadd.f32 %v3049, %v3073
  %v3122 = vadd.f32 %v3050, %v3073
  %v3123 = vadd.f32 %v3051, %v3073
  %v3124 = vadd.f32 %v3052, %v3073
  %v3125 = vadd.f32 %v3053, %v3073
  %v3126 = vadd.f32 %v3054, %v3073
  %v3127 = vadd.f32 %v3055, %v3073
  %v3128 = vadd.f32 %v3056, %v3073
  %v3129 = vadd.f32 %v3057, %v3073
  %v3130 = vadd.f32 %v3058, %v3073
  %v3131 = vadd.f32 %v3059, %v3073
  %v3132 = vadd.f32 %v3060, %v3073
  %v3133 = vadd.f32 %v3061, %v3073
  %v3134 = vadd.f32 %v3062, %v3073
  %v3135 = vadd.f32 %v3063, %v3073
  %v3136 = vadd.f32 %v3064, %v3073
  %v3137 = vadd.f32 %v3065, %v3073
  %v3138 = vadd.f32 %v3066, %v3073
  %v3139 = vadd.f32 %v3067, %v3073
  %v3206 = vrot.slane %v3075, 7
  %v3207 = vsel %vm2559, %v3206, %v3074
  %v3208 = vrot.slane %v3076, 6
  %v3209 = vsel %vm2562, %v3208, %v3207
  %v3210 = vrot.slane %v3077, 5
  %v3211 = vsel %vm2565, %v3210, %v3209
  %v3212 = vrot.slane %v3078, 4
  %v3213 = vsel %vm2568, %v3212, %v3211
  %v3214 = vrot.slane %v3079, 3
  %v3215 = vsel %vm2571, %v3214, %v3213
  %v3216 = vrot.slane %v3080, 2
  %v3217 = vsel %vm2574, %v3216, %v3215
  %v3218 = vrot.slane %v3081, 1
  %v3219 = vsel %vm2577, %v3218, %v3217
  %v3220 = vrot.slane %v3083, 7
  %v3221 = vsel %vm2559, %v3220, %v3082
  %v3222 = vrot.slane %v3084, 6
  %v3223 = vsel %vm2562, %v3222, %v3221
  %v3224 = vrot.slane %v3085, 5
  %v3225 = vsel %vm2565, %v3224, %v3223
  %v3226 = vrot.slane %v3086, 4
  %v3227 = vsel %vm2568, %v3226, %v3225
  %v3228 = vrot.slane %v3087, 3
  %v3229 = vsel %vm2571, %v3228, %v3227
  %v3230 = vrot.slane %v3088, 2
  %v3231 = vsel %vm2574, %v3230, %v3229
  %v3232 = vrot.slane %v3089, 1
  %v3233 = vsel %vm2577, %v3232, %v3231
  %v3234 = vrot.slane %v3091, 7
  %v3235 = vsel %vm2559, %v3234, %v3090
  %v3236 = vrot.slane %v3092, 6
  %v3237 = vsel %vm2562, %v3236, %v3235
  %v3238 = vrot.slane %v3093, 5
  %v3239 = vsel %vm2565, %v3238, %v3237
  %v3240 = vrot.slane %v3094, 4
  %v3241 = vsel %vm2568, %v3240, %v3239
  %v3242 = vrot.slane %v3095, 3
  %v3243 = vsel %vm2571, %v3242, %v3241
  %v3244 = vrot.slane %v3096, 2
  %v3245 = vsel %vm2574, %v3244, %v3243
  %v3246 = vrot.slane %v3097, 1
  %v3247 = vsel %vm2577, %v3246, %v3245
  %v3248 = vrot.slane %v3099, 7
  %v3249 = vsel %vm2559, %v3248, %v3098
  %v3250 = vrot.slane %v3100, 6
  %v3251 = vsel %vm2562, %v3250, %v3249
  %v3252 = vrot.slane %v3101, 5
  %v3253 = vsel %vm2565, %v3252, %v3251
  %v3254 = vrot.slane %v3102, 4
  %v3255 = vsel %vm2568, %v3254, %v3253
  %v3256 = vrot.slane %v3103, 3
  %v3257 = vsel %vm2571, %v3256, %v3255
  %v3258 = vrot.slane %v3104, 2
  %v3259 = vsel %vm2574, %v3258, %v3257
  %v3260 = vrot.slane %v3105, 1
  %v3261 = vsel %vm2577, %v3260, %v3259
  %v3262 = vrot.slane %v3108, 7
  %v3263 = vsel %vm2559, %v3262, %v3107
  %v3264 = vrot.slane %v3109, 6
  %v3265 = vsel %vm2562, %v3264, %v3263
  %v3266 = vrot.slane %v3110, 5
  %v3267 = vsel %vm2565, %v3266, %v3265
  %v3268 = vrot.slane %v3111, 4
  %v3269 = vsel %vm2568, %v3268, %v3267
  %v3270 = vrot.slane %v3112, 3
  %v3271 = vsel %vm2571, %v3270, %v3269
  %v3272 = vrot.slane %v3113, 2
  %v3273 = vsel %vm2574, %v3272, %v3271
  %v3274 = vrot.slane %v3114, 1
  %v3275 = vsel %vm2577, %v3274, %v3273
  %v3276 = vrot.slane %v3116, 7
  %v3277 = vsel %vm2559, %v3276, %v3115
  %v3278 = vrot.slane %v3117, 6
  %v3279 = vsel %vm2562, %v3278, %v3277
  %v3280 = vrot.slane %v3118, 5
  %v3281 = vsel %vm2565, %v3280, %v3279
  %v3282 = vrot.slane %v3119, 4
  %v3283 = vsel %vm2568, %v3282, %v3281
  %v3284 = vrot.slane %v3120, 3
  %v3285 = vsel %vm2571, %v3284, %v3283
  %v3286 = vrot.slane %v3121, 2
  %v3287 = vsel %vm2574, %v3286, %v3285
  %v3288 = vrot.slane %v3122, 1
  %v3289 = vsel %vm2577, %v3288, %v3287
  %v3290 = vrot.slane %v3124, 7
  %v3291 = vsel %vm2559, %v3290, %v3123
  %v3292 = vrot.slane %v3125, 6
  %v3293 = vsel %vm2562, %v3292, %v3291
  %v3294 = vrot.slane %v3126, 5
  %v3295 = vsel %vm2565, %v3294, %v3293
  %v3296 = vrot.slane %v3127, 4
  %v3297 = vsel %vm2568, %v3296, %v3295
  %v3298 = vrot.slane %v3128, 3
  %v3299 = vsel %vm2571, %v3298, %v3297
  %v3300 = vrot.slane %v3129, 2
  %v3301 = vsel %vm2574, %v3300, %v3299
  %v3302 = vrot.slane %v3130, 1
  %v3303 = vsel %vm2577, %v3302, %v3301
  %v3304 = vrot.slane %v3132, 7
  %v3305 = vsel %vm2559, %v3304, %v3131
  %v3306 = vrot.slane %v3133, 6
  %v3307 = vsel %vm2562, %v3306, %v3305
  %v3308 = vrot.slane %v3134, 5
  %v3309 = vsel %vm2565, %v3308, %v3307
  %v3310 = vrot.slane %v3135, 4
  %v3311 = vsel %vm2568, %v3310, %v3309
  %v3312 = vrot.slane %v3136, 3
  %v3313 = vsel %vm2571, %v3312, %v3311
  %v3314 = vrot.slane %v3137, 2
  %v3315 = vsel %vm2574, %v3314, %v3313
  %v3316 = vrot.slane %v3138, 1
  %v3317 = vsel %vm2577, %v3316, %v3315
  %v3328 = vsel %vm2688, %v3219, 0.0
  %v3329 = vsel %vm2688, %v3233, 0.0
  %v3330 = vadd.f32 %v3328, %v3329
  %v3331 = vsel %vm2688, %v3247, 0.0
  %v3332 = vadd.f32 %v3330, %v3331
  %v3333 = vsel %vm2688, %v3261, 0.0
  %v3334 = vadd.f32 %v3332, %v3333
  %vm3335 = vcmask 253952
  %v3336 = vsel %vm3335, %v3106, 0.0
  %v3337 = vadd.f32 %v3334, %v3336
  %v3338 = vrot.slane %v3337, 4
  %v3339 = vadd.f32 %v3337, %v3338
  %v3340 = vrot.slane %v3339, 2
  %v3341 = vadd.f32 %v3339, %v3340
  %v3342 = vrot.slane %v3341, 1
  %v3343 = vadd.f32 %v3341, %v3342
  %v3344 = vsel %vm2688, %v3275, 0.0
  %v3345 = vsel %vm2688, %v3289, 0.0
  %v3346 = vadd.f32 %v3344, %v3345
  %v3347 = vsel %vm2688, %v3303, 0.0
  %v3348 = vadd.f32 %v3346, %v3347
  %v3349 = vsel %vm2688, %v3317, 0.0
  %v3350 = vadd.f32 %v3348, %v3349
  %v3351 = vsel %vm3335, %v3139, 0.0
  %v3352 = vadd.f32 %v3350, %v3351
  %v3353 = vrot.slane %v3352, 4
  %v3354 = vadd.f32 %v3352, %v3353
  %v3355 = vrot.slane %v3354, 2
  %v3356 = vadd.f32 %v3354, %v3355
  %v3357 = vrot.slane %v3356, 1
  %v3358 = vadd.f32 %v3356, %v3357
  %v3359 = vmul.f32 %v3343, 0.030303031
  %v3360 = vmul.f32 %v3358, 0.030303031
  %v3361 = vrot.slane %v3074, 6
  %v3362 = vrot.slane %v3075, 5
  %v3363 = vsel %vm2565, %v3362, %v3361
  %v3364 = vrot.slane %v3076, 4
  %v3365 = vsel %vm2568, %v3364, %v3363
  %v3366 = vrot.slane %v3077, 3
  %v3367 = vsel %vm2571, %v3366, %v3365
  %v3368 = vrot.slane %v3078, 2
  %v3369 = vsel %vm2574, %v3368, %v3367
  %v3370 = vrot.slane %v3079, 1
  %v3371 = vsel %vm2577, %v3370, %v3369
  %v3372 = vrot.slane %v3081, 7
  %v3373 = vsel %vm2559, %v3372, %v3080
  %v3374 = vrot.slane %v3082, 6
  %v3375 = vsel %vm2562, %v3374, %v3373
  %v3376 = vrot.slane %v3083, 5
  %v3377 = vsel %vm2565, %v3376, %v3375
  %v3378 = vrot.slane %v3084, 4
  %v3379 = vsel %vm2568, %v3378, %v3377
  %v3380 = vrot.slane %v3085, 3
  %v3381 = vsel %vm2571, %v3380, %v3379
  %v3382 = vrot.slane %v3086, 2
  %v3383 = vsel %vm2574, %v3382, %v3381
  %v3384 = vrot.slane %v3087, 1
  %v3385 = vsel %vm2577, %v3384, %v3383
  %v3386 = vrot.slane %v3089, 7
  %v3387 = vsel %vm2559, %v3386, %v3088
  %v3388 = vrot.slane %v3090, 6
  %v3389 = vsel %vm2562, %v3388, %v3387
  %v3390 = vrot.slane %v3091, 5
  %v3391 = vsel %vm2565, %v3390, %v3389
  %v3392 = vrot.slane %v3092, 4
  %v3393 = vsel %vm2568, %v3392, %v3391
  %v3394 = vrot.slane %v3093, 3
  %v3395 = vsel %vm2571, %v3394, %v3393
  %v3396 = vrot.slane %v3094, 2
  %v3397 = vsel %vm2574, %v3396, %v3395
  %v3398 = vrot.slane %v3095, 1
  %v3399 = vsel %vm2577, %v3398, %v3397
  %v3400 = vrot.slane %v3097, 7
  %v3401 = vsel %vm2559, %v3400, %v3096
  %v3402 = vrot.slane %v3098, 6
  %v3403 = vsel %vm2562, %v3402, %v3401
  %v3404 = vrot.slane %v3099, 5
  %v3405 = vsel %vm2565, %v3404, %v3403
  %v3406 = vrot.slane %v3100, 4
  %v3407 = vsel %vm2568, %v3406, %v3405
  %v3408 = vrot.slane %v3101, 3
  %v3409 = vsel %vm2571, %v3408, %v3407
  %v3410 = vrot.slane %v3102, 2
  %v3411 = vsel %vm2574, %v3410, %v3409
  %v3412 = vrot.slane %v3103, 1
  %v3413 = vsel %vm2577, %v3412, %v3411
  %v3414 = vrot.slane %v3105, 7
  %v3415 = vsel %vm2559, %v3414, %v3104
  %v3416 = vrot.slane %v3106, 6
  %v3417 = vsel %vm2562, %v3416, %v3415
  %v3418 = vrot.slane %v3107, 6
  %v3419 = vrot.slane %v3108, 5
  %v3420 = vsel %vm2565, %v3419, %v3418
  %v3421 = vrot.slane %v3109, 4
  %v3422 = vsel %vm2568, %v3421, %v3420
  %v3423 = vrot.slane %v3110, 3
  %v3424 = vsel %vm2571, %v3423, %v3422
  %v3425 = vrot.slane %v3111, 2
  %v3426 = vsel %vm2574, %v3425, %v3424
  %v3427 = vrot.slane %v3112, 1
  %v3428 = vsel %vm2577, %v3427, %v3426
  %v3429 = vrot.slane %v3114, 7
  %v3430 = vsel %vm2559, %v3429, %v3113
  %v3431 = vrot.slane %v3115, 6
  %v3432 = vsel %vm2562, %v3431, %v3430
  %v3433 = vrot.slane %v3116, 5
  %v3434 = vsel %vm2565, %v3433, %v3432
  %v3435 = vrot.slane %v3117, 4
  %v3436 = vsel %vm2568, %v3435, %v3434
  %v3437 = vrot.slane %v3118, 3
  %v3438 = vsel %vm2571, %v3437, %v3436
  %v3439 = vrot.slane %v3119, 2
  %v3440 = vsel %vm2574, %v3439, %v3438
  %v3441 = vrot.slane %v3120, 1
  %v3442 = vsel %vm2577, %v3441, %v3440
  %v3443 = vrot.slane %v3122, 7
  %v3444 = vsel %vm2559, %v3443, %v3121
  %v3445 = vrot.slane %v3123, 6
  %v3446 = vsel %vm2562, %v3445, %v3444
  %v3447 = vrot.slane %v3124, 5
  %v3448 = vsel %vm2565, %v3447, %v3446
  %v3449 = vrot.slane %v3125, 4
  %v3450 = vsel %vm2568, %v3449, %v3448
  %v3451 = vrot.slane %v3126, 3
  %v3452 = vsel %vm2571, %v3451, %v3450
  %v3453 = vrot.slane %v3127, 2
  %v3454 = vsel %vm2574, %v3453, %v3452
  %v3455 = vrot.slane %v3128, 1
  %v3456 = vsel %vm2577, %v3455, %v3454
  %v3457 = vrot.slane %v3130, 7
  %v3458 = vsel %vm2559, %v3457, %v3129
  %v3459 = vrot.slane %v3131, 6
  %v3460 = vsel %vm2562, %v3459, %v3458
  %v3461 = vrot.slane %v3132, 5
  %v3462 = vsel %vm2565, %v3461, %v3460
  %v3463 = vrot.slane %v3133, 4
  %v3464 = vsel %vm2568, %v3463, %v3462
  %v3465 = vrot.slane %v3134, 3
  %v3466 = vsel %vm2571, %v3465, %v3464
  %v3467 = vrot.slane %v3135, 2
  %v3468 = vsel %vm2574, %v3467, %v3466
  %v3469 = vrot.slane %v3136, 1
  %v3470 = vsel %vm2577, %v3469, %v3468
  %v3471 = vrot.slane %v3138, 7
  %v3472 = vsel %vm2559, %v3471, %v3137
  %v3473 = vrot.slane %v3139, 6
  %v3474 = vsel %vm2562, %v3473, %v3472
  %v3485 = vsel %vm280, 0.0, %v3371
  %v3486 = vsel %vm280, 0.0, %v3428
  %vm3487 = vcmask 1042432
  %v3488 = vsel %vm3487, %v3417, 0.0
  %v3489 = vsel %vm3487, %v3474, 0.0
  %vm3494 = vcmask 1046528
  %v3495 = vrot.slane %v3485, 1
  %v3496 = vrot.slane %v3385, 1
  %v3497 = vsel %vm3494, %v3495, %v3496
  %v3498 = vrot.slane %v3399, 1
  %v3499 = vsel %vm3494, %v3496, %v3498
  %v3500 = vrot.slane %v3413, 1
  %v3501 = vsel %vm3494, %v3498, %v3500
  %v3502 = vrot.slane %v3488, 1
  %v3503 = vsel %vm3494, %v3500, %v3502
  %v3504 = vrot.slane %v3486, 1
  %v3505 = vrot.slane %v3442, 1
  %v3506 = vsel %vm3494, %v3504, %v3505
  %v3507 = vrot.slane %v3456, 1
  %v3508 = vsel %vm3494, %v3505, %v3507
  %v3509 = vrot.slane %v3470, 1
  %v3510 = vsel %vm3494, %v3507, %v3509
  %v3511 = vrot.slane %v3489, 1
  %v3512 = vsel %vm3494, %v3509, %v3511
  %3513 = vrot.lane.b32.xlu0 %v3497, 32
  %v3514 = vpop.permute.xlu0 %3513
  %3515 = vrot.lane.b32.xlu0 %v3499, 32
  %v3516 = vpop.permute.xlu0 %3515
  %3517 = vrot.lane.b32.xlu0 %v3501, 32
  %v3518 = vpop.permute.xlu0 %3517
  %3519 = vrot.lane.b32.xlu0 %v3503, 32
  %v3520 = vpop.permute.xlu0 %3519
  %3521 = vrot.lane.b32.xlu0 %v3502, 32
  %v3522 = vpop.permute.xlu0 %3521
  %3523 = vrot.lane.b32.xlu0 %v3506, 32
  %v3524 = vpop.permute.xlu0 %3523
  %3525 = vrot.lane.b32.xlu0 %v3508, 32
  %v3526 = vpop.permute.xlu0 %3525
  %3527 = vrot.lane.b32.xlu0 %v3510, 32
  %v3528 = vpop.permute.xlu0 %3527
  %3529 = vrot.lane.b32.xlu0 %v3512, 32
  %v3530 = vpop.permute.xlu0 %3529
  %3531 = vrot.lane.b32.xlu0 %v3511, 32
  %v3532 = vpop.permute.xlu0 %3531
  %vm3543 = vcmask 1045504
  %v3544 = vrot.slane %v3485, 2
  %v3545 = vrot.slane %v3385, 2
  %v3546 = vsel %vm3543, %v3544, %v3545
  %v3547 = vrot.slane %v3399, 2
  %v3548 = vsel %vm3543, %v3545, %v3547
  %v3549 = vrot.slane %v3413, 2
  %v3550 = vsel %vm3543, %v3547, %v3549
  %v3551 = vrot.slane %v3488, 2
  %v3552 = vsel %vm3543, %v3549, %v3551
  %v3553 = vrot.slane %v3486, 2
  %v3554 = vrot.slane %v3442, 2
  %v3555 = vsel %vm3543, %v3553, %v3554
  %v3556 = vrot.slane %v3456, 2
  %v3557 = vsel %vm3543, %v3554, %v3556
  %v3558 = vrot.slane %v3470, 2
  %v3559 = vsel %vm3543, %v3556, %v3558
  %v3560 = vrot.slane %v3489, 2
  %v3561 = vsel %vm3543, %v3558, %v3560
  %3562 = vrot.lane.b32.xlu0 %v3546, 64
  %v3563 = vpop.permute.xlu0 %3562
  %3564 = vrot.lane.b32.xlu0 %v3548, 64
  %v3565 = vpop.permute.xlu0 %3564
  %3566 = vrot.lane.b32.xlu0 %v3550, 64
  %v3567 = vpop.permute.xlu0 %3566
  %3568 = vrot.lane.b32.xlu0 %v3552, 64
  %v3569 = vpop.permute.xlu0 %3568
  %3570 = vrot.lane.b32.xlu0 %v3551, 64
  %v3571 = vpop.permute.xlu0 %3570
  %3572 = vrot.lane.b32.xlu0 %v3555, 64
  %v3573 = vpop.permute.xlu0 %3572
  %3574 = vrot.lane.b32.xlu0 %v3557, 64
  %v3575 = vpop.permute.xlu0 %3574
  %3576 = vrot.lane.b32.xlu0 %v3559, 64
  %v3577 = vpop.permute.xlu0 %3576
  %3578 = vrot.lane.b32.xlu0 %v3561, 64
  %v3579 = vpop.permute.xlu0 %3578
  %3580 = vrot.lane.b32.xlu0 %v3560, 64
  %v3581 = vpop.permute.xlu0 %3580
  %vm3592 = vcmask 1044480
  %v3593 = vrot.slane %v3485, 3
  %v3594 = vrot.slane %v3385, 3
  %v3595 = vsel %vm3592, %v3593, %v3594
  %v3596 = vrot.slane %v3399, 3
  %v3597 = vsel %vm3592, %v3594, %v3596
  %v3598 = vrot.slane %v3413, 3
  %v3599 = vsel %vm3592, %v3596, %v3598
  %v3600 = vrot.slane %v3488, 3
  %v3601 = vsel %vm3592, %v3598, %v3600
  %v3602 = vrot.slane %v3486, 3
  %v3603 = vrot.slane %v3442, 3
  %v3604 = vsel %vm3592, %v3602, %v3603
  %v3605 = vrot.slane %v3456, 3
  %v3606 = vsel %vm3592, %v3603, %v3605
  %v3607 = vrot.slane %v3470, 3
  %v3608 = vsel %vm3592, %v3605, %v3607
  %v3609 = vrot.slane %v3489, 3
  %v3610 = vsel %vm3592, %v3607, %v3609
  %3611 = vrot.lane.b32.xlu0 %v3595, 96
  %v3612 = vpop.permute.xlu0 %3611
  %3613 = vrot.lane.b32.xlu0 %v3597, 96
  %v3614 = vpop.permute.xlu0 %3613
  %3615 = vrot.lane.b32.xlu0 %v3599, 96
  %v3616 = vpop.permute.xlu0 %3615
  %3617 = vrot.lane.b32.xlu0 %v3601, 96
  %v3618 = vpop.permute.xlu0 %3617
  %3619 = vrot.lane.b32.xlu0 %v3600, 96
  %v3620 = vpop.permute.xlu0 %3619
  %3621 = vrot.lane.b32.xlu0 %v3604, 96
  %v3622 = vpop.permute.xlu0 %3621
  %3623 = vrot.lane.b32.xlu0 %v3606, 96
  %v3624 = vpop.permute.xlu0 %3623
  %3625 = vrot.lane.b32.xlu0 %v3608, 96
  %v3626 = vpop.permute.xlu0 %3625
  %3627 = vrot.lane.b32.xlu0 %v3610, 96
  %v3628 = vpop.permute.xlu0 %3627
  %3629 = vrot.lane.b32.xlu0 %v3609, 96
  %v3630 = vpop.permute.xlu0 %3629
  %v3641 = vsel %vm2688, %v3485, %v3514
  %v3642 = vsel %vm2688, %v3385, %v3516
  %v3643 = vsel %vm2688, %v3399, %v3518
  %v3644 = vsel %vm2688, %v3413, %v3520
  %v3645 = vsel %vm2688, %v3488, %v3522
  %v3646 = vsel %vm2688, %v3486, %v3524
  %v3647 = vsel %vm2688, %v3442, %v3526
  %v3648 = vsel %vm2688, %v3456, %v3528
  %v3649 = vsel %vm2688, %v3470, %v3530
  %v3650 = vsel %vm2688, %v3489, %v3532
  %vm3651 = vcmask 523264
  %v3652 = vsel %vm3651, %v3641, %v3563
  %v3653 = vsel %vm3651, %v3642, %v3565
  %v3654 = vsel %vm3651, %v3643, %v3567
  %v3655 = vsel %vm3651, %v3644, %v3569
  %v3656 = vsel %vm3651, %v3645, %v3571
  %v3657 = vsel %vm3651, %v3646, %v3573
  %v3658 = vsel %vm3651, %v3647, %v3575
  %v3659 = vsel %vm3651, %v3648, %v3577
  %v3660 = vsel %vm3651, %v3649, %v3579
  %v3661 = vsel %vm3651, %v3650, %v3581
  %vm3662 = vcmask 785408
  %v3663 = vsel %vm3662, %v3652, %v3612
  %v3664 = vsel %vm3662, %v3653, %v3614
  %v3665 = vsel %vm3662, %v3654, %v3616
  %v3666 = vsel %vm3662, %v3655, %v3618
  %v3667 = vsel %vm3662, %v3656, %v3620
  %v3668 = vsel %vm3662, %v3657, %v3622
  %v3669 = vsel %vm3662, %v3658, %v3624
  %v3670 = vsel %vm3662, %v3659, %v3626
  %v3671 = vsel %vm3662, %v3660, %v3628
  %v3672 = vsel %vm3662, %v3661, %v3630
  %v3673 = vpack.c.bf16 %v3664, %v3663
  %v3674 = vpack.c.bf16 %v3666, %v3665
  %v3675 = vpack.c.bf16 %v3667, %v3667
  %v3676 = vpack.c.bf16 %v3669, %v3668
  %v3677 = vpack.c.bf16 %v3671, %v3670
  %v3678 = vpack.c.bf16 %v3672, %v3672
  %v3685 = vcombine.high %v3673, %v3673
  %v3687 = vunpack.c.l.s4 1966171168
  %v3688 = vunpack.c.0.s8 %v3687
  %v3689 = vlaneseq
  %v3690 = vshrl.u32 %v3689, 7
  %v3691 = vsub.s32 %v3688, %v3690
  %v3692 = vrot.slane %v3673, %v3691
  %v3694 = vunpack.c.l.s4 1966171168
  %v3695 = vunpack.c.0.s8 %v3694
  %v3696 = vlaneseq
  %v3697 = vshrl.u32 %v3696, 7
  %v3698 = vsub.s32 %v3695, %v3697
  %v3699 = vrot.slane %v3685, %v3698
  %v3700 = vcombine.high %v3692, %v3692
  %v3701 = vcombine.high %v3699, %v3699
  %v3703 = vunpack.c.l.s4 1966171168
  %v3704 = vunpack.c.0.s8 %v3703
  %v3705 = vlaneseq
  %v3706 = vshrl.u32 %v3705, 7
  %v3707 = vsub.s32 %v3704, %v3706
  %v3708 = vrot.slane %v3692, %v3707
  %v3710 = vunpack.c.l.s4 1966171168
  %v3711 = vunpack.c.0.s8 %v3710
  %v3712 = vlaneseq
  %v3713 = vshrl.u32 %v3712, 7
  %v3714 = vsub.s32 %v3711, %v3713
  %v3715 = vrot.slane %v3699, %v3714
  %v3717 = vunpack.c.l.s4 1966171168
  %v3718 = vunpack.c.0.s8 %v3717
  %v3719 = vlaneseq
  %v3720 = vshrl.u32 %v3719, 7
  %v3721 = vsub.s32 %v3718, %v3720
  %v3722 = vrot.slane %v3700, %v3721
  %v3724 = vunpack.c.l.s4 1966171168
  %v3725 = vunpack.c.0.s8 %v3724
  %v3726 = vlaneseq
  %v3727 = vshrl.u32 %v3726, 7
  %v3728 = vsub.s32 %v3725, %v3727
  %v3729 = vrot.slane %v3701, %v3728
  %v3730 = vcombine.high %v3708, %v3708
  %v3731 = vcombine.high %v3715, %v3715
  %v3732 = vcombine.high %v3722, %v3722
  %v3733 = vcombine.high %v3729, %v3729
  %v3734 = vcombine.high %v3674, %v3674
  %v3736 = vunpack.c.l.s4 1966171168
  %v3737 = vunpack.c.0.s8 %v3736
  %v3738 = vlaneseq
  %v3739 = vshrl.u32 %v3738, 7
  %v3740 = vsub.s32 %v3737, %v3739
  %v3741 = vrot.slane %v3674, %v3740
  %v3743 = vunpack.c.l.s4 1966171168
  %v3744 = vunpack.c.0.s8 %v3743
  %v3745 = vlaneseq
  %v3746 = vshrl.u32 %v3745, 7
  %v3747 = vsub.s32 %v3744, %v3746
  %v3748 = vrot.slane %v3734, %v3747
  %v3749 = vcombine.high %v3741, %v3741
  %v3750 = vcombine.high %v3748, %v3748
  %v3752 = vunpack.c.l.s4 1966171168
  %v3753 = vunpack.c.0.s8 %v3752
  %v3754 = vlaneseq
  %v3755 = vshrl.u32 %v3754, 7
  %v3756 = vsub.s32 %v3753, %v3755
  %v3757 = vrot.slane %v3741, %v3756
  %v3759 = vunpack.c.l.s4 1966171168
  %v3760 = vunpack.c.0.s8 %v3759
  %v3761 = vlaneseq
  %v3762 = vshrl.u32 %v3761, 7
  %v3763 = vsub.s32 %v3760, %v3762
  %v3764 = vrot.slane %v3748, %v3763
  %v3766 = vunpack.c.l.s4 1966171168
  %v3767 = vunpack.c.0.s8 %v3766
  %v3768 = vlaneseq
  %v3769 = vshrl.u32 %v3768, 7
  %v3770 = vsub.s32 %v3767, %v3769
  %v3771 = vrot.slane %v3749, %v3770
  %v3773 = vunpack.c.l.s4 1966171168
  %v3774 = vunpack.c.0.s8 %v3773
  %v3775 = vlaneseq
  %v3776 = vshrl.u32 %v3775, 7
  %v3777 = vsub.s32 %v3774, %v3776
  %v3778 = vrot.slane %v3750, %v3777
  %v3779 = vcombine.high %v3757, %v3757
  %v3780 = vcombine.high %v3764, %v3764
  %v3781 = vcombine.high %v3771, %v3771
  %v3782 = vcombine.high %v3778, %v3778
  %v3784 = vunpack.c.l.s4 1966171168
  %v3785 = vunpack.c.0.s8 %v3784
  %v3786 = vlaneseq
  %v3787 = vshrl.u32 %v3786, 7
  %v3788 = vsub.s32 %v3785, %v3787
  %v3789 = vrot.slane %v3675, %v3788
  %v3791 = vunpack.c.l.s4 1966171168
  %v3792 = vunpack.c.0.s8 %v3791
  %v3793 = vlaneseq
  %v3794 = vshrl.u32 %v3793, 7
  %v3795 = vsub.s32 %v3792, %v3794
  %v3796 = vrot.slane %v3789, %v3795
  %v3797 = vcombine.high %v3676, %v3676
  %v3799 = vunpack.c.l.s4 1966171168
  %v3800 = vunpack.c.0.s8 %v3799
  %v3801 = vlaneseq
  %v3802 = vshrl.u32 %v3801, 7
  %v3803 = vsub.s32 %v3800, %v3802
  %v3804 = vrot.slane %v3676, %v3803
  %v3806 = vunpack.c.l.s4 1966171168
  %v3807 = vunpack.c.0.s8 %v3806
  %v3808 = vlaneseq
  %v3809 = vshrl.u32 %v3808, 7
  %v3810 = vsub.s32 %v3807, %v3809
  %v3811 = vrot.slane %v3797, %v3810
  %v3812 = vcombine.high %v3804, %v3804
  %v3813 = vcombine.high %v3811, %v3811
  %v3815 = vunpack.c.l.s4 1966171168
  %v3816 = vunpack.c.0.s8 %v3815
  %v3817 = vlaneseq
  %v3818 = vshrl.u32 %v3817, 7
  %v3819 = vsub.s32 %v3816, %v3818
  %v3820 = vrot.slane %v3804, %v3819
  %v3822 = vunpack.c.l.s4 1966171168
  %v3823 = vunpack.c.0.s8 %v3822
  %v3824 = vlaneseq
  %v3825 = vshrl.u32 %v3824, 7
  %v3826 = vsub.s32 %v3823, %v3825
  %v3827 = vrot.slane %v3811, %v3826
  %v3829 = vunpack.c.l.s4 1966171168
  %v3830 = vunpack.c.0.s8 %v3829
  %v3831 = vlaneseq
  %v3832 = vshrl.u32 %v3831, 7
  %v3833 = vsub.s32 %v3830, %v3832
  %v3834 = vrot.slane %v3812, %v3833
  %v3836 = vunpack.c.l.s4 1966171168
  %v3837 = vunpack.c.0.s8 %v3836
  %v3838 = vlaneseq
  %v3839 = vshrl.u32 %v3838, 7
  %v3840 = vsub.s32 %v3837, %v3839
  %v3841 = vrot.slane %v3813, %v3840
  %v3842 = vcombine.high %v3820, %v3820
  %v3843 = vcombine.high %v3827, %v3827
  %v3844 = vcombine.high %v3834, %v3834
  %v3845 = vcombine.high %v3841, %v3841
  %v3846 = vcombine.high %v3677, %v3677
  %v3848 = vunpack.c.l.s4 1966171168
  %v3849 = vunpack.c.0.s8 %v3848
  %v3850 = vlaneseq
  %v3851 = vshrl.u32 %v3850, 7
  %v3852 = vsub.s32 %v3849, %v3851
  %v3853 = vrot.slane %v3677, %v3852
  %v3855 = vunpack.c.l.s4 1966171168
  %v3856 = vunpack.c.0.s8 %v3855
  %v3857 = vlaneseq
  %v3858 = vshrl.u32 %v3857, 7
  %v3859 = vsub.s32 %v3856, %v3858
  %v3860 = vrot.slane %v3846, %v3859
  %v3861 = vcombine.high %v3853, %v3853
  %v3862 = vcombine.high %v3860, %v3860
  %v3864 = vunpack.c.l.s4 1966171168
  %v3865 = vunpack.c.0.s8 %v3864
  %v3866 = vlaneseq
  %v3867 = vshrl.u32 %v3866, 7
  %v3868 = vsub.s32 %v3865, %v3867
  %v3869 = vrot.slane %v3853, %v3868
  %v3871 = vunpack.c.l.s4 1966171168
  %v3872 = vunpack.c.0.s8 %v3871
  %v3873 = vlaneseq
  %v3874 = vshrl.u32 %v3873, 7
  %v3875 = vsub.s32 %v3872, %v3874
  %v3876 = vrot.slane %v3860, %v3875
  %v3878 = vunpack.c.l.s4 1966171168
  %v3879 = vunpack.c.0.s8 %v3878
  %v3880 = vlaneseq
  %v3881 = vshrl.u32 %v3880, 7
  %v3882 = vsub.s32 %v3879, %v3881
  %v3883 = vrot.slane %v3861, %v3882
  %v3885 = vunpack.c.l.s4 1966171168
  %v3886 = vunpack.c.0.s8 %v3885
  %v3887 = vlaneseq
  %v3888 = vshrl.u32 %v3887, 7
  %v3889 = vsub.s32 %v3886, %v3888
  %v3890 = vrot.slane %v3862, %v3889
  %v3891 = vcombine.high %v3869, %v3869
  %v3892 = vcombine.high %v3876, %v3876
  %v3893 = vcombine.high %v3883, %v3883
  %v3894 = vcombine.high %v3890, %v3890
  %v3896 = vunpack.c.l.s4 1966171168
  %v3897 = vunpack.c.0.s8 %v3896
  %v3898 = vlaneseq
  %v3899 = vshrl.u32 %v3898, 7
  %v3900 = vsub.s32 %v3897, %v3899
  %v3901 = vrot.slane %v3678, %v3900
  %v3903 = vunpack.c.l.s4 1966171168
  %v3904 = vunpack.c.0.s8 %v3903
  %v3905 = vlaneseq
  %v3906 = vshrl.u32 %v3905, 7
  %v3907 = vsub.s32 %v3904, %v3906
  %v3908 = vrot.slane %v3901, %v3907
  %v3909 = vld [vmem:[%s1 + $0x100] sm:$0xf]
  %v3910 = vld [vmem:[%s1 + $0x104] sm:$0xf]
  %v3911 = vld [vmem:[%s1 + $0x108] sm:$0xf]
  %v3912 = vld [vmem:[%s1 + $0x10c] sm:$0xf]
  %v3913 = vld [vmem:[%s1 + $0x110] sm:$0xf]
  %v3914 = vld [vmem:[%s1 + $0x114] sm:$0xf]
  %v3915 = vld [vmem:[%s1 + $0x118] sm:$0xf]
  %v3916 = vld [vmem:[%s1 + $0x11c] sm:$0xf]
  %v3917 = vld [vmem:[%s1 + $0x120] sm:$0xf]
  %v3918 = vld [vmem:[%s1 + $0x124] sm:$0xf]
  %v3919 = vld [vmem:[%s1 + $0x128] sm:$0xf]
  %v3920 = vld [vmem:[%s1 + $0x12c] sm:$0xf]
  %v3921 = vld [vmem:[%s1 + $0x130] sm:$0xf]
  %v3922 = vld [vmem:[%s1 + $0x134] sm:$0xf]
  %v3923 = vld [vmem:[%s1 + $0x138] sm:$0xf]
  %v3924 = vld [vmem:[%s1 + $0x13c] sm:$0xf]
  %v3925 = vcombine.low %v3708, %v3722
  %v3926 = vcombine.low %v3730, %v3732
  %v3927 = vcombine.low %v3715, %v3729
  %v3928 = vcombine.low %v3731, %v3733
  %v3930 = vunpack.c.l.s4 1966171168
  %v3931 = vunpack.c.0.s8 %v3930
  %v3932 = vlaneseq
  %v3933 = vshrl.u32 %v3932, 7
  %v3934 = vsub.s32 %v3931, %v3933
  %v3935 = vrot.slane %v3925, %v3934
  %v3937 = vunpack.c.l.s4 1966171168
  %v3938 = vunpack.c.0.s8 %v3937
  %v3939 = vlaneseq
  %v3940 = vshrl.u32 %v3939, 7
  %v3941 = vsub.s32 %v3938, %v3940
  %v3942 = vrot.slane %v3926, %v3941
  %v3944 = vunpack.c.l.s4 1966171168
  %v3945 = vunpack.c.0.s8 %v3944
  %v3946 = vlaneseq
  %v3947 = vshrl.u32 %v3946, 7
  %v3948 = vsub.s32 %v3945, %v3947
  %v3949 = vrot.slane %v3927, %v3948
  %v3951 = vunpack.c.l.s4 1966171168
  %v3952 = vunpack.c.0.s8 %v3951
  %v3953 = vlaneseq
  %v3954 = vshrl.u32 %v3953, 7
  %v3955 = vsub.s32 %v3952, %v3954
  %v3956 = vrot.slane %v3928, %v3955
  %v3957 = vcombine.low %v3935, %v3942
  %v3958 = vcombine.low %v3949, %v3956
  %v3960 = vunpack.c.l.s4 1966171168
  %v3961 = vunpack.c.0.s8 %v3960
  %v3962 = vlaneseq
  %v3963 = vshrl.u32 %v3962, 7
  %v3964 = vsub.s32 %v3961, %v3963
  %v3965 = vrot.slane %v3957, %v3964
  %v3967 = vunpack.c.l.s4 1966171168
  %v3968 = vunpack.c.0.s8 %v3967
  %v3969 = vlaneseq
  %v3970 = vshrl.u32 %v3969, 7
  %v3971 = vsub.s32 %v3968, %v3970
  %v3972 = vrot.slane %v3958, %v3971
  %v3973 = vcombine.low %v3965, %v3972
  %v3974 = vcombine.low %v3757, %v3771
  %v3975 = vcombine.low %v3779, %v3781
  %v3976 = vcombine.low %v3764, %v3778
  %v3977 = vcombine.low %v3780, %v3782
  %v3979 = vunpack.c.l.s4 1966171168
  %v3980 = vunpack.c.0.s8 %v3979
  %v3981 = vlaneseq
  %v3982 = vshrl.u32 %v3981, 7
  %v3983 = vsub.s32 %v3980, %v3982
  %v3984 = vrot.slane %v3974, %v3983
  %v3986 = vunpack.c.l.s4 1966171168
  %v3987 = vunpack.c.0.s8 %v3986
  %v3988 = vlaneseq
  %v3989 = vshrl.u32 %v3988, 7
  %v3990 = vsub.s32 %v3987, %v3989
  %v3991 = vrot.slane %v3975, %v3990
  %v3993 = vunpack.c.l.s4 1966171168
  %v3994 = vunpack.c.0.s8 %v3993
  %v3995 = vlaneseq
  %v3996 = vshrl.u32 %v3995, 7
  %v3997 = vsub.s32 %v3994, %v3996
  %v3998 = vrot.slane %v3976, %v3997
  %v4000 = vunpack.c.l.s4 1966171168
  %v4001 = vunpack.c.0.s8 %v4000
  %v4002 = vlaneseq
  %v4003 = vshrl.u32 %v4002, 7
  %v4004 = vsub.s32 %v4001, %v4003
  %v4005 = vrot.slane %v3977, %v4004
  %v4006 = vcombine.low %v3984, %v3991
  %v4007 = vcombine.low %v3998, %v4005
  %v4009 = vunpack.c.l.s4 1966171168
  %v4010 = vunpack.c.0.s8 %v4009
  %v4011 = vlaneseq
  %v4012 = vshrl.u32 %v4011, 7
  %v4013 = vsub.s32 %v4010, %v4012
  %v4014 = vrot.slane %v4006, %v4013
  %v4016 = vunpack.c.l.s4 1966171168
  %v4017 = vunpack.c.0.s8 %v4016
  %v4018 = vlaneseq
  %v4019 = vshrl.u32 %v4018, 7
  %v4020 = vsub.s32 %v4017, %v4019
  %v4021 = vrot.slane %v4007, %v4020
  %v4022 = vcombine.low %v4014, %v4021
  %v4023 = vcombine.low %v3796, %v3820
  %v4024 = vcombine.low %v3834, %v3842
  %v4025 = vcombine.low %v3844, %v3827
  %v4026 = vcombine.low %v3841, %v3843
  %v4028 = vunpack.c.l.s4 1966171168
  %v4029 = vunpack.c.0.s8 %v4028
  %v4030 = vlaneseq
  %v4031 = vshrl.u32 %v4030, 7
  %v4032 = vsub.s32 %v4029, %v4031
  %v4033 = vrot.slane %v4023, %v4032
  %v4035 = vunpack.c.l.s4 1966171168
  %v4036 = vunpack.c.0.s8 %v4035
  %v4037 = vlaneseq
  %v4038 = vshrl.u32 %v4037, 7
  %v4039 = vsub.s32 %v4036, %v4038
  %v4040 = vrot.slane %v4024, %v4039
  %v4042 = vunpack.c.l.s4 1966171168
  %v4043 = vunpack.c.0.s8 %v4042
  %v4044 = vlaneseq
  %v4045 = vshrl.u32 %v4044, 7
  %v4046 = vsub.s32 %v4043, %v4045
  %v4047 = vrot.slane %v4025, %v4046
  %v4049 = vunpack.c.l.s4 1966171168
  %v4050 = vunpack.c.0.s8 %v4049
  %v4051 = vlaneseq
  %v4052 = vshrl.u32 %v4051, 7
  %v4053 = vsub.s32 %v4050, %v4052
  %v4054 = vrot.slane %v4026, %v4053
  %v4055 = vcombine.low %v4033, %v4040
  %v4056 = vcombine.low %v4047, %v4054
  %v4058 = vunpack.c.l.s4 1966171168
  %v4059 = vunpack.c.0.s8 %v4058
  %v4060 = vlaneseq
  %v4061 = vshrl.u32 %v4060, 7
  %v4062 = vsub.s32 %v4059, %v4061
  %v4063 = vrot.slane %v4055, %v4062
  %v4065 = vunpack.c.l.s4 1966171168
  %v4066 = vunpack.c.0.s8 %v4065
  %v4067 = vlaneseq
  %v4068 = vshrl.u32 %v4067, 7
  %v4069 = vsub.s32 %v4066, %v4068
  %v4070 = vrot.slane %v4056, %v4069
  %v4071 = vcombine.low %v4063, %v4070
  %v4072 = vcombine.low %v3845, %v3869
  %v4073 = vcombine.low %v3883, %v3891
  %v4074 = vcombine.low %v3893, %v3876
  %v4075 = vcombine.low %v3890, %v3892
  %v4077 = vunpack.c.l.s4 1966171168
  %v4078 = vunpack.c.0.s8 %v4077
  %v4079 = vlaneseq
  %v4080 = vshrl.u32 %v4079, 7
  %v4081 = vsub.s32 %v4078, %v4080
  %v4082 = vrot.slane %v4072, %v4081
  %v4084 = vunpack.c.l.s4 1966171168
  %v4085 = vunpack.c.0.s8 %v4084
  %v4086 = vlaneseq
  %v4087 = vshrl.u32 %v4086, 7
  %v4088 = vsub.s32 %v4085, %v4087
  %v4089 = vrot.slane %v4073, %v4088
  %v4091 = vunpack.c.l.s4 1966171168
  %v4092 = vunpack.c.0.s8 %v4091
  %v4093 = vlaneseq
  %v4094 = vshrl.u32 %v4093, 7
  %v4095 = vsub.s32 %v4092, %v4094
  %v4096 = vrot.slane %v4074, %v4095
  %v4098 = vunpack.c.l.s4 1966171168
  %v4099 = vunpack.c.0.s8 %v4098
  %v4100 = vlaneseq
  %v4101 = vshrl.u32 %v4100, 7
  %v4102 = vsub.s32 %v4099, %v4101
  %v4103 = vrot.slane %v4075, %v4102
  %v4104 = vcombine.low %v4082, %v4089
  %v4105 = vcombine.low %v4096, %v4103
  %v4107 = vunpack.c.l.s4 1966171168
  %v4108 = vunpack.c.0.s8 %v4107
  %v4109 = vlaneseq
  %v4110 = vshrl.u32 %v4109, 7
  %v4111 = vsub.s32 %v4108, %v4110
  %v4112 = vrot.slane %v4104, %v4111
  %v4114 = vunpack.c.l.s4 1966171168
  %v4115 = vunpack.c.0.s8 %v4114
  %v4116 = vlaneseq
  %v4117 = vshrl.u32 %v4116, 7
  %v4118 = vsub.s32 %v4115, %v4117
  %v4119 = vrot.slane %v4105, %v4118
  %v4120 = vcombine.low %v4112, %v4119
  %v4121 = vcombine.low %v3894, %v3908
  %v4123 = vunpack.c.l.s4 1966171168
  %v4124 = vunpack.c.0.s8 %v4123
  %v4125 = vlaneseq
  %v4126 = vshrl.u32 %v4125, 7
  %v4127 = vsub.s32 %v4124, %v4126
  %v4128 = vrot.slane %v4121, %v4127
  %v4130 = vunpack.c.l.s4 1966171168
  %v4131 = vunpack.c.0.s8 %v4130
  %v4132 = vlaneseq
  %v4133 = vshrl.u32 %v4132, 7
  %v4134 = vsub.s32 %v4131, %v4133
  %v4135 = vrot.slane %v4128, %v4134
  %v4157 = vunpack.c.l.b16 %v3909
  %v4158 = vunpack.c.l.b16 %v3910
  %v4159 = vunpack.c.l.b16 %v3911
  %v4160 = vunpack.c.l.b16 %v3912
  %v4161 = vunpack.c.l.b16 %v3913
  %v4162 = vunpack.c.l.b16 %v3914
  %v4163 = vunpack.c.l.b16 %v3915
  %v4164 = vunpack.c.l.b16 %v3916
  %v4165 = vunpack.c.l.b16 %v3917
  %v4166 = vunpack.c.l.b16 %v3918
  %v4167 = vunpack.c.l.b16 %v3919
  %v4168 = vunpack.c.l.b16 %v3920
  %v4169 = vunpack.c.l.b16 %v3921
  %v4170 = vunpack.c.l.b16 %v3922
  %v4171 = vunpack.c.l.b16 %v3923
  %v4172 = vunpack.c.l.b16 %v3924
  %v4173 = vpack.c.b16 %v4158, %v4157
  %v4174 = vpack.c.b16 %v4160, %v4159
  %v4175 = vpack.c.b16 %v4162, %v4161
  %v4176 = vpack.c.b16 %v4164, %v4163
  %v4177 = vpack.c.b16 %v4166, %v4165
  %v4178 = vpack.c.b16 %v4168, %v4167
  %v4179 = vpack.c.b16 %v4170, %v4169
  %v4180 = vpack.c.b16 %v4172, %v4171
  %4189 = vmatprep.subr.bf16.mxu0 0
  %4190 = vmatpush1.bf16.msra.mxu0 %v4173
  %4191 = vmatprep.subr.bf16.mxu0 0
  %4192 = vmatpush1.bf16.msra.mxu0 %v4174
  %4193 = vmatprep.subr.bf16.mxu0 0
  %4194 = vmatpush1.bf16.msra.mxu0 %v4175
  %4195 = vmatprep.subr.bf16.mxu0 0
  %4196 = vmatpush1.bf16.msra.mxu0 %v4176
  %4197 = vmatprep.subr.bf16.mxu0 0
  %4198 = vmatpush1.bf16.msra.mxu0 %v4177
  %4199 = vmatprep.subr.bf16.mxu0 0
  %4200 = vmatpush1.bf16.msra.mxu0 %v4178
  %4201 = vmatprep.subr.bf16.mxu0 0
  %4202 = vmatpush1.bf16.msra.mxu0 %v4179
  %4203 = vmatprep.subr.bf16.mxu0 0
  %4204 = vmatpush1.bf16.msra.mxu0 %v4180
  %4205 = vmatprep.subr.bf16.mxu0 0
  %4206 = vmatpush1.bf16.msra.mxu0 0
  %4207 = vmatprep.subr.bf16.mxu0 0
  %4208 = vmatpush1.bf16.msra.mxu0 0
  %4209 = vmatprep.subr.bf16.mxu0 0
  %4210 = vmatpush1.bf16.msra.mxu0 0
  %4211 = vmatprep.subr.bf16.mxu0 0
  %4212 = vmatpush1.bf16.msra.mxu0 0
  %4213 = vmatprep.subr.bf16.mxu0 0
  %4214 = vmatpush1.bf16.msra.mxu0 0
  %4215 = vmatprep.subr.bf16.mxu0 0
  %4216 = vmatpush1.bf16.msra.mxu0 0
  %4217 = vmatprep.subr.bf16.mxu0 0
  %4218 = vmatpush1.bf16.msra.mxu0 0
  %4219 = vmatprep.subr.bf16.mxu0 0
  %4220 = vmatpush1.bf16.msra.mxu0 0
  %4221 = vmatprep.mubr.bf16.mxu0 0
  %4222 = vmatmul.mubr.bf16.gmra.mrb[0].mxu0 %v3973
  %v4223 = vpop.f32.mrb[0].mxu0
  %v4224 = vadd.f32 0.0, %v4223
  %v4225 = vpop.f32.mrb[0].mxu0
  %v4226 = vpop.f32.mrb[0].mxu0
  %v4227 = vadd.f32 0.0, %v4226
  %v4228 = vpop.f32.mrb[0].mxu0
  %4229 = vmatprep.mubr.bf16.mxu0 0
  %4230 = vmatmul.mubr.bf16.gmra.mrb[0].mxu0 %v4022
  %v4231 = vpop.f32.mrb[0].mxu0
  %v4232 = vadd.f32 0.0, %v4231
  %v4233 = vpop.f32.mrb[0].mxu0
  %v4234 = vpop.f32.mrb[0].mxu0
  %v4235 = vadd.f32 0.0, %v4234
  %v4236 = vpop.f32.mrb[0].mxu0
  %4237 = vmatprep.mubr.bf16.mxu0 0
  %4238 = vmatmul.mubr.bf16.gmra.mrb[0].mxu0 %v4071
  %v4239 = vpop.f32.mrb[0].mxu0
  %v4240 = vadd.f32 0.0, %v4239
  %v4241 = vpop.f32.mrb[0].mxu0
  %v4242 = vpop.f32.mrb[0].mxu0
  %v4243 = vadd.f32 0.0, %v4242
  %v4244 = vpop.f32.mrb[0].mxu0
  %4245 = vmatprep.mubr.bf16.mxu0 0
  %4246 = vmatmul.mubr.bf16.gmra.mrb[0].mxu0 %v4120
  %v4247 = vpop.f32.mrb[0].mxu0
  %v4248 = vadd.f32 0.0, %v4247
  %v4249 = vpop.f32.mrb[0].mxu0
  %v4250 = vpop.f32.mrb[0].mxu0
  %v4251 = vadd.f32 0.0, %v4250
  %v4252 = vpop.f32.mrb[0].mxu0
  %4253 = vmatprep.mubr.bf16.mxu0 0
  %4254 = vmatmul.mubr.bf16.gmra.mrb[0].mxu0 %v4135
  %v4255 = vpop.f32.mrb[0].mxu0
  %v4256 = vadd.f32 0.0, %v4255
  %v4257 = vpop.f32.mrb[0].mxu0
  %v4258 = vpop.f32.mrb[0].mxu0
  %v4259 = vpop.f32.mrb[0].mxu0
  %4260 = vdwg.mxu0
  %v4270 = vcombine.high %v4224, %v4224
  %v4272 = vunpack.c.l.s4 1983009808
  %v4273 = vunpack.c.0.s8 %v4272
  %v4274 = vlaneseq
  %v4275 = vshrl.u32 %v4274, 7
  %v4276 = vsub.s32 %v4273, %v4275
  %v4277 = vrot.slane %v4224, %v4276
  %v4279 = vunpack.c.l.s4 1983009808
  %v4280 = vunpack.c.0.s8 %v4279
  %v4281 = vlaneseq
  %v4282 = vshrl.u32 %v4281, 7
  %v4283 = vsub.s32 %v4280, %v4282
  %v4284 = vrot.slane %v4270, %v4283
  %v4285 = vcombine.high %v4277, %v4277
  %v4286 = vcombine.high %v4284, %v4284
  %v4287 = vcombine.high %v4227, %v4227
  %v4289 = vunpack.c.l.s4 1983009808
  %v4290 = vunpack.c.0.s8 %v4289
  %v4291 = vlaneseq
  %v4292 = vshrl.u32 %v4291, 7
  %v4293 = vsub.s32 %v4290, %v4292
  %v4294 = vrot.slane %v4227, %v4293
  %v4296 = vunpack.c.l.s4 1983009808
  %v4297 = vunpack.c.0.s8 %v4296
  %v4298 = vlaneseq
  %v4299 = vshrl.u32 %v4298, 7
  %v4300 = vsub.s32 %v4297, %v4299
  %v4301 = vrot.slane %v4287, %v4300
  %v4302 = vcombine.high %v4294, %v4294
  %v4303 = vcombine.high %v4301, %v4301
  %v4304 = vcombine.high %v4232, %v4232
  %v4306 = vunpack.c.l.s4 1983009808
  %v4307 = vunpack.c.0.s8 %v4306
  %v4308 = vlaneseq
  %v4309 = vshrl.u32 %v4308, 7
  %v4310 = vsub.s32 %v4307, %v4309
  %v4311 = vrot.slane %v4232, %v4310
  %v4313 = vunpack.c.l.s4 1983009808
  %v4314 = vunpack.c.0.s8 %v4313
  %v4315 = vlaneseq
  %v4316 = vshrl.u32 %v4315, 7
  %v4317 = vsub.s32 %v4314, %v4316
  %v4318 = vrot.slane %v4304, %v4317
  %v4319 = vcombine.high %v4311, %v4311
  %v4320 = vcombine.high %v4318, %v4318
  %v4321 = vcombine.high %v4235, %v4235
  %v4323 = vunpack.c.l.s4 1983009808
  %v4324 = vunpack.c.0.s8 %v4323
  %v4325 = vlaneseq
  %v4326 = vshrl.u32 %v4325, 7
  %v4327 = vsub.s32 %v4324, %v4326
  %v4328 = vrot.slane %v4235, %v4327
  %v4330 = vunpack.c.l.s4 1983009808
  %v4331 = vunpack.c.0.s8 %v4330
  %v4332 = vlaneseq
  %v4333 = vshrl.u32 %v4332, 7
  %v4334 = vsub.s32 %v4331, %v4333
  %v4335 = vrot.slane %v4321, %v4334
  %v4336 = vcombine.high %v4328, %v4328
  %v4337 = vcombine.high %v4335, %v4335
  %v4338 = vcombine.high %v4240, %v4240
  %v4340 = vunpack.c.l.s4 1983009808
  %v4341 = vunpack.c.0.s8 %v4340
  %v4342 = vlaneseq
  %v4343 = vshrl.u32 %v4342, 7
  %v4344 = vsub.s32 %v4341, %v4343
  %v4345 = vrot.slane %v4240, %v4344
  %v4347 = vunpack.c.l.s4 1983009808
  %v4348 = vunpack.c.0.s8 %v4347
  %v4349 = vlaneseq
  %v4350 = vshrl.u32 %v4349, 7
  %v4351 = vsub.s32 %v4348, %v4350
  %v4352 = vrot.slane %v4338, %v4351
  %v4353 = vcombine.high %v4345, %v4345
  %v4354 = vcombine.high %v4352, %v4352
  %v4355 = vcombine.high %v4243, %v4243
  %v4357 = vunpack.c.l.s4 1983009808
  %v4358 = vunpack.c.0.s8 %v4357
  %v4359 = vlaneseq
  %v4360 = vshrl.u32 %v4359, 7
  %v4361 = vsub.s32 %v4358, %v4360
  %v4362 = vrot.slane %v4243, %v4361
  %v4364 = vunpack.c.l.s4 1983009808
  %v4365 = vunpack.c.0.s8 %v4364
  %v4366 = vlaneseq
  %v4367 = vshrl.u32 %v4366, 7
  %v4368 = vsub.s32 %v4365, %v4367
  %v4369 = vrot.slane %v4355, %v4368
  %v4370 = vcombine.high %v4362, %v4362
  %v4371 = vcombine.high %v4369, %v4369
  %v4372 = vcombine.high %v4248, %v4248
  %v4374 = vunpack.c.l.s4 1983009808
  %v4375 = vunpack.c.0.s8 %v4374
  %v4376 = vlaneseq
  %v4377 = vshrl.u32 %v4376, 7
  %v4378 = vsub.s32 %v4375, %v4377
  %v4379 = vrot.slane %v4248, %v4378
  %v4381 = vunpack.c.l.s4 1983009808
  %v4382 = vunpack.c.0.s8 %v4381
  %v4383 = vlaneseq
  %v4384 = vshrl.u32 %v4383, 7
  %v4385 = vsub.s32 %v4382, %v4384
  %v4386 = vrot.slane %v4372, %v4385
  %v4387 = vcombine.high %v4379, %v4379
  %v4388 = vcombine.high %v4386, %v4386
  %v4389 = vcombine.high %v4251, %v4251
  %v4391 = vunpack.c.l.s4 1983009808
  %v4392 = vunpack.c.0.s8 %v4391
  %v4393 = vlaneseq
  %v4394 = vshrl.u32 %v4393, 7
  %v4395 = vsub.s32 %v4392, %v4394
  %v4396 = vrot.slane %v4251, %v4395
  %v4398 = vunpack.c.l.s4 1983009808
  %v4399 = vunpack.c.0.s8 %v4398
  %v4400 = vlaneseq
  %v4401 = vshrl.u32 %v4400, 7
  %v4402 = vsub.s32 %v4399, %v4401
  %v4403 = vrot.slane %v4389, %v4402
  %v4404 = vcombine.high %v4396, %v4396
  %v4405 = vcombine.high %v4403, %v4403
  %v4407 = vunpack.c.l.s4 1983009808
  %v4408 = vunpack.c.0.s8 %v4407
  %v4409 = vlaneseq
  %v4410 = vshrl.u32 %v4409, 7
  %v4411 = vsub.s32 %v4408, %v4410
  %v4412 = vrot.slane %v4256, %v4411
  %v4413 = vcombine.low %v4277, %v4285
  %v4415 = vunpack.c.l.s4 1983009808
  %v4416 = vunpack.c.0.s8 %v4415
  %v4417 = vlaneseq
  %v4418 = vshrl.u32 %v4417, 7
  %v4419 = vsub.s32 %v4416, %v4418
  %v4420 = vrot.slane %v4413, %v4419
  %v4421 = vcombine.low %v4284, %v4286
  %v4423 = vunpack.c.l.s4 1983009808
  %v4424 = vunpack.c.0.s8 %v4423
  %v4425 = vlaneseq
  %v4426 = vshrl.u32 %v4425, 7
  %v4427 = vsub.s32 %v4424, %v4426
  %v4428 = vrot.slane %v4421, %v4427
  %v4429 = vcombine.low %v4294, %v4302
  %v4431 = vunpack.c.l.s4 1983009808
  %v4432 = vunpack.c.0.s8 %v4431
  %v4433 = vlaneseq
  %v4434 = vshrl.u32 %v4433, 7
  %v4435 = vsub.s32 %v4432, %v4434
  %v4436 = vrot.slane %v4429, %v4435
  %v4437 = vcombine.low %v4301, %v4303
  %v4439 = vunpack.c.l.s4 1983009808
  %v4440 = vunpack.c.0.s8 %v4439
  %v4441 = vlaneseq
  %v4442 = vshrl.u32 %v4441, 7
  %v4443 = vsub.s32 %v4440, %v4442
  %v4444 = vrot.slane %v4437, %v4443
  %v4445 = vcombine.low %v4311, %v4319
  %v4447 = vunpack.c.l.s4 1983009808
  %v4448 = vunpack.c.0.s8 %v4447
  %v4449 = vlaneseq
  %v4450 = vshrl.u32 %v4449, 7
  %v4451 = vsub.s32 %v4448, %v4450
  %v4452 = vrot.slane %v4445, %v4451
  %v4453 = vcombine.low %v4318, %v4320
  %v4455 = vunpack.c.l.s4 1983009808
  %v4456 = vunpack.c.0.s8 %v4455
  %v4457 = vlaneseq
  %v4458 = vshrl.u32 %v4457, 7
  %v4459 = vsub.s32 %v4456, %v4458
  %v4460 = vrot.slane %v4453, %v4459
  %v4461 = vcombine.low %v4328, %v4336
  %v4463 = vunpack.c.l.s4 1983009808
  %v4464 = vunpack.c.0.s8 %v4463
  %v4465 = vlaneseq
  %v4466 = vshrl.u32 %v4465, 7
  %v4467 = vsub.s32 %v4464, %v4466
  %v4468 = vrot.slane %v4461, %v4467
  %v4469 = vcombine.low %v4335, %v4337
  %v4471 = vunpack.c.l.s4 1983009808
  %v4472 = vunpack.c.0.s8 %v4471
  %v4473 = vlaneseq
  %v4474 = vshrl.u32 %v4473, 7
  %v4475 = vsub.s32 %v4472, %v4474
  %v4476 = vrot.slane %v4469, %v4475
  %v4477 = vcombine.low %v4353, %v4352
  %v4479 = vunpack.c.l.s4 1983009808
  %v4480 = vunpack.c.0.s8 %v4479
  %v4481 = vlaneseq
  %v4482 = vshrl.u32 %v4481, 7
  %v4483 = vsub.s32 %v4480, %v4482
  %v4484 = vrot.slane %v4477, %v4483
  %v4485 = vcombine.low %v4354, %v4362
  %v4487 = vunpack.c.l.s4 1983009808
  %v4488 = vunpack.c.0.s8 %v4487
  %v4489 = vlaneseq
  %v4490 = vshrl.u32 %v4489, 7
  %v4491 = vsub.s32 %v4488, %v4490
  %v4492 = vrot.slane %v4485, %v4491
  %v4493 = vcombine.low %v4370, %v4369
  %v4495 = vunpack.c.l.s4 1983009808
  %v4496 = vunpack.c.0.s8 %v4495
  %v4497 = vlaneseq
  %v4498 = vshrl.u32 %v4497, 7
  %v4499 = vsub.s32 %v4496, %v4498
  %v4500 = vrot.slane %v4493, %v4499
  %v4501 = vcombine.low %v4371, %v4379
  %v4503 = vunpack.c.l.s4 1983009808
  %v4504 = vunpack.c.0.s8 %v4503
  %v4505 = vlaneseq
  %v4506 = vshrl.u32 %v4505, 7
  %v4507 = vsub.s32 %v4504, %v4506
  %v4508 = vrot.slane %v4501, %v4507
  %v4509 = vcombine.low %v4387, %v4386
  %v4511 = vunpack.c.l.s4 1983009808
  %v4512 = vunpack.c.0.s8 %v4511
  %v4513 = vlaneseq
  %v4514 = vshrl.u32 %v4513, 7
  %v4515 = vsub.s32 %v4512, %v4514
  %v4516 = vrot.slane %v4509, %v4515
  %v4517 = vcombine.low %v4388, %v4396
  %v4519 = vunpack.c.l.s4 1983009808
  %v4520 = vunpack.c.0.s8 %v4519
  %v4521 = vlaneseq
  %v4522 = vshrl.u32 %v4521, 7
  %v4523 = vsub.s32 %v4520, %v4522
  %v4524 = vrot.slane %v4517, %v4523
  %v4525 = vcombine.low %v4404, %v4403
  %v4527 = vunpack.c.l.s4 1983009808
  %v4528 = vunpack.c.0.s8 %v4527
  %v4529 = vlaneseq
  %v4530 = vshrl.u32 %v4529, 7
  %v4531 = vsub.s32 %v4528, %v4530
  %v4532 = vrot.slane %v4525, %v4531
  %v4533 = vcombine.low %v4405, %v4412
  %v4535 = vunpack.c.l.s4 1983009808
  %v4536 = vunpack.c.0.s8 %v4535
  %v4537 = vlaneseq
  %v4538 = vshrl.u32 %v4537, 7
  %v4539 = vsub.s32 %v4536, %v4538
  %v4540 = vrot.slane %v4533, %v4539
  %v4557 = vsel %vm1890, %v4420, -inf
  %v4558 = vrot.slane %v4557, 4
  %v4559 = vmax.f32 %v4557, %v4558
  %v4560 = vrot.slane %v4559, 2
  %v4561 = vmax.f32 %v4559, %v4560
  %v4562 = vrot.slane %v4561, 1
  %v4563 = vmax.f32 %v4561, %v4562
  %v4564 = vsel %vm1890, %v4428, -inf
  %v4565 = vrot.slane %v4564, 4
  %v4566 = vmax.f32 %v4564, %v4565
  %v4567 = vrot.slane %v4566, 2
  %v4568 = vmax.f32 %v4566, %v4567
  %v4569 = vrot.slane %v4568, 1
  %v4570 = vmax.f32 %v4568, %v4569
  %v4571 = vsel %vm1890, %v4436, -inf
  %v4572 = vrot.slane %v4571, 4
  %v4573 = vmax.f32 %v4571, %v4572
  %v4574 = vrot.slane %v4573, 2
  %v4575 = vmax.f32 %v4573, %v4574
  %v4576 = vrot.slane %v4575, 1
  %v4577 = vmax.f32 %v4575, %v4576
  %v4578 = vsel %vm1890, %v4444, -inf
  %v4579 = vrot.slane %v4578, 4
  %v4580 = vmax.f32 %v4578, %v4579
  %v4581 = vrot.slane %v4580, 2
  %v4582 = vmax.f32 %v4580, %v4581
  %v4583 = vrot.slane %v4582, 1
  %v4584 = vmax.f32 %v4582, %v4583
  %v4585 = vsel %vm1890, %v4452, -inf
  %v4586 = vrot.slane %v4585, 4
  %v4587 = vmax.f32 %v4585, %v4586
  %v4588 = vrot.slane %v4587, 2
  %v4589 = vmax.f32 %v4587, %v4588
  %v4590 = vrot.slane %v4589, 1
  %v4591 = vmax.f32 %v4589, %v4590
  %v4592 = vsel %vm1890, %v4460, -inf
  %v4593 = vrot.slane %v4592, 4
  %v4594 = vmax.f32 %v4592, %v4593
  %v4595 = vrot.slane %v4594, 2
  %v4596 = vmax.f32 %v4594, %v4595
  %v4597 = vrot.slane %v4596, 1
  %v4598 = vmax.f32 %v4596, %v4597
  %v4599 = vsel %vm1890, %v4468, -inf
  %v4600 = vrot.slane %v4599, 4
  %v4601 = vmax.f32 %v4599, %v4600
  %v4602 = vrot.slane %v4601, 2
  %v4603 = vmax.f32 %v4601, %v4602
  %v4604 = vrot.slane %v4603, 1
  %v4605 = vmax.f32 %v4603, %v4604
  %v4606 = vsel %vm1890, %v4476, -inf
  %v4607 = vrot.slane %v4606, 4
  %v4608 = vmax.f32 %v4606, %v4607
  %v4609 = vrot.slane %v4608, 2
  %v4610 = vmax.f32 %v4608, %v4609
  %v4611 = vrot.slane %v4610, 1
  %v4612 = vmax.f32 %v4610, %v4611
  %v4613 = vsel %vm1890, %v4484, -inf
  %v4614 = vrot.slane %v4613, 4
  %v4615 = vmax.f32 %v4613, %v4614
  %v4616 = vrot.slane %v4615, 2
  %v4617 = vmax.f32 %v4615, %v4616
  %v4618 = vrot.slane %v4617, 1
  %v4619 = vmax.f32 %v4617, %v4618
  %v4620 = vsel %vm1890, %v4492, -inf
  %v4621 = vrot.slane %v4620, 4
  %v4622 = vmax.f32 %v4620, %v4621
  %v4623 = vrot.slane %v4622, 2
  %v4624 = vmax.f32 %v4622, %v4623
  %v4625 = vrot.slane %v4624, 1
  %v4626 = vmax.f32 %v4624, %v4625
  %v4627 = vsel %vm1890, %v4500, -inf
  %v4628 = vrot.slane %v4627, 4
  %v4629 = vmax.f32 %v4627, %v4628
  %v4630 = vrot.slane %v4629, 2
  %v4631 = vmax.f32 %v4629, %v4630
  %v4632 = vrot.slane %v4631, 1
  %v4633 = vmax.f32 %v4631, %v4632
  %v4634 = vsel %vm1890, %v4508, -inf
  %v4635 = vrot.slane %v4634, 4
  %v4636 = vmax.f32 %v4634, %v4635
  %v4637 = vrot.slane %v4636, 2
  %v4638 = vmax.f32 %v4636, %v4637
  %v4639 = vrot.slane %v4638, 1
  %v4640 = vmax.f32 %v4638, %v4639
  %v4641 = vsel %vm1890, %v4516, -inf
  %v4642 = vrot.slane %v4641, 4
  %v4643 = vmax.f32 %v4641, %v4642
  %v4644 = vrot.slane %v4643, 2
  %v4645 = vmax.f32 %v4643, %v4644
  %v4646 = vrot.slane %v4645, 1
  %v4647 = vmax.f32 %v4645, %v4646
  %v4648 = vsel %vm1890, %v4524, -inf
  %v4649 = vrot.slane %v4648, 4
  %v4650 = vmax.f32 %v4648, %v4649
  %v4651 = vrot.slane %v4650, 2
  %v4652 = vmax.f32 %v4650, %v4651
  %v4653 = vrot.slane %v4652, 1
  %v4654 = vmax.f32 %v4652, %v4653
  %v4655 = vsel %vm1890, %v4532, -inf
  %v4656 = vrot.slane %v4655, 4
  %v4657 = vmax.f32 %v4655, %v4656
  %v4658 = vrot.slane %v4657, 2
  %v4659 = vmax.f32 %v4657, %v4658
  %v4660 = vrot.slane %v4659, 1
  %v4661 = vmax.f32 %v4659, %v4660
  %v4662 = vsel %vm1890, %v4540, -inf
  %v4663 = vrot.slane %v4662, 4
  %v4664 = vmax.f32 %v4662, %v4663
  %v4665 = vrot.slane %v4664, 2
  %v4666 = vmax.f32 %v4664, %v4665
  %v4667 = vrot.slane %v4666, 1
  %v4668 = vmax.f32 %v4666, %v4667
  %v4669 = vld [vmem:[%s2 + $0x3] sm:$0x1]
  %v4670 = vld [vmem:[%s2 + $0x4] sm:$0x1]
  %v4671 = vld [vmem:[%s2 + $0x5] sm:$0x1]
  %v4672 = vlaneseq
  %v4673 = vshrl.u32 %v4672, 7
  %v4674 = vsub.s32 0, %v4673
  %v4675 = vrot.slane %v4669, %v4674
  %v4676 = vadd.f32 %v4563, %v4675
  %v4677 = vadd.f32 %v4570, %v4675
  %v4678 = vadd.f32 %v4577, %v4675
  %v4679 = vadd.f32 %v4584, %v4675
  %v4680 = vadd.f32 %v4591, %v4675
  %v4681 = vadd.f32 %v4598, %v4675
  %v4682 = vadd.f32 %v4605, %v4675
  %v4683 = vadd.f32 %v4612, %v4675
  %v4684 = vadd.f32 %v4619, %v4675
  %v4685 = vadd.f32 %v4626, %v4675
  %v4686 = vadd.f32 %v4633, %v4675
  %v4687 = vadd.f32 %v4640, %v4675
  %v4688 = vadd.f32 %v4647, %v4675
  %v4689 = vadd.f32 %v4654, %v4675
  %v4690 = vadd.f32 %v4661, %v4675
  %v4691 = vadd.f32 %v4668, %v4675
  %v4692 = vmax.f32 %v4676, 0.0
  %v4693 = vmax.f32 %v4677, 0.0
  %v4694 = vmax.f32 %v4678, 0.0
  %v4695 = vmax.f32 %v4679, 0.0
  %v4696 = vmax.f32 %v4680, 0.0
  %v4697 = vmax.f32 %v4681, 0.0
  %v4698 = vmax.f32 %v4682, 0.0
  %v4699 = vmax.f32 %v4683, 0.0
  %v4700 = vmax.f32 %v4684, 0.0
  %v4701 = vmax.f32 %v4685, 0.0
  %v4702 = vmax.f32 %v4686, 0.0
  %v4703 = vmax.f32 %v4687, 0.0
  %v4704 = vmax.f32 %v4688, 0.0
  %v4705 = vmax.f32 %v4689, 0.0
  %v4706 = vmax.f32 %v4690, 0.0
  %v4707 = vmax.f32 %v4691, 0.0
  %v4724 = vrot.slane %v4693, 7
  %v4725 = vsel %vm2559, %v4724, %v4692
  %v4726 = vrot.slane %v4694, 6
  %v4727 = vsel %vm2562, %v4726, %v4725
  %v4728 = vrot.slane %v4695, 5
  %v4729 = vsel %vm2565, %v4728, %v4727
  %v4730 = vrot.slane %v4696, 4
  %v4731 = vsel %vm2568, %v4730, %v4729
  %v4732 = vrot.slane %v4697, 3
  %v4733 = vsel %vm2571, %v4732, %v4731
  %v4734 = vrot.slane %v4698, 2
  %v4735 = vsel %vm2574, %v4734, %v4733
  %v4736 = vrot.slane %v4699, 1
  %v4737 = vsel %vm2577, %v4736, %v4735
  %v4738 = vrot.slane %v4701, 7
  %v4739 = vsel %vm2559, %v4738, %v4700
  %v4740 = vrot.slane %v4702, 6
  %v4741 = vsel %vm2562, %v4740, %v4739
  %v4742 = vrot.slane %v4703, 5
  %v4743 = vsel %vm2565, %v4742, %v4741
  %v4744 = vrot.slane %v4704, 4
  %v4745 = vsel %vm2568, %v4744, %v4743
  %v4746 = vrot.slane %v4705, 3
  %v4747 = vsel %vm2571, %v4746, %v4745
  %v4748 = vrot.slane %v4706, 2
  %v4749 = vsel %vm2574, %v4748, %v4747
  %v4750 = vrot.slane %v4707, 1
  %v4751 = vsel %vm2577, %v4750, %v4749
  %v4754 = vsel %vm2688, %v4737, 0.0
  %v4755 = vsel %vm2688, %v4751, 0.0
  %v4756 = vadd.f32 %v4754, %v4755
  %v4757 = vrot.slane %v4756, 4
  %v4758 = vadd.f32 %v4756, %v4757
  %v4759 = vrot.slane %v4758, 2
  %v4760 = vadd.f32 %v4758, %v4759
  %v4761 = vrot.slane %v4760, 1
  %v4762 = vadd.f32 %v4760, %v4761
  %v4763 = vmul.f32 %v4762, 0.0625
  %v4764 = vmul.f32 %v4692, %v4692
  %v4765 = vmul.f32 %v4693, %v4693
  %v4766 = vmul.f32 %v4694, %v4694
  %v4767 = vmul.f32 %v4695, %v4695
  %v4768 = vmul.f32 %v4696, %v4696
  %v4769 = vmul.f32 %v4697, %v4697
  %v4770 = vmul.f32 %v4698, %v4698
  %v4771 = vmul.f32 %v4699, %v4699
  %v4772 = vmul.f32 %v4700, %v4700
  %v4773 = vmul.f32 %v4701, %v4701
  %v4774 = vmul.f32 %v4702, %v4702
  %v4775 = vmul.f32 %v4703, %v4703
  %v4776 = vmul.f32 %v4704, %v4704
  %v4777 = vmul.f32 %v4705, %v4705
  %v4778 = vmul.f32 %v4706, %v4706
  %v4779 = vmul.f32 %v4707, %v4707
  %v4796 = vrot.slane %v4765, 7
  %v4797 = vsel %vm2559, %v4796, %v4764
  %v4798 = vrot.slane %v4766, 6
  %v4799 = vsel %vm2562, %v4798, %v4797
  %v4800 = vrot.slane %v4767, 5
  %v4801 = vsel %vm2565, %v4800, %v4799
  %v4802 = vrot.slane %v4768, 4
  %v4803 = vsel %vm2568, %v4802, %v4801
  %v4804 = vrot.slane %v4769, 3
  %v4805 = vsel %vm2571, %v4804, %v4803
  %v4806 = vrot.slane %v4770, 2
  %v4807 = vsel %vm2574, %v4806, %v4805
  %v4808 = vrot.slane %v4771, 1
  %v4809 = vsel %vm2577, %v4808, %v4807
  %v4810 = vrot.slane %v4773, 7
  %v4811 = vsel %vm2559, %v4810, %v4772
  %v4812 = vrot.slane %v4774, 6
  %v4813 = vsel %vm2562, %v4812, %v4811
  %v4814 = vrot.slane %v4775, 5
  %v4815 = vsel %vm2565, %v4814, %v4813
  %v4816 = vrot.slane %v4776, 4
  %v4817 = vsel %vm2568, %v4816, %v4815
  %v4818 = vrot.slane %v4777, 3
  %v4819 = vsel %vm2571, %v4818, %v4817
  %v4820 = vrot.slane %v4778, 2
  %v4821 = vsel %vm2574, %v4820, %v4819
  %v4822 = vrot.slane %v4779, 1
  %v4823 = vsel %vm2577, %v4822, %v4821
  %v4826 = vsel %vm2688, %v4809, 0.0
  %v4827 = vsel %vm2688, %v4823, 0.0
  %v4828 = vadd.f32 %v4826, %v4827
  %v4829 = vrot.slane %v4828, 4
  %v4830 = vadd.f32 %v4828, %v4829
  %v4831 = vrot.slane %v4830, 2
  %v4832 = vadd.f32 %v4830, %v4831
  %v4833 = vrot.slane %v4832, 1
  %v4834 = vadd.f32 %v4832, %v4833
  %v4835 = vmul.f32 %v4834, 0.0625
  %v4836 = vmul.f32 %v4763, %v4763
  %v4837 = vsub.f32 %v4835, %v4836
  %v4838 = vadd.f32 %v4837, 1e-05
  %v4839 = vrsqrt.pop %v4838
  %v4840 = vmul.f32 %v4670, %v4839
  %v4841 = vlaneseq
  %v4842 = vshrl.u32 %v4841, 7
  %v4843 = vsub.s32 0, %v4842
  %v4844 = vrot.slane %v4840, %v4843
  %v4845 = vmul.f32 %v4692, %v4844
  %v4846 = vmul.f32 %v4693, %v4844
  %v4847 = vmul.f32 %v4694, %v4844
  %v4848 = vmul.f32 %v4695, %v4844
  %v4849 = vmul.f32 %v4696, %v4844
  %v4850 = vmul.f32 %v4697, %v4844
  %v4851 = vmul.f32 %v4698, %v4844
  %v4852 = vmul.f32 %v4699, %v4844
  %v4853 = vmul.f32 %v4700, %v4844
  %v4854 = vmul.f32 %v4701, %v4844
  %v4855 = vmul.f32 %v4702, %v4844
  %v4856 = vmul.f32 %v4703, %v4844
  %v4857 = vmul.f32 %v4704, %v4844
  %v4858 = vmul.f32 %v4705, %v4844
  %v4859 = vmul.f32 %v4706, %v4844
  %v4860 = vmul.f32 %v4707, %v4844
  %v4861 = vmul.f32 %v4763, %v4840
  %v4862 = vsub.f32 %v4671, %v4861
  %v4863 = vlaneseq
  %v4864 = vshrl.u32 %v4863, 7
  %v4865 = vsub.s32 0, %v4864
  %v4866 = vrot.slane %v4862, %v4865
  %v4867 = vadd.f32 %v4845, %v4866
  %v4868 = vadd.f32 %v4846, %v4866
  %v4869 = vadd.f32 %v4847, %v4866
  %v4870 = vadd.f32 %v4848, %v4866
  %v4871 = vadd.f32 %v4849, %v4866
  %v4872 = vadd.f32 %v4850, %v4866
  %v4873 = vadd.f32 %v4851, %v4866
  %v4874 = vadd.f32 %v4852, %v4866
  %v4875 = vadd.f32 %v4853, %v4866
  %v4876 = vadd.f32 %v4854, %v4866
  %v4877 = vadd.f32 %v4855, %v4866
  %v4878 = vadd.f32 %v4856, %v4866
  %v4879 = vadd.f32 %v4857, %v4866
  %v4880 = vadd.f32 %v4858, %v4866
  %v4881 = vadd.f32 %v4859, %v4866
  %v4882 = vadd.f32 %v4860, %v4866
  %v4899 = vrot.slane %v4868, 7
  %v4900 = vsel %vm2559, %v4899, %v4867
  %v4901 = vrot.slane %v4869, 6
  %v4902 = vsel %vm2562, %v4901, %v4900
  %v4903 = vrot.slane %v4870, 5
  %v4904 = vsel %vm2565, %v4903, %v4902
  %v4905 = vrot.slane %v4871, 4
  %v4906 = vsel %vm2568, %v4905, %v4904
  %v4907 = vrot.slane %v4872, 3
  %v4908 = vsel %vm2571, %v4907, %v4906
  %v4909 = vrot.slane %v4873, 2
  %v4910 = vsel %vm2574, %v4909, %v4908
  %v4911 = vrot.slane %v4874, 1
  %v4912 = vsel %vm2577, %v4911, %v4910
  %v4913 = vrot.slane %v4876, 7
  %v4914 = vsel %vm2559, %v4913, %v4875
  %v4915 = vrot.slane %v4877, 6
  %v4916 = vsel %vm2562, %v4915, %v4914
  %v4917 = vrot.slane %v4878, 5
  %v4918 = vsel %vm2565, %v4917, %v4916
  %v4919 = vrot.slane %v4879, 4
  %v4920 = vsel %vm2568, %v4919, %v4918
  %v4921 = vrot.slane %v4880, 3
  %v4922 = vsel %vm2571, %v4921, %v4920
  %v4923 = vrot.slane %v4881, 2
  %v4924 = vsel %vm2574, %v4923, %v4922
  %v4925 = vrot.slane %v4882, 1
  %v4926 = vsel %vm2577, %v4925, %v4924
  %v4929 = vsel %vm2688, %v4912, 0.0
  %v4930 = vrot.slane %v4929, 4
  %v4931 = vadd.f32 %v4929, %v4930
  %v4932 = vrot.slane %v4931, 2
  %v4933 = vadd.f32 %v4931, %v4932
  %v4934 = vrot.slane %v4933, 1
  %v4935 = vadd.f32 %v4933, %v4934
  %v4936 = vsel %vm2688, %v4926, 0.0
  %v4937 = vrot.slane %v4936, 4
  %v4938 = vadd.f32 %v4936, %v4937
  %v4939 = vrot.slane %v4938, 2
  %v4940 = vadd.f32 %v4938, %v4939
  %v4941 = vrot.slane %v4940, 1
  %v4942 = vadd.f32 %v4940, %v4941
  %v4943 = vmul.f32 %v4935, 0.125
  %v4944 = vmul.f32 %v4942, 0.125
  %v4945 = vrot.slane %v4867, 6
  %v4946 = vrot.slane %v4868, 5
  %v4947 = vsel %vm2565, %v4946, %v4945
  %v4948 = vrot.slane %v4869, 4
  %v4949 = vsel %vm2568, %v4948, %v4947
  %v4950 = vrot.slane %v4870, 3
  %v4951 = vsel %vm2571, %v4950, %v4949
  %v4952 = vrot.slane %v4871, 2
  %v4953 = vsel %vm2574, %v4952, %v4951
  %v4954 = vrot.slane %v4872, 1
  %v4955 = vsel %vm2577, %v4954, %v4953
  %v4956 = vrot.slane %v4874, 7
  %v4957 = vsel %vm2559, %v4956, %v4873
  %v4958 = vrot.slane %v4875, 6
  %v4959 = vrot.slane %v4876, 5
  %v4960 = vsel %vm2565, %v4959, %v4958
  %v4961 = vrot.slane %v4877, 4
  %v4962 = vsel %vm2568, %v4961, %v4960
  %v4963 = vrot.slane %v4878, 3
  %v4964 = vsel %vm2571, %v4963, %v4962
  %v4965 = vrot.slane %v4879, 2
  %v4966 = vsel %vm2574, %v4965, %v4964
  %v4967 = vrot.slane %v4880, 1
  %v4968 = vsel %vm2577, %v4967, %v4966
  %v4969 = vrot.slane %v4882, 7
  %v4970 = vsel %vm2559, %v4969, %v4881
  %v4975 = vsel %vm280, 0.0, %v4955
  %v4976 = vsel %vm280, 0.0, %v4968
  %v4977 = vsel %vm280, %v4957, 0.0
  %v4978 = vsel %vm280, %v4970, 0.0
  %v4983 = vrot.slane %v4975, 1
  %v4984 = vrot.slane %v4977, 1
  %v4985 = vsel %vm3494, %v4983, %v4984
  %v4986 = vrot.slane %v4976, 1
  %v4987 = vrot.slane %v4978, 1
  %v4988 = vsel %vm3494, %v4986, %v4987
  %4989 = vrot.lane.b32.xlu0 %v4985, 32
  %v4990 = vpop.permute.xlu0 %4989
  %4991 = vrot.lane.b32.xlu0 %v4984, 32
  %v4992 = vpop.permute.xlu0 %4991
  %4993 = vrot.lane.b32.xlu0 %v4988, 32
  %v4994 = vpop.permute.xlu0 %4993
  %4995 = vrot.lane.b32.xlu0 %v4987, 32
  %v4996 = vpop.permute.xlu0 %4995
  %v5001 = vrot.slane %v4975, 2
  %v5002 = vrot.slane %v4977, 2
  %v5003 = vsel %vm3543, %v5001, %v5002
  %v5004 = vrot.slane %v4976, 2
  %v5005 = vrot.slane %v4978, 2
  %v5006 = vsel %vm3543, %v5004, %v5005
  %5007 = vrot.lane.b32.xlu0 %v5003, 64
  %v5008 = vpop.permute.xlu0 %5007
  %5009 = vrot.lane.b32.xlu0 %v5002, 64
  %v5010 = vpop.permute.xlu0 %5009
  %5011 = vrot.lane.b32.xlu0 %v5006, 64
  %v5012 = vpop.permute.xlu0 %5011
  %5013 = vrot.lane.b32.xlu0 %v5005, 64
  %v5014 = vpop.permute.xlu0 %5013
  %v5019 = vrot.slane %v4975, 3
  %v5020 = vrot.slane %v4977, 3
  %v5021 = vsel %vm3592, %v5019, %v5020
  %v5022 = vrot.slane %v4976, 3
  %v5023 = vrot.slane %v4978, 3
  %v5024 = vsel %vm3592, %v5022, %v5023
  %5025 = vrot.lane.b32.xlu0 %v5021, 96
  %v5026 = vpop.permute.xlu0 %5025
  %5027 = vrot.lane.b32.xlu0 %v5020, 96
  %v5028 = vpop.permute.xlu0 %5027
  %5029 = vrot.lane.b32.xlu0 %v5024, 96
  %v5030 = vpop.permute.xlu0 %5029
  %5031 = vrot.lane.b32.xlu0 %v5023, 96
  %v5032 = vpop.permute.xlu0 %5031
  %v5037 = vsel %vm2688, %v4975, %v4990
  %v5038 = vsel %vm2688, %v4977, %v4992
  %v5039 = vsel %vm2688, %v4976, %v4994
  %v5040 = vsel %vm2688, %v4978, %v4996
  %v5041 = vsel %vm3651, %v5037, %v5008
  %v5042 = vsel %vm3651, %v5038, %v5010
  %v5043 = vsel %vm3651, %v5039, %v5012
  %v5044 = vsel %vm3651, %v5040, %v5014
  %v5045 = vsel %vm3662, %v5041, %v5026
  %v5046 = vsel %vm3662, %v5042, %v5028
  %v5047 = vsel %vm3662, %v5043, %v5030
  %v5048 = vsel %vm3662, %v5044, %v5032
  %v5049 = vpack.c.bf16 %v5046, %v5045
  %v5050 = vpack.c.bf16 %v5048, %v5047
  %v5053 = vcombine.high %v5049, %v5049
  %v5055 = vunpack.c.l.s4 1966171168
  %v5056 = vunpack.c.0.s8 %v5055
  %v5057 = vlaneseq
  %v5058 = vshrl.u32 %v5057, 7
  %v5059 = vsub.s32 %v5056, %v5058
  %v5060 = vrot.slane %v5049, %v5059
  %v5062 = vunpack.c.l.s4 1966171168
  %v5063 = vunpack.c.0.s8 %v5062
  %v5064 = vlaneseq
  %v5065 = vshrl.u32 %v5064, 7
  %v5066 = vsub.s32 %v5063, %v5065
  %v5067 = vrot.slane %v5053, %v5066
  %v5068 = vcombine.high %v5060, %v5060
  %v5070 = vunpack.c.l.s4 1966171168
  %v5071 = vunpack.c.0.s8 %v5070
  %v5072 = vlaneseq
  %v5073 = vshrl.u32 %v5072, 7
  %v5074 = vsub.s32 %v5071, %v5073
  %v5075 = vrot.slane %v5060, %v5074
  %v5077 = vunpack.c.l.s4 1966171168
  %v5078 = vunpack.c.0.s8 %v5077
  %v5079 = vlaneseq
  %v5080 = vshrl.u32 %v5079, 7
  %v5081 = vsub.s32 %v5078, %v5080
  %v5082 = vrot.slane %v5067, %v5081
  %v5084 = vunpack.c.l.s4 1966171168
  %v5085 = vunpack.c.0.s8 %v5084
  %v5086 = vlaneseq
  %v5087 = vshrl.u32 %v5086, 7
  %v5088 = vsub.s32 %v5085, %v5087
  %v5089 = vrot.slane %v5068, %v5088
  %v5090 = vcombine.high %v5075, %v5075
  %v5091 = vcombine.high %v5089, %v5089
  %v5092 = vcombine.high %v5050, %v5050
  %v5094 = vunpack.c.l.s4 1966171168
  %v5095 = vunpack.c.0.s8 %v5094
  %v5096 = vlaneseq
  %v5097 = vshrl.u32 %v5096, 7
  %v5098 = vsub.s32 %v5095, %v5097
  %v5099 = vrot.slane %v5050, %v5098
  %v5101 = vunpack.c.l.s4 1966171168
  %v5102 = vunpack.c.0.s8 %v5101
  %v5103 = vlaneseq
  %v5104 = vshrl.u32 %v5103, 7
  %v5105 = vsub.s32 %v5102, %v5104
  %v5106 = vrot.slane %v5092, %v5105
  %v5107 = vcombine.high %v5099, %v5099
  %v5109 = vunpack.c.l.s4 1966171168
  %v5110 = vunpack.c.0.s8 %v5109
  %v5111 = vlaneseq
  %v5112 = vshrl.u32 %v5111, 7
  %v5113 = vsub.s32 %v5110, %v5112
  %v5114 = vrot.slane %v5099, %v5113
  %v5116 = vunpack.c.l.s4 1966171168
  %v5117 = vunpack.c.0.s8 %v5116
  %v5118 = vlaneseq
  %v5119 = vshrl.u32 %v5118, 7
  %v5120 = vsub.s32 %v5117, %v5119
  %v5121 = vrot.slane %v5106, %v5120
  %v5123 = vunpack.c.l.s4 1966171168
  %v5124 = vunpack.c.0.s8 %v5123
  %v5125 = vlaneseq
  %v5126 = vshrl.u32 %v5125, 7
  %v5127 = vsub.s32 %v5124, %v5126
  %v5128 = vrot.slane %v5107, %v5127
  %v5129 = vcombine.high %v5114, %v5114
  %v5130 = vcombine.high %v5128, %v5128
  %v5131 = vunpack.i.l.s16 %v5075
  %v5132 = vunpack.i.h.s16 %v5075
  %v5133 = vunpack.i.l.s16 %v5089
  %v5134 = vunpack.i.h.s16 %v5089
  %v5135 = vunpack.i.l.s16 %v5090
  %v5136 = vunpack.i.h.s16 %v5090
  %v5137 = vunpack.i.l.s16 %v5091
  %v5138 = vunpack.i.h.s16 %v5091
  %v5139 = vunpack.i.l.s16 %v5082
  %v5140 = vunpack.i.l.s16 %v5114
  %v5141 = vunpack.i.h.s16 %v5114
  %v5142 = vunpack.i.l.s16 %v5128
  %v5143 = vunpack.i.h.s16 %v5128
  %v5144 = vunpack.i.l.s16 %v5129
  %v5145 = vunpack.i.h.s16 %v5129
  %v5146 = vunpack.i.l.s16 %v5130
  %v5147 = vunpack.i.h.s16 %v5130
  %v5148 = vunpack.i.l.s16 %v5121
  %v5149 = vld [vmem:[%s1 + $0x140] sm:$0xf]
  %v5150 = vld [vmem:[%s1 + $0x144] sm:$0xf]
  %v5151 = vld [vmem:[%s1 + $0x148] sm:$0xf]
  %v5152 = vld [vmem:[%s1 + $0x14c] sm:$0xf]
  %v5153 = vld [vmem:[%s1 + $0x150] sm:$0xf]
  %v5154 = vld [vmem:[%s1 + $0x154] sm:$0xf]
  %v5155 = vld [vmem:[%s1 + $0x158] sm:$0xf]
  %v5156 = vld [vmem:[%s1 + $0x15c] sm:$0xf]
  %v5157 = vld [vmem:[%s1 + $0x160] sm:$0xf]
  %v5158 = vld [vmem:[%s1 + $0x164] sm:$0xf]
  %v5159 = vld [vmem:[%s1 + $0x168] sm:$0xf]
  %v5160 = vld [vmem:[%s1 + $0x16c] sm:$0xf]
  %v5161 = vld [vmem:[%s1 + $0x170] sm:$0xf]
  %v5162 = vld [vmem:[%s1 + $0x174] sm:$0xf]
  %v5163 = vld [vmem:[%s1 + $0x178] sm:$0xf]
  %v5164 = vld [vmem:[%s1 + $0x17c] sm:$0xf]
  %v5165 = vpack.i.b16 %v5132, %v5131
  %v5166 = vpack.i.b16 %v5134, %v5133
  %v5167 = vpack.i.b16 %v5136, %v5135
  %v5168 = vpack.i.b16 %v5138, %v5137
  %v5169 = vpack.i.b16 %v5140, %v5139
  %v5170 = vpack.i.b16 %v5142, %v5141
  %v5171 = vpack.i.b16 %v5144, %v5143
  %v5172 = vpack.i.b16 %v5146, %v5145
  %v5173 = vpack.i.b16 %v5148, %v5147
  %v5174 = vcombine.low %v5165, %v5166
  %v5175 = vcombine.low %v5167, %v5168
  %v5176 = vcombine.low %v5169, %v5170
  %v5177 = vcombine.low %v5171, %v5172
  %v5179 = vunpack.c.l.s4 1966171168
  %v5180 = vunpack.c.0.s8 %v5179
  %v5181 = vlaneseq
  %v5182 = vshrl.u32 %v5181, 7
  %v5183 = vsub.s32 %v5180, %v5182
  %v5184 = vrot.slane %v5174, %v5183
  %v5186 = vunpack.c.l.s4 1966171168
  %v5187 = vunpack.c.0.s8 %v5186
  %v5188 = vlaneseq
  %v5189 = vshrl.u32 %v5188, 7
  %v5190 = vsub.s32 %v5187, %v5189
  %v5191 = vrot.slane %v5175, %v5190
  %v5193 = vunpack.c.l.s4 1966171168
  %v5194 = vunpack.c.0.s8 %v5193
  %v5195 = vlaneseq
  %v5196 = vshrl.u32 %v5195, 7
  %v5197 = vsub.s32 %v5194, %v5196
  %v5198 = vrot.slane %v5176, %v5197
  %v5200 = vunpack.c.l.s4 1966171168
  %v5201 = vunpack.c.0.s8 %v5200
  %v5202 = vlaneseq
  %v5203 = vshrl.u32 %v5202, 7
  %v5204 = vsub.s32 %v5201, %v5203
  %v5205 = vrot.slane %v5177, %v5204
  %v5206 = vcombine.low %v5184, %v5191
  %v5207 = vcombine.low %v5198, %v5205
  %v5209 = vunpack.c.l.s4 1966171168
  %v5210 = vunpack.c.0.s8 %v5209
  %v5211 = vlaneseq
  %v5212 = vshrl.u32 %v5211, 7
  %v5213 = vsub.s32 %v5210, %v5212
  %v5214 = vrot.slane %v5206, %v5213
  %v5216 = vunpack.c.l.s4 1966171168
  %v5217 = vunpack.c.0.s8 %v5216
  %v5218 = vlaneseq
  %v5219 = vshrl.u32 %v5218, 7
  %v5220 = vsub.s32 %v5217, %v5219
  %v5221 = vrot.slane %v5207, %v5220
  %v5222 = vcombine.low %v5214, %v5221
  %v5224 = vunpack.c.l.s4 1966171168
  %v5225 = vunpack.c.0.s8 %v5224
  %v5226 = vlaneseq
  %v5227 = vshrl.u32 %v5226, 7
  %v5228 = vsub.s32 %v5225, %v5227
  %v5229 = vrot.slane %v5173, %v5228
  %v5231 = vunpack.c.l.s4 1966171168
  %v5232 = vunpack.c.0.s8 %v5231
  %v5233 = vlaneseq
  %v5234 = vshrl.u32 %v5233, 7
  %v5235 = vsub.s32 %v5232, %v5234
  %v5236 = vrot.slane %v5229, %v5235
  %v5255 = vunpack.c.l.b16 %v5149
  %v5256 = vunpack.c.l.b16 %v5150
  %v5257 = vunpack.c.l.b16 %v5151
  %v5258 = vunpack.c.l.b16 %v5152
  %v5259 = vunpack.c.l.b16 %v5153
  %v5260 = vunpack.c.l.b16 %v5154
  %v5261 = vunpack.c.l.b16 %v5155
  %v5262 = vunpack.c.l.b16 %v5156
  %v5263 = vunpack.c.l.b16 %v5157
  %v5264 = vunpack.c.l.b16 %v5158
  %v5265 = vunpack.c.l.b16 %v5159
  %v5266 = vunpack.c.l.b16 %v5160
  %v5267 = vunpack.c.l.b16 %v5161
  %v5268 = vunpack.c.l.b16 %v5162
  %v5269 = vunpack.c.l.b16 %v5163
  %v5270 = vunpack.c.l.b16 %v5164
  %v5271 = vpack.c.b16 %v5256, %v5255
  %v5272 = vpack.c.b16 %v5258, %v5257
  %v5273 = vpack.c.b16 %v5260, %v5259
  %v5274 = vpack.c.b16 %v5262, %v5261
  %v5275 = vpack.c.b16 %v5264, %v5263
  %v5276 = vpack.c.b16 %v5266, %v5265
  %v5277 = vpack.c.b16 %v5268, %v5267
  %v5278 = vpack.c.b16 %v5270, %v5269
  %5287 = vmatprep.subr.bf16.mxu0 0
  %5288 = vmatpush1.bf16.msra.mxu0 %v5271
  %5289 = vmatprep.subr.bf16.mxu0 0
  %5290 = vmatpush1.bf16.msra.mxu0 %v5272
  %5291 = vmatprep.subr.bf16.mxu0 0
  %5292 = vmatpush1.bf16.msra.mxu0 %v5273
  %5293 = vmatprep.subr.bf16.mxu0 0
  %5294 = vmatpush1.bf16.msra.mxu0 %v5274
  %5295 = vmatprep.subr.bf16.mxu0 0
  %5296 = vmatpush1.bf16.msra.mxu0 %v5275
  %5297 = vmatprep.subr.bf16.mxu0 0
  %5298 = vmatpush1.bf16.msra.mxu0 %v5276
  %5299 = vmatprep.subr.bf16.mxu0 0
  %5300 = vmatpush1.bf16.msra.mxu0 %v5277
  %5301 = vmatprep.subr.bf16.mxu0 0
  %5302 = vmatpush1.bf16.msra.mxu0 %v5278
  %5303 = vmatprep.subr.bf16.mxu0 0
  %5304 = vmatpush1.bf16.msra.mxu0 0
  %5305 = vmatprep.subr.bf16.mxu0 0
  %5306 = vmatpush1.bf16.msra.mxu0 0
  %5307 = vmatprep.subr.bf16.mxu0 0
  %5308 = vmatpush1.bf16.msra.mxu0 0
  %5309 = vmatprep.subr.bf16.mxu0 0
  %5310 = vmatpush1.bf16.msra.mxu0 0
  %5311 = vmatprep.subr.bf16.mxu0 0
  %5312 = vmatpush1.bf16.msra.mxu0 0
  %5313 = vmatprep.subr.bf16.mxu0 0
  %5314 = vmatpush1.bf16.msra.mxu0 0
  %5315 = vmatprep.subr.bf16.mxu0 0
  %5316 = vmatpush1.bf16.msra.mxu0 0
  %5317 = vmatprep.subr.bf16.mxu0 0
  %5318 = vmatpush1.bf16.msra.mxu0 0
  %5319 = vmatprep.mubr.bf16.mxu0 0
  %5320 = vmatmul.mubr.bf16.gmra.mrb[0].mxu0 %v5222
  %v5321 = vpop.f32.mrb[0].mxu0
  %v5322 = vadd.f32 0.0, %v5321
  %v5323 = vpop.f32.mrb[0].mxu0
  %v5324 = vpop.f32.mrb[0].mxu0
  %v5325 = vadd.f32 0.0, %v5324
  %v5326 = vpop.f32.mrb[0].mxu0
  %5327 = vmatprep.mubr.bf16.mxu0 0
  %5328 = vmatmul.mubr.bf16.gmra.mrb[0].mxu0 %v5236
  %v5329 = vpop.f32.mrb[0].mxu0
  %v5330 = vadd.f32 0.0, %v5329
  %v5331 = vpop.f32.mrb[0].mxu0
  %v5332 = vpop.f32.mrb[0].mxu0
  %v5333 = vpop.f32.mrb[0].mxu0
  %5334 = vdwg.mxu0
  %v5338 = vcombine.high %v5322, %v5322
  %v5340 = vunpack.c.l.s4 1966171168
  %v5341 = vunpack.c.0.s8 %v5340
  %v5342 = vlaneseq
  %v5343 = vshrl.u32 %v5342, 7
  %v5344 = vsub.s32 %v5341, %v5343
  %v5345 = vrot.slane %v5322, %v5344
  %v5347 = vunpack.c.l.s4 1966171168
  %v5348 = vunpack.c.0.s8 %v5347
  %v5349 = vlaneseq
  %v5350 = vshrl.u32 %v5349, 7
  %v5351 = vsub.s32 %v5348, %v5350
  %v5352 = vrot.slane %v5338, %v5351
  %v5353 = vcombine.high %v5345, %v5345
  %v5354 = vcombine.high %v5352, %v5352
  %v5356 = vunpack.c.l.s4 1966171168
  %v5357 = vunpack.c.0.s8 %v5356
  %v5358 = vlaneseq
  %v5359 = vshrl.u32 %v5358, 7
  %v5360 = vsub.s32 %v5357, %v5359
  %v5361 = vrot.slane %v5345, %v5360
  %v5363 = vunpack.c.l.s4 1966171168
  %v5364 = vunpack.c.0.s8 %v5363
  %v5365 = vlaneseq
  %v5366 = vshrl.u32 %v5365, 7
  %v5367 = vsub.s32 %v5364, %v5366
  %v5368 = vrot.slane %v5352, %v5367
  %v5370 = vunpack.c.l.s4 1966171168
  %v5371 = vunpack.c.0.s8 %v5370
  %v5372 = vlaneseq
  %v5373 = vshrl.u32 %v5372, 7
  %v5374 = vsub.s32 %v5371, %v5373
  %v5375 = vrot.slane %v5353, %v5374
  %v5377 = vunpack.c.l.s4 1966171168
  %v5378 = vunpack.c.0.s8 %v5377
  %v5379 = vlaneseq
  %v5380 = vshrl.u32 %v5379, 7
  %v5381 = vsub.s32 %v5378, %v5380
  %v5382 = vrot.slane %v5354, %v5381
  %v5383 = vcombine.high %v5361, %v5361
  %v5384 = vcombine.high %v5368, %v5368
  %v5385 = vcombine.high %v5375, %v5375
  %v5386 = vcombine.high %v5382, %v5382
  %v5387 = vcombine.high %v5325, %v5325
  %v5389 = vunpack.c.l.s4 1966171168
  %v5390 = vunpack.c.0.s8 %v5389
  %v5391 = vlaneseq
  %v5392 = vshrl.u32 %v5391, 7
  %v5393 = vsub.s32 %v5390, %v5392
  %v5394 = vrot.slane %v5325, %v5393
  %v5396 = vunpack.c.l.s4 1966171168
  %v5397 = vunpack.c.0.s8 %v5396
  %v5398 = vlaneseq
  %v5399 = vshrl.u32 %v5398, 7
  %v5400 = vsub.s32 %v5397, %v5399
  %v5401 = vrot.slane %v5387, %v5400
  %v5402 = vcombine.high %v5394, %v5394
  %v5403 = vcombine.high %v5401, %v5401
  %v5405 = vunpack.c.l.s4 1966171168
  %v5406 = vunpack.c.0.s8 %v5405
  %v5407 = vlaneseq
  %v5408 = vshrl.u32 %v5407, 7
  %v5409 = vsub.s32 %v5406, %v5408
  %v5410 = vrot.slane %v5394, %v5409
  %v5412 = vunpack.c.l.s4 1966171168
  %v5413 = vunpack.c.0.s8 %v5412
  %v5414 = vlaneseq
  %v5415 = vshrl.u32 %v5414, 7
  %v5416 = vsub.s32 %v5413, %v5415
  %v5417 = vrot.slane %v5401, %v5416
  %v5419 = vunpack.c.l.s4 1966171168
  %v5420 = vunpack.c.0.s8 %v5419
  %v5421 = vlaneseq
  %v5422 = vshrl.u32 %v5421, 7
  %v5423 = vsub.s32 %v5420, %v5422
  %v5424 = vrot.slane %v5402, %v5423
  %v5426 = vunpack.c.l.s4 1966171168
  %v5427 = vunpack.c.0.s8 %v5426
  %v5428 = vlaneseq
  %v5429 = vshrl.u32 %v5428, 7
  %v5430 = vsub.s32 %v5427, %v5429
  %v5431 = vrot.slane %v5403, %v5430
  %v5432 = vcombine.high %v5410, %v5410
  %v5433 = vcombine.high %v5417, %v5417
  %v5434 = vcombine.high %v5424, %v5424
  %v5435 = vcombine.high %v5431, %v5431
  %v5437 = vunpack.c.l.s4 1966171168
  %v5438 = vunpack.c.0.s8 %v5437
  %v5439 = vlaneseq
  %v5440 = vshrl.u32 %v5439, 7
  %v5441 = vsub.s32 %v5438, %v5440
  %v5442 = vrot.slane %v5330, %v5441
  %v5444 = vunpack.c.l.s4 1966171168
  %v5445 = vunpack.c.0.s8 %v5444
  %v5446 = vlaneseq
  %v5447 = vshrl.u32 %v5446, 7
  %v5448 = vsub.s32 %v5445, %v5447
  %v5449 = vrot.slane %v5442, %v5448
  %v5450 = vcombine.low %v5361, %v5375
  %v5451 = vcombine.low %v5383, %v5385
  %v5453 = vunpack.c.l.s4 1966171168
  %v5454 = vunpack.c.0.s8 %v5453
  %v5455 = vlaneseq
  %v5456 = vshrl.u32 %v5455, 7
  %v5457 = vsub.s32 %v5454, %v5456
  %v5458 = vrot.slane %v5450, %v5457
  %v5460 = vunpack.c.l.s4 1966171168
  %v5461 = vunpack.c.0.s8 %v5460
  %v5462 = vlaneseq
  %v5463 = vshrl.u32 %v5462, 7
  %v5464 = vsub.s32 %v5461, %v5463
  %v5465 = vrot.slane %v5451, %v5464
  %v5466 = vcombine.low %v5458, %v5465
  %v5468 = vunpack.c.l.s4 1966171168
  %v5469 = vunpack.c.0.s8 %v5468
  %v5470 = vlaneseq
  %v5471 = vshrl.u32 %v5470, 7
  %v5472 = vsub.s32 %v5469, %v5471
  %v5473 = vrot.slane %v5466, %v5472
  %v5474 = vcombine.low %v5368, %v5382
  %v5475 = vcombine.low %v5384, %v5386
  %v5477 = vunpack.c.l.s4 1966171168
  %v5478 = vunpack.c.0.s8 %v5477
  %v5479 = vlaneseq
  %v5480 = vshrl.u32 %v5479, 7
  %v5481 = vsub.s32 %v5478, %v5480
  %v5482 = vrot.slane %v5474, %v5481
  %v5484 = vunpack.c.l.s4 1966171168
  %v5485 = vunpack.c.0.s8 %v5484
  %v5486 = vlaneseq
  %v5487 = vshrl.u32 %v5486, 7
  %v5488 = vsub.s32 %v5485, %v5487
  %v5489 = vrot.slane %v5475, %v5488
  %v5490 = vcombine.low %v5482, %v5489
  %v5492 = vunpack.c.l.s4 1966171168
  %v5493 = vunpack.c.0.s8 %v5492
  %v5494 = vlaneseq
  %v5495 = vshrl.u32 %v5494, 7
  %v5496 = vsub.s32 %v5493, %v5495
  %v5497 = vrot.slane %v5490, %v5496
  %v5498 = vcombine.low %v5424, %v5432
  %v5499 = vcombine.low %v5434, %v5417
  %v5501 = vunpack.c.l.s4 1966171168
  %v5502 = vunpack.c.0.s8 %v5501
  %v5503 = vlaneseq
  %v5504 = vshrl.u32 %v5503, 7
  %v5505 = vsub.s32 %v5502, %v5504
  %v5506 = vrot.slane %v5498, %v5505
  %v5508 = vunpack.c.l.s4 1966171168
  %v5509 = vunpack.c.0.s8 %v5508
  %v5510 = vlaneseq
  %v5511 = vshrl.u32 %v5510, 7
  %v5512 = vsub.s32 %v5509, %v5511
  %v5513 = vrot.slane %v5499, %v5512
  %v5514 = vcombine.low %v5506, %v5513
  %v5516 = vunpack.c.l.s4 1966171168
  %v5517 = vunpack.c.0.s8 %v5516
  %v5518 = vlaneseq
  %v5519 = vshrl.u32 %v5518, 7
  %v5520 = vsub.s32 %v5517, %v5519
  %v5521 = vrot.slane %v5514, %v5520
  %v5522 = vcombine.low %v5431, %v5433
  %v5523 = vcombine.low %v5435, %v5449
  %v5525 = vunpack.c.l.s4 1966171168
  %v5526 = vunpack.c.0.s8 %v5525
  %v5527 = vlaneseq
  %v5528 = vshrl.u32 %v5527, 7
  %v5529 = vsub.s32 %v5526, %v5528
  %v5530 = vrot.slane %v5522, %v5529
  %v5532 = vunpack.c.l.s4 1966171168
  %v5533 = vunpack.c.0.s8 %v5532
  %v5534 = vlaneseq
  %v5535 = vshrl.u32 %v5534, 7
  %v5536 = vsub.s32 %v5533, %v5535
  %v5537 = vrot.slane %v5523, %v5536
  %v5538 = vcombine.low %v5530, %v5537
  %v5540 = vunpack.c.l.s4 1966171168
  %v5541 = vunpack.c.0.s8 %v5540
  %v5542 = vlaneseq
  %v5543 = vshrl.u32 %v5542, 7
  %v5544 = vsub.s32 %v5541, %v5543
  %v5545 = vrot.slane %v5538, %v5544
  %v5550 = vsel %vm1890, %v5473, -inf
  %v5551 = vrot.slane %v5550, 4
  %v5552 = vmax.f32 %v5550, %v5551
  %v5553 = vrot.slane %v5552, 2
  %v5554 = vmax.f32 %v5552, %v5553
  %v5555 = vrot.slane %v5554, 1
  %v5556 = vmax.f32 %v5554, %v5555
  %v5557 = vsel %vm1890, %v5497, -inf
  %v5558 = vrot.slane %v5557, 4
  %v5559 = vmax.f32 %v5557, %v5558
  %v5560 = vrot.slane %v5559, 2
  %v5561 = vmax.f32 %v5559, %v5560
  %v5562 = vrot.slane %v5561, 1
  %v5563 = vmax.f32 %v5561, %v5562
  %v5564 = vsel %vm1890, %v5521, -inf
  %v5565 = vrot.slane %v5564, 4
  %v5566 = vmax.f32 %v5564, %v5565
  %v5567 = vrot.slane %v5566, 2
  %v5568 = vmax.f32 %v5566, %v5567
  %v5569 = vrot.slane %v5568, 1
  %v5570 = vmax.f32 %v5568, %v5569
  %v5571 = vsel %vm1890, %v5545, -inf
  %v5572 = vrot.slane %v5571, 4
  %v5573 = vmax.f32 %v5571, %v5572
  %v5574 = vrot.slane %v5573, 2
  %v5575 = vmax.f32 %v5573, %v5574
  %v5576 = vrot.slane %v5575, 1
  %v5577 = vmax.f32 %v5575, %v5576
  %v5578 = vld [vmem:[%s2 + $0x6] sm:$0x1]
  %v5579 = vld [vmem:[%s2 + $0x7] sm:$0x1]
  %v5580 = vld [vmem:[%s2 + $0x8] sm:$0x1]
  %v5581 = vlaneseq
  %v5582 = vshrl.u32 %v5581, 7
  %v5583 = vsub.s32 0, %v5582
  %v5584 = vrot.slane %v5578, %v5583
  %v5585 = vadd.f32 %v5556, %v5584
  %v5586 = vadd.f32 %v5563, %v5584
  %v5587 = vadd.f32 %v5570, %v5584
  %v5588 = vadd.f32 %v5577, %v5584
  %v5589 = vmax.f32 %v5585, 0.0
  %v5590 = vmax.f32 %v5586, 0.0
  %v5591 = vmax.f32 %v5587, 0.0
  %v5592 = vmax.f32 %v5588, 0.0
  %v5597 = vrot.slane %v5590, 7
  %v5598 = vsel %vm2559, %v5597, %v5589
  %v5599 = vrot.slane %v5591, 6
  %v5600 = vsel %vm2562, %v5599, %v5598
  %v5601 = vrot.slane %v5592, 5
  %v5602 = vsel %vm2565, %v5601, %v5600
  %v5604 = vsel %vm1890, %v5602, 0.0
  %v5605 = vrot.slane %v5604, 4
  %v5606 = vadd.f32 %v5604, %v5605
  %v5607 = vrot.slane %v5606, 2
  %v5608 = vadd.f32 %v5606, %v5607
  %v5609 = vrot.slane %v5608, 1
  %v5610 = vadd.f32 %v5608, %v5609
  %v5611 = vmul.f32 %v5610, 0.25
  %v5612 = vmul.f32 %v5589, %v5589
  %v5613 = vmul.f32 %v5590, %v5590
  %v5614 = vmul.f32 %v5591, %v5591
  %v5615 = vmul.f32 %v5592, %v5592
  %v5620 = vrot.slane %v5613, 7
  %v5621 = vsel %vm2559, %v5620, %v5612
  %v5622 = vrot.slane %v5614, 6
  %v5623 = vsel %vm2562, %v5622, %v5621
  %v5624 = vrot.slane %v5615, 5
  %v5625 = vsel %vm2565, %v5624, %v5623
  %v5627 = vsel %vm1890, %v5625, 0.0
  %v5628 = vrot.slane %v5627, 4
  %v5629 = vadd.f32 %v5627, %v5628
  %v5630 = vrot.slane %v5629, 2
  %v5631 = vadd.f32 %v5629, %v5630
  %v5632 = vrot.slane %v5631, 1
  %v5633 = vadd.f32 %v5631, %v5632
  %v5634 = vmul.f32 %v5633, 0.25
  %v5635 = vmul.f32 %v5611, %v5611
  %v5636 = vsub.f32 %v5634, %v5635
  %v5637 = vadd.f32 %v5636, 1e-05
  %v5638 = vrsqrt.pop %v5637
  %v5639 = vmul.f32 %v5579, %v5638
  %v5640 = vlaneseq
  %v5641 = vshrl.u32 %v5640, 7
  %v5642 = vsub.s32 0, %v5641
  %v5643 = vrot.slane %v5639, %v5642
  %v5644 = vmul.f32 %v5589, %v5643
  %v5645 = vmul.f32 %v5590, %v5643
  %v5646 = vmul.f32 %v5591, %v5643
  %v5647 = vmul.f32 %v5592, %v5643
  %v5648 = vmul.f32 %v5611, %v5639
  %v5649 = vsub.f32 %v5580, %v5648
  %v5650 = vlaneseq
  %v5651 = vshrl.u32 %v5650, 7
  %v5652 = vsub.s32 0, %v5651
  %v5653 = vrot.slane %v5649, %v5652
  %v5654 = vadd.f32 %v5644, %v5653
  %v5655 = vadd.f32 %v5645, %v5653
  %v5656 = vadd.f32 %v5646, %v5653
  %v5657 = vadd.f32 %v5647, %v5653
  %v5662 = vrot.slane %v5655, 7
  %v5663 = vsel %vm2559, %v5662, %v5654
  %v5664 = vrot.slane %v5657, 7
  %v5665 = vsel %vm2559, %v5664, %v5656
  %v5668 = vsel %vm2704, %v5663, 0.0
  %v5669 = vrot.slane %v5668, 4
  %v5670 = vadd.f32 %v5668, %v5669
  %v5671 = vrot.slane %v5670, 2
  %v5672 = vadd.f32 %v5670, %v5671
  %v5673 = vrot.slane %v5672, 1
  %v5674 = vadd.f32 %v5672, %v5673
  %v5675 = vsel %vm2704, %v5665, 0.0
  %v5676 = vrot.slane %v5675, 4
  %v5677 = vadd.f32 %v5675, %v5676
  %v5678 = vrot.slane %v5677, 2
  %v5679 = vadd.f32 %v5677, %v5678
  %v5680 = vrot.slane %v5679, 1
  %v5681 = vadd.f32 %v5679, %v5680
  %v5682 = vmul.f32 %v5674, 0.5
  %v5683 = vmul.f32 %v5681, 0.5
  %v5684 = vrot.slane %v5654, 7
  %v5685 = vrot.slane %v5655, 6
  %v5686 = vsel %vm2562, %v5685, %v5684
  %v5687 = vrot.slane %v5656, 7
  %v5688 = vrot.slane %v5657, 6
  %v5689 = vsel %vm2562, %v5688, %v5687
  %vm5692 = vcmask 1040384
  %v5693 = vsel %vm5692, 0.0, %v5686
  %v5694 = vsel %vm5692, 0.0, %v5689
  %v5695 = vsel %vm3487, %v5693, 0.0
  %v5696 = vsel %vm3487, %v5694, 0.0
  %v5699 = vrot.slane %v5695, 1
  %v5700 = vrot.slane %v5696, 1
  %5701 = vrot.lane.b32.xlu0 %v5699, 32
  %v5702 = vpop.permute.xlu0 %5701
  %5703 = vrot.lane.b32.xlu0 %v5700, 32
  %v5704 = vpop.permute.xlu0 %5703
  %v5707 = vsel %vm2688, %v5695, %v5702
  %v5708 = vsel %vm2688, %v5696, %v5704
  %v5709 = vpack.c.bf16 %v5707, %v5707
  %v5710 = vpack.c.bf16 %v5708, %v5708
  %v5714 = vunpack.c.l.s4 1966171168
  %v5715 = vunpack.c.0.s8 %v5714
  %v5716 = vlaneseq
  %v5717 = vshrl.u32 %v5716, 7
  %v5718 = vsub.s32 %v5715, %v5717
  %v5719 = vrot.slane %v5709, %v5718
  %v5720 = vcombine.high %v5719, %v5719
  %v5722 = vunpack.c.l.s4 1966171168
  %v5723 = vunpack.c.0.s8 %v5722
  %v5724 = vlaneseq
  %v5725 = vshrl.u32 %v5724, 7
  %v5726 = vsub.s32 %v5723, %v5725
  %v5727 = vrot.slane %v5719, %v5726
  %v5729 = vunpack.c.l.s4 1966171168
  %v5730 = vunpack.c.0.s8 %v5729
  %v5731 = vlaneseq
  %v5732 = vshrl.u32 %v5731, 7
  %v5733 = vsub.s32 %v5730, %v5732
  %v5734 = vrot.slane %v5720, %v5733
  %v5736 = vunpack.c.l.s4 1966171168
  %v5737 = vunpack.c.0.s8 %v5736
  %v5738 = vlaneseq
  %v5739 = vshrl.u32 %v5738, 7
  %v5740 = vsub.s32 %v5737, %v5739
  %v5741 = vrot.slane %v5710, %v5740
  %v5742 = vcombine.high %v5741, %v5741
  %v5744 = vunpack.c.l.s4 1966171168
  %v5745 = vunpack.c.0.s8 %v5744
  %v5746 = vlaneseq
  %v5747 = vshrl.u32 %v5746, 7
  %v5748 = vsub.s32 %v5745, %v5747
  %v5749 = vrot.slane %v5741, %v5748
  %v5751 = vunpack.c.l.s4 1966171168
  %v5752 = vunpack.c.0.s8 %v5751
  %v5753 = vlaneseq
  %v5754 = vshrl.u32 %v5753, 7
  %v5755 = vsub.s32 %v5752, %v5754
  %v5756 = vrot.slane %v5742, %v5755
  %v5757 = vunpack.i.l.s16 %v5727
  %v5758 = vunpack.i.h.s16 %v5727
  %v5759 = vunpack.i.l.s16 %v5734
  %v5760 = vunpack.i.l.s16 %v5749
  %v5761 = vunpack.i.h.s16 %v5749
  %v5762 = vunpack.i.l.s16 %v5756
  %v5763 = vld [vmem:[%s1 + $0x180] sm:$0xf]
  %v5764 = vld [vmem:[%s1 + $0x184] sm:$0xf]
  %v5765 = vld [vmem:[%s1 + $0x188] sm:$0xf]
  %v5766 = vld [vmem:[%s1 + $0x18c] sm:$0xf]
  %v5767 = vld [vmem:[%s1 + $0x190] sm:$0xf]
  %v5768 = vld [vmem:[%s1 + $0x194] sm:$0xf]
  %v5769 = vld [vmem:[%s1 + $0x198] sm:$0xf]
  %v5770 = vld [vmem:[%s1 + $0x19c] sm:$0xf]
  %v5771 = vpack.i.b16 %v5758, %v5757
  %v5772 = vpack.i.b16 %v5760, %v5759
  %v5773 = vpack.i.b16 %v5762, %v5761
  %v5774 = vcombine.low %v5771, %v5772
  %v5776 = vunpack.c.l.s4 1966171168
  %v5777 = vunpack.c.0.s8 %v5776
  %v5778 = vlaneseq
  %v5779 = vshrl.u32 %v5778, 7
  %v5780 = vsub.s32 %v5777, %v5779
  %v5781 = vrot.slane %v5774, %v5780
  %v5783 = vunpack.c.l.s4 1966171168
  %v5784 = vunpack.c.0.s8 %v5783
  %v5785 = vlaneseq
  %v5786 = vshrl.u32 %v5785, 7
  %v5787 = vsub.s32 %v5784, %v5786
  %v5788 = vrot.slane %v5773, %v5787
  %v5789 = vcombine.low %v5781, %v5788
  %v5791 = vunpack.c.l.s4 1966171168
  %v5792 = vunpack.c.0.s8 %v5791
  %v5793 = vlaneseq
  %v5794 = vshrl.u32 %v5793, 7
  %v5795 = vsub.s32 %v5792, %v5794
  %v5796 = vrot.slane %v5789, %v5795
  %v5805 = vunpack.c.l.b16 %v5763
  %v5806 = vunpack.c.l.b16 %v5764
  %v5807 = vunpack.c.l.b16 %v5765
  %v5808 = vunpack.c.l.b16 %v5766
  %v5809 = vunpack.c.l.b16 %v5767
  %v5810 = vunpack.c.l.b16 %v5768
  %v5811 = vunpack.c.l.b16 %v5769
  %v5812 = vunpack.c.l.b16 %v5770
  %v5813 = vpack.c.b16 %v5806, %v5805
  %v5814 = vpack.c.b16 %v5808, %v5807
  %v5815 = vpack.c.b16 %v5810, %v5809
  %v5816 = vpack.c.b16 %v5812, %v5811
  %v5822 = vsel %vm3651, %v5796, 0
  %5824 = vmatprep.subr.bf16.mxu0 0
  %5825 = vmatpush1.bf16.msra.mxu0 %v5813
  %5826 = vmatprep.subr.bf16.mxu0 0
  %5827 = vmatpush1.bf16.msra.mxu0 %v5814
  %5828 = vmatprep.subr.bf16.mxu0 0
  %5829 = vmatpush1.bf16.msra.mxu0 %v5815
  %5830 = vmatprep.subr.bf16.mxu0 0
  %5831 = vmatpush1.bf16.msra.mxu0 %v5816
  %5832 = vmatprep.subr.bf16.mxu0 0
  %5833 = vmatpush1.bf16.msra.mxu0 0
  %5834 = vmatprep.subr.bf16.mxu0 0
  %5835 = vmatpush1.bf16.msra.mxu0 0
  %5836 = vmatprep.subr.bf16.mxu0 0
  %5837 = vmatpush1.bf16.msra.mxu0 0
  %5838 = vmatprep.subr.bf16.mxu0 0
  %5839 = vmatpush1.bf16.msra.mxu0 0
  %5840 = vmatprep.subr.bf16.mxu0 0
  %5841 = vmatpush1.bf16.msra.mxu0 0
  %5842 = vmatprep.subr.bf16.mxu0 0
  %5843 = vmatpush1.bf16.msra.mxu0 0
  %5844 = vmatprep.subr.bf16.mxu0 0
  %5845 = vmatpush1.bf16.msra.mxu0 0
  %5846 = vmatprep.subr.bf16.mxu0 0
  %5847 = vmatpush1.bf16.msra.mxu0 0
  %5848 = vmatprep.subr.bf16.mxu0 0
  %5849 = vmatpush1.bf16.msra.mxu0 0
  %5850 = vmatprep.subr.bf16.mxu0 0
  %5851 = vmatpush1.bf16.msra.mxu0 0
  %5852 = vmatprep.subr.bf16.mxu0 0
  %5853 = vmatpush1.bf16.msra.mxu0 0
  %5854 = vmatprep.subr.bf16.mxu0 0
  %5855 = vmatpush1.bf16.msra.mxu0 0
  %5856 = vmatprep.mubr.bf16.mxu0 0
  %5857 = vmatmul.mubr.bf16.gmra.mrb[0].mxu0 %v5822
  %v5858 = vpop.f32.mrb[0].mxu0
  %v5859 = vadd.f32 0.0, %v5858
  %v5860 = vpop.f32.mrb[0].mxu0
  %v5861 = vpop.f32.mrb[0].mxu0
  %v5862 = vpop.f32.mrb[0].mxu0
  %5863 = vdwg.mxu0
  %v5865 = vcombine.high %v5859, %v5859
  %v5867 = vunpack.c.l.s4 1966171168
  %v5868 = vunpack.c.0.s8 %v5867
  %v5869 = vlaneseq
  %v5870 = vshrl.u32 %v5869, 7
  %v5871 = vsub.s32 %v5868, %v5870
  %v5872 = vrot.slane %v5859, %v5871
  %v5874 = vunpack.c.l.s4 1966171168
  %v5875 = vunpack.c.0.s8 %v5874
  %v5876 = vlaneseq
  %v5877 = vshrl.u32 %v5876, 7
  %v5878 = vsub.s32 %v5875, %v5877
  %v5879 = vrot.slane %v5865, %v5878
  %v5880 = vcombine.high %v5872, %v5872
  %v5882 = vunpack.c.l.s4 1966171168
  %v5883 = vunpack.c.0.s8 %v5882
  %v5884 = vlaneseq
  %v5885 = vshrl.u32 %v5884, 7
  %v5886 = vsub.s32 %v5883, %v5885
  %v5887 = vrot.slane %v5872, %v5886
  %v5889 = vunpack.c.l.s4 1966171168
  %v5890 = vunpack.c.0.s8 %v5889
  %v5891 = vlaneseq
  %v5892 = vshrl.u32 %v5891, 7
  %v5893 = vsub.s32 %v5890, %v5892
  %v5894 = vrot.slane %v5879, %v5893
  %v5896 = vunpack.c.l.s4 1966171168
  %v5897 = vunpack.c.0.s8 %v5896
  %v5898 = vlaneseq
  %v5899 = vshrl.u32 %v5898, 7
  %v5900 = vsub.s32 %v5897, %v5899
  %v5901 = vrot.slane %v5880, %v5900
  %v5902 = vcombine.high %v5901, %v5901
  %v5903 = vcombine.low %v5887, %v5901
  %v5905 = vunpack.c.l.s4 1966171168
  %v5906 = vunpack.c.0.s8 %v5905
  %v5907 = vlaneseq
  %v5908 = vshrl.u32 %v5907, 7
  %v5909 = vsub.s32 %v5906, %v5908
  %v5910 = vrot.slane %v5903, %v5909
  %v5912 = vunpack.c.l.s4 1966171168
  %v5913 = vunpack.c.0.s8 %v5912
  %v5914 = vlaneseq
  %v5915 = vshrl.u32 %v5914, 7
  %v5916 = vsub.s32 %v5913, %v5915
  %v5917 = vrot.slane %v5910, %v5916
  %v5918 = vcombine.low %v5902, %v5894
  %v5920 = vunpack.c.l.s4 1966171168
  %v5921 = vunpack.c.0.s8 %v5920
  %v5922 = vlaneseq
  %v5923 = vshrl.u32 %v5922, 7
  %v5924 = vsub.s32 %v5921, %v5923
  %v5925 = vrot.slane %v5918, %v5924
  %v5927 = vunpack.c.l.s4 1966171168
  %v5928 = vunpack.c.0.s8 %v5927
  %v5929 = vlaneseq
  %v5930 = vshrl.u32 %v5929, 7
  %v5931 = vsub.s32 %v5928, %v5930
  %v5932 = vrot.slane %v5925, %v5931
  %v5935 = vsel %vm2704, %v5917, -inf
  %v5936 = vrot.slane %v5935, 4
  %v5937 = vmax.f32 %v5935, %v5936
  %v5938 = vrot.slane %v5937, 2
  %v5939 = vmax.f32 %v5937, %v5938
  %v5940 = vrot.slane %v5939, 1
  %v5941 = vmax.f32 %v5939, %v5940
  %v5942 = vsel %vm2704, %v5932, -inf
  %v5943 = vrot.slane %v5942, 4
  %v5944 = vmax.f32 %v5942, %v5943
  %v5945 = vrot.slane %v5944, 2
  %v5946 = vmax.f32 %v5944, %v5945
  %v5947 = vrot.slane %v5946, 1
  %v5948 = vmax.f32 %v5946, %v5947
  %v5949 = vld [vmem:[%s2 + $0x9] sm:$0x1]
  %v5950 = vld [vmem:[%s2 + $0xa] sm:$0x1]
  %v5951 = vld [vmem:[%s2 + $0xb] sm:$0x1]
  %v5952 = vlaneseq
  %v5953 = vshrl.u32 %v5952, 7
  %v5954 = vsub.s32 0, %v5953
  %v5955 = vrot.slane %v5949, %v5954
  %v5956 = vadd.f32 %v5941, %v5955
  %v5957 = vadd.f32 %v5948, %v5955
  %v5958 = vmax.f32 %v5956, 0.0
  %v5959 = vmax.f32 %v5957, 0.0
  %v5962 = vrot.slane %v5959, 7
  %v5963 = vsel %vm2559, %v5962, %v5958
  %v5965 = vsel %vm2704, %v5963, 0.0
  %v5966 = vrot.slane %v5965, 4
  %v5967 = vadd.f32 %v5965, %v5966
  %v5968 = vrot.slane %v5967, 2
  %v5969 = vadd.f32 %v5967, %v5968
  %v5970 = vrot.slane %v5969, 1
  %v5971 = vadd.f32 %v5969, %v5970
  %v5972 = vmul.f32 %v5971, 0.5
  %v5973 = vmul.f32 %v5958, %v5958
  %v5974 = vmul.f32 %v5959, %v5959
  %v5977 = vrot.slane %v5974, 7
  %v5978 = vsel %vm2559, %v5977, %v5973
  %v5980 = vsel %vm2704, %v5978, 0.0
  %v5981 = vrot.slane %v5980, 4
  %v5982 = vadd.f32 %v5980, %v5981
  %v5983 = vrot.slane %v5982, 2
  %v5984 = vadd.f32 %v5982, %v5983
  %v5985 = vrot.slane %v5984, 1
  %v5986 = vadd.f32 %v5984, %v5985
  %v5987 = vmul.f32 %v5986, 0.5
  %v5988 = vmul.f32 %v5972, %v5972
  %v5989 = vsub.f32 %v5987, %v5988
  %v5990 = vadd.f32 %v5989, 1e-05
  %v5991 = vrsqrt.pop %v5990
  %v5992 = vmul.f32 %v5950, %v5991
  %v5993 = vlaneseq
  %v5994 = vshrl.u32 %v5993, 7
  %v5995 = vsub.s32 0, %v5994
  %v5996 = vrot.slane %v5992, %v5995
  %v5997 = vmul.f32 %v5958, %v5996
  %v5998 = vmul.f32 %v5959, %v5996
  %v5999 = vmul.f32 %v5972, %v5992
  %v6000 = vsub.f32 %v5951, %v5999
  %v6001 = vlaneseq
  %v6002 = vshrl.u32 %v6001, 7
  %v6003 = vsub.s32 0, %v6002
  %v6004 = vrot.slane %v6000, %v6003
  %v6005 = vadd.f32 %v5997, %v6004
  %v6006 = vadd.f32 %v5998, %v6004
  %v6007 = vadd.f32 %v6005, 0.0
  %v6008 = vadd.f32 %v6006, 0.0
  %v6011 = vrot.slane %v3360, 7
  %v6012 = vsel %vm2559, %v6011, %v3359
  %v6016 = vrot.slane %v4944, 7
  %v6017 = vsel %vm2559, %v6016, %v4943
  %6018 = vrot.lane.b32.xlu0 %v6017, 32
  %v6019 = vpop.permute.xlu0 %6018
  %v6023 = vrot.slane %v5683, 7
  %v6024 = vsel %vm2559, %v6023, %v5682
  %6025 = vrot.lane.b32.xlu0 %v6024, 64
  %v6026 = vpop.permute.xlu0 %6025
  %v6030 = vrot.slane %v6008, 7
  %v6031 = vsel %vm2559, %v6030, %v6007
  %6032 = vrot.lane.b32.xlu0 %v6031, 96
  %v6033 = vpop.permute.xlu0 %6032
  %v6035 = vsel %vm2688, %v6012, %v6019
  %v6036 = vsel %vm3651, %v6035, %v6026
  %v6037 = vsel %vm3662, %v6036, %v6033
  %6038 = vst [vmem:[%s3] sm:$0x3] %v6037
  // Predicated region
  $region14: #{forward.1} parent=0 // pred_check
    _
  $region15: #{forward.1} parent=0 // pred_check_branch
    %6040 = sbr.rel (0) target = $region17
  $region16: #{forward.1} parent=0 // pred_region
    _
  $region17: #{forward.1} parent=0 // pred_fallthru
    _
  // Predicated region
  $region18: #{forward.1} parent=0 // pred_check
    _
  $region19: #{forward.1} parent=0 // pred_check_branch
    %6042 = sbr.rel (0) target = $region21
  $region20: #{forward.1} parent=0 // pred_region
    _
  $region21: #{forward.1} parent=0 // pred_fallthru
    _

</llo_original>
